<compile_context>
chip_gen: v6e
topology: v6e:2x2x1
jax: 0.10.0
libtpu: 0.0.40
codegen_flags: <defaults>
</compile_context>

<pallas_src>
import functools
import math

import jax
import jax.numpy as jnp
from jax import lax
from jax.experimental import pallas as pl
from jax.experimental.pallas import tpu as pltpu


def _gelu_exact(x):
    # torch.nn.functional.gelu default (erf-based, exact), in fp32.
    return 0.5 * x * (1.0 + lax.erf(x * (1.0 / math.sqrt(2.0))))


def _layernorm(x, gamma, beta, eps=1e-6):
    # torch.nn.LayerNorm (biased variance), eps=1e-6.
    mean = jnp.mean(x, axis=-1, keepdims=True)
    var = jnp.mean(jnp.square(x - mean), axis=-1, keepdims=True)
    return (x - mean) * lax.rsqrt(var + eps) * gamma + beta


def _encoder_kernel(x_ref,
                    ln1_g, ln1_b,
                    wq, bq, wk, bk, wv, bv, wo, bo,
                    ln2_g, ln2_b,
                    w1, b1, w2, b2,
                    lnf_g, lnf_b,
                    o_ref,
                    *, num_heads):
    """One grid step = the whole encoder applied to one batch block."""
    bB, S, H = x_ref.shape
    L = wq.shape[0]
    head_dim = H // num_heads
    scale = 1.0 / math.sqrt(head_dim)
    cdt = wq.dtype                       # MXU operand dtype (f32 or bf16)

    # Flatten batch into the row (sublane) dim for all dense matmuls.
    x = x_ref[...].reshape(bB * S, H).astype(jnp.float32)

    for l in range(L):                   # short static layer loop (unrolled)
        # ---------------- attention sub-block ----------------
        xn = _layernorm(x, ln1_g[l], ln1_b[l]).astype(cdt)
        q = jnp.dot(xn, wq[l], preferred_element_type=jnp.float32) + bq[l]
        k = jnp.dot(xn, wk[l], preferred_element_type=jnp.float32) + bk[l]
        v = jnp.dot(xn, wv[l], preferred_element_type=jnp.float32) + bv[l]
        q = q * scale                    # fold 1/sqrt(head_dim) into q

        q3 = q.astype(cdt).reshape(bB, S, H)
        k3 = k.astype(cdt).reshape(bB, S, H)
        v3 = v.astype(cdt).reshape(bB, S, H)

        ctx_heads = []
        for h in range(num_heads):       # tiny static head count
            sl = slice(h * head_dim, (h + 1) * head_dim)
            s = jnp.einsum("bqd,bkd->bqk", q3[:, :, sl], k3[:, :, sl],
                           preferred_element_type=jnp.float32)
            s = s - jnp.max(s, axis=-1, keepdims=True)
            p = jnp.exp(s)
            p = p * pl.reciprocal(jnp.sum(p, axis=-1, keepdims=True),
                                  approx=True)
            # TODO(synk): attn_dropout / proj_dropout are identity (inference);
            # the ucb top-k selection branch (counter >= ucb_activation_step)
            # is not implemented (ucb=False path only).
            ctx_heads.append(
                jnp.einsum("bqk,bkd->bqd", p.astype(cdt), v3[:, :, sl],
                           preferred_element_type=jnp.float32))

        ctx = jnp.concatenate(ctx_heads, axis=-1).reshape(bB * S, H)
        attn_out = jnp.dot(ctx.astype(cdt), wo[l],
                           preferred_element_type=jnp.float32) + bo[l]
        x = x + attn_out                 # residual

        # ---------------- MLP sub-block ----------------
        xn2 = _layernorm(x, ln2_g[l], ln2_b[l]).astype(cdt)
        hmid = jnp.dot(xn2, w1[l], preferred_element_type=jnp.float32) + b1[l]
        hmid = _gelu_exact(hmid)
        # TODO(synk): MLP dropout is identity (inference); training parity
        # would need pltpu.prng_seed/prng_random_bits masks + 1/(1-p) scaling.
        y = jnp.dot(hmid.astype(cdt), w2[l],
                    preferred_element_type=jnp.float32) + b2[l]
        x = x + y                        # residual

    out = _layernorm(x, lnf_g[...], lnf_b[...])
    # NOTE: with a single grid step there is only ONE (bB*S, 32)-lane store per
    # call, so the masked-store cost is negligible here; a lane-dense
    # (bB, S*H) output layout (sublane->lane in-kernel reshape) only pays off
    # at much larger H / many-step grids.
    o_ref[...] = out.reshape(bB, S, H).astype(o_ref.dtype)


def encoder_pallas(x, params, *, num_heads, batch_block=None):
    """x: (B, S, H). Returns (encoded, attn_weights, final_count_score).

    batch_block: rows of the batch handled per grid step.  Default = B
    (single step; best on single-TC v5e/v6e).  On v7x pass batch_block=B//2
    so the "parallel" grid axis splits the batch over the two TensorCores.
    """
    B, S, H = x.shape
    assert H % num_heads == 0
    bB = B if batch_block is None else batch_block
    assert B % bB == 0
    nb = B // bB

    def full_spec(arr):
        nd = arr.ndim
        return pl.BlockSpec(arr.shape, lambda i, _nd=nd: (0,) * _nd)

    act_spec = pl.BlockSpec((bB, S, H), lambda i: (i, 0, 0))

    names = ["ln1_g", "ln1_b",
             "wq", "bq", "wk", "bk", "wv", "bv", "wo", "bo",
             "ln2_g", "ln2_b",
             "w1", "b1", "w2", "b2",
             "lnf_g", "lnf_b"]
    weight_args = [params[n] for n in names]

    kernel = functools.partial(_encoder_kernel, num_heads=num_heads)

    encoded = pl.pallas_call(
        kernel,
        out_shape=jax.ShapeDtypeStruct((B, S, H), x.dtype),
        grid_spec=pltpu.PrefetchScalarGridSpec(
            num_scalar_prefetch=0,
            grid=(nb,),
            in_specs=[act_spec] + [full_spec(a) for a in weight_args],
            out_specs=act_spec,
        ),
        compiler_params=pltpu.CompilerParams(
            dimension_semantics=("parallel",)),
    )(x, *weight_args)

    attn_weights = []                                   # vis=False
    final_count_score = jnp.asarray(-1.0, jnp.float32)  # ucb=False path
    return encoded, attn_weights, final_count_score


# ----------------------------- parameters -----------------------------
def init_params(key, num_layers, hidden, mlp_dim):
    H, D = hidden, mlp_dim
    ks = jax.random.split(key, 16)

    def lin_w(k, fan_in, fan_out):          # torch Linear default (already (in,out))
        bound = 1.0 / math.sqrt(fan_in)
        return jax.random.uniform(k, (num_layers, fan_in, fan_out),
                                  jnp.float32, -bound, bound)

    def lin_b(k, fan_in, dim):
        bound = 1.0 / math.sqrt(fan_in)
        return jax.random.uniform(k, (num_layers, 1, dim),
                                  jnp.float32, -bound, bound)

    def xavier(k, fan_in, fan_out):         # Mlp._init_weights
        bound = math.sqrt(6.0 / (fan_in + fan_out))
        return jax.random.uniform(k, (num_layers, fan_in, fan_out),
                                  jnp.float32, -bound, bound)

    # PyTorch LayerNorm default init is ones/zeros; small perturbation here only
    # so the numeric check exercises the gamma/beta broadcast path.
    def ln_g(k):
        return 1.0 + 0.05 * jax.random.normal(k, (num_layers, 1, H), jnp.float32)

    def ln_b(k):
        return 0.05 * jax.random.normal(k, (num_layers, 1, H), jnp.float32)

    return dict(
        ln1_g=ln_g(ks[0]), ln1_b=ln_b(ks[1]),
        wq=lin_w(ks[2], H, H), bq=lin_b(ks[3], H, H),
        wk=lin_w(ks[4], H, H), bk=lin_b(ks[5], H, H),
        wv=lin_w(ks[6], H, H), bv=lin_b(ks[7], H, H),
        wo=lin_w(ks[8], H, H), bo=lin_b(ks[9], H, H),
        ln2_g=ln_g(ks[10]), ln2_b=ln_b(ks[11]),
        w1=xavier(ks[12], H, D),
        b1=1e-6 * jax.random.normal(ks[13], (num_layers, 1, D), jnp.float32),
        w2=xavier(ks[14], D, H),
        b2=1e-6 * jax.random.normal(ks[15], (num_layers, 1, H), jnp.float32),
        lnf_g=jnp.ones((1, H), jnp.float32),
        lnf_b=jnp.zeros((1, H), jnp.float32),
    )


# ----------------------------- pure-JAX reference -----------------------------
def encoder_ref(x, p, num_heads):
    B, S, H = x.shape
    L = p["wq"].shape[0]
    hd = H // num_heads

    def ln(z, g, b, eps=1e-6):
        m = z.mean(-1, keepdims=True)
        v = jnp.square(z - m).mean(-1, keepdims=True)
        return (z - m) * lax.rsqrt(v + eps) * g + b

    h = x.astype(jnp.float32)
    for l in range(L):
        r = h
        xn = ln(h, p["ln1_g"][l, 0], p["ln1_b"][l, 0])
        q = xn @ p["wq"][l] + p["bq"][l, 0]
        k = xn @ p["wk"][l] + p["bk"][l, 0]
        v = xn @ p["wv"][l] + p["bv"][l, 0]
        q = q.reshape(B, S, num_heads, hd).transpose(0, 2, 1, 3)
        k = k.reshape(B, S, num_heads, hd).transpose(0, 2, 1, 3)
        v = v.reshape(B, S, num_heads, hd).transpose(0, 2, 1, 3)
        s = jnp.einsum("bhqd,bhkd->bhqk", q, k) / math.sqrt(hd)
        s = s - s.max(-1, keepdims=True)
        pr = jnp.exp(s)
        pr = pr / pr.sum(-1, keepdims=True)
        ctx = jnp.einsum("bhqk,bhkd->bhqd", pr, v)
        ctx = ctx.transpose(0, 2, 1, 3).reshape(B, S, H)
        h = r + (ctx @ p["wo"][l] + p["bo"][l, 0])
        r = h
        xn2 = ln(h, p["ln2_g"][l, 0], p["ln2_b"][l, 0])
        m = xn2 @ p["w1"][l] + p["b1"][l, 0]
        m = 0.5 * m * (1.0 + lax.erf(m / math.sqrt(2.0)))
        h = r + (m @ p["w2"][l] + p["b2"][l, 0])
    return ln(h, p["lnf_g"][0], p["lnf_b"][0])


if __name__ == "__main__":
    # Small config: hidden=32, heads=4 (head_dim=8), mlp_dim=64, layers=2.
    B, S, H, D, NH, L = 2, 8, 32, 64, 4, 2

    key = jax.random.PRNGKey(0)
    k_x, k_p = jax.random.split(key)
    x = jax.random.normal(k_x, (B, S, H), dtype=jnp.float32)
    params = init_params(k_p, L, H, D)

    # f32 weights: matches the PyTorch module's default dtype / semantics.
    encoded, attn_w, count_score = encoder_pallas(x, params, num_heads=NH)
    encoded = jax.block_until_ready(encoded)

    ref = encoder_ref(x, params, NH)
    err = float(jnp.max(jnp.abs(encoded - ref)))
    assert encoded.shape == (B, S, H)
    # Tolerance accounts for the EUP approx-reciprocal softmax denominator.
    assert jnp.allclose(encoded, ref, atol=1e-2, rtol=1e-2), f"mismatch, max err {err}"
    assert float(count_score) == -1.0

    # bf16 weight matrices: native MXU dtype on all generations (loose check).
    p_bf16 = dict(params)
    for name in ("wq", "wk", "wv", "wo", "w1", "w2"):
        p_bf16[name] = params[name].astype(jnp.bfloat16)
    enc_bf16, _, _ = encoder_pallas(x, p_bf16, num_heads=NH)
    enc_bf16 = jax.block_until_ready(enc_bf16)
    assert enc_bf16.shape == (B, S, H)
    assert bool(jnp.all(jnp.isfinite(enc_bf16)))
    assert float(jnp.max(jnp.abs(enc_bf16 - ref))) < 0.25

    print("KERNEL_OK")
</pallas_src>

<mosaic_0001>
module attributes {stable_mosaic.version = 11 : i64} {
  func.func @_encoder_kernel(%arg0: i32, %arg1: memref<2x8x32xf32, #tpu.memory_space<vmem>>, %arg2: memref<2x1x32xf32, #tpu.memory_space<vmem>>, %arg3: memref<2x1x32xf32, #tpu.memory_space<vmem>>, %arg4: memref<2x32x32xf32, #tpu.memory_space<vmem>>, %arg5: memref<2x1x32xf32, #tpu.memory_space<vmem>>, %arg6: memref<2x32x32xf32, #tpu.memory_space<vmem>>, %arg7: memref<2x1x32xf32, #tpu.memory_space<vmem>>, %arg8: memref<2x32x32xf32, #tpu.memory_space<vmem>>, %arg9: memref<2x1x32xf32, #tpu.memory_space<vmem>>, %arg10: memref<2x32x32xf32, #tpu.memory_space<vmem>>, %arg11: memref<2x1x32xf32, #tpu.memory_space<vmem>>, %arg12: memref<2x1x32xf32, #tpu.memory_space<vmem>>, %arg13: memref<2x1x32xf32, #tpu.memory_space<vmem>>, %arg14: memref<2x32x64xf32, #tpu.memory_space<vmem>>, %arg15: memref<2x1x64xf32, #tpu.memory_space<vmem>>, %arg16: memref<2x64x32xf32, #tpu.memory_space<vmem>>, %arg17: memref<2x1x32xf32, #tpu.memory_space<vmem>>, %arg18: memref<1x32xf32, #tpu.memory_space<vmem>>, %arg19: memref<1x32xf32, #tpu.memory_space<vmem>>, %arg20: memref<2x8x32xf32, #tpu.memory_space<vmem>>) attributes {dimension_semantics = [#tpu.dimension_semantics<parallel>], iteration_bounds = array<i64: 1>, scalar_prefetch = 0 : i64, scratch_operands = 0 : i64, tpu.core_type = #tpu.core_type<tc>, window_params = [{transform_indices = @transform_0, window_bounds = array<i64: 2, 8, 32>}, {pipeline_mode = #tpu.pipeline_mode<synchronous>, transform_indices = @transform_1, window_bounds = array<i64: 2, 1, 32>}, {pipeline_mode = #tpu.pipeline_mode<synchronous>, transform_indices = @transform_2, window_bounds = array<i64: 2, 1, 32>}, {pipeline_mode = #tpu.pipeline_mode<synchronous>, transform_indices = @transform_3, window_bounds = array<i64: 2, 32, 32>}, {pipeline_mode = #tpu.pipeline_mode<synchronous>, transform_indices = @transform_4, window_bounds = array<i64: 2, 1, 32>}, {pipeline_mode = #tpu.pipeline_mode<synchronous>, transform_indices = @transform_5, window_bounds = array<i64: 2, 32, 32>}, {pipeline_mode = #tpu.pipeline_mode<synchronous>, transform_indices = @transform_6, window_bounds = array<i64: 2, 1, 32>}, {pipeline_mode = #tpu.pipeline_mode<synchronous>, transform_indices = @transform_7, window_bounds = array<i64: 2, 32, 32>}, {pipeline_mode = #tpu.pipeline_mode<synchronous>, transform_indices = @transform_8, window_bounds = array<i64: 2, 1, 32>}, {pipeline_mode = #tpu.pipeline_mode<synchronous>, transform_indices = @transform_9, window_bounds = array<i64: 2, 32, 32>}, {pipeline_mode = #tpu.pipeline_mode<synchronous>, transform_indices = @transform_10, window_bounds = array<i64: 2, 1, 32>}, {pipeline_mode = #tpu.pipeline_mode<synchronous>, transform_indices = @transform_11, window_bounds = array<i64: 2, 1, 32>}, {pipeline_mode = #tpu.pipeline_mode<synchronous>, transform_indices = @transform_12, window_bounds = array<i64: 2, 1, 32>}, {pipeline_mode = #tpu.pipeline_mode<synchronous>, transform_indices = @transform_13, window_bounds = array<i64: 2, 32, 64>}, {pipeline_mode = #tpu.pipeline_mode<synchronous>, transform_indices = @transform_14, window_bounds = array<i64: 2, 1, 64>}, {pipeline_mode = #tpu.pipeline_mode<synchronous>, transform_indices = @transform_15, window_bounds = array<i64: 2, 64, 32>}, {pipeline_mode = #tpu.pipeline_mode<synchronous>, transform_indices = @transform_16, window_bounds = array<i64: 2, 1, 32>}, {pipeline_mode = #tpu.pipeline_mode<synchronous>, transform_indices = @transform_17, window_bounds = array<i64: 1, 32>}, {pipeline_mode = #tpu.pipeline_mode<synchronous>, transform_indices = @transform_18, window_bounds = array<i64: 1, 32>}, {transform_indices = @transform_19, window_bounds = array<i64: 2, 8, 32>}]} {
    %c0 = arith.constant 0 : index
    %c0_0 = arith.constant 0 : index
    %c0_1 = arith.constant 0 : index
    %0 = vector.load %arg1[%c0, %c0_0, %c0_1] : memref<2x8x32xf32, #tpu.memory_space<vmem>>, vector<2x8x32xf32>
    %1 = vector.shape_cast %0 : vector<2x8x32xf32> to vector<16x32xf32>
    %c0_2 = arith.constant 0 : index
    %c0_3 = arith.constant 0 : index
    %c0_4 = arith.constant 0 : index
    %2 = vector.load %arg2[%c0_2, %c0_3, %c0_4] : memref<2x1x32xf32, #tpu.memory_space<vmem>>, vector<1x1x32xf32>
    %3 = vector.shape_cast %2 : vector<1x1x32xf32> to vector<1x32xf32>
    %c0_5 = arith.constant 0 : index
    %c0_6 = arith.constant 0 : index
    %c0_7 = arith.constant 0 : index
    %4 = vector.load %arg3[%c0_5, %c0_6, %c0_7] : memref<2x1x32xf32, #tpu.memory_space<vmem>>, vector<1x1x32xf32>
    %5 = vector.shape_cast %4 : vector<1x1x32xf32> to vector<1x32xf32>
    %cst = arith.constant dense<0.000000e+00> : vector<16xf32>
    %6 = vector.multi_reduction <add>, %1, %cst [1] : vector<16x32xf32> to vector<16xf32>
    %7 = vector.shape_cast %6 : vector<16xf32> to vector<16x1xf32>
    %cst_8 = arith.constant 3.200000e+01 : f32
    %8 = vector.broadcast %cst_8 : f32 to vector<16x1xf32>
    %9 = arith.divf %7, %8 : vector<16x1xf32>
    %10 = vector.broadcast %9 : vector<16x1xf32> to vector<16x32xf32>
    %11 = arith.subf %1, %10 : vector<16x32xf32>
    %12 = arith.mulf %11, %11 : vector<16x32xf32>
    %cst_9 = arith.constant dense<0.000000e+00> : vector<16xf32>
    %13 = vector.multi_reduction <add>, %12, %cst_9 [1] : vector<16x32xf32> to vector<16xf32>
    %14 = vector.shape_cast %13 : vector<16xf32> to vector<16x1xf32>
    %cst_10 = arith.constant 3.200000e+01 : f32
    %15 = vector.broadcast %cst_10 : f32 to vector<16x1xf32>
    %16 = arith.divf %14, %15 : vector<16x1xf32>
    %17 = vector.broadcast %9 : vector<16x1xf32> to vector<16x32xf32>
    %18 = arith.subf %1, %17 : vector<16x32xf32>
    %cst_11 = arith.constant 9.99999997E-7 : f32
    %19 = vector.broadcast %cst_11 : f32 to vector<16x1xf32>
    %20 = arith.addf %16, %19 : vector<16x1xf32>
    %21 = math.rsqrt %20 : vector<16x1xf32>
    %22 = vector.broadcast %21 : vector<16x1xf32> to vector<16x32xf32>
    %23 = arith.mulf %18, %22 : vector<16x32xf32>
    %24 = vector.broadcast %3 : vector<1x32xf32> to vector<16x32xf32>
    %25 = arith.mulf %23, %24 : vector<16x32xf32>
    %26 = vector.broadcast %5 : vector<1x32xf32> to vector<16x32xf32>
    %27 = arith.addf %25, %26 : vector<16x32xf32>
    %c0_12 = arith.constant 0 : index
    %c0_13 = arith.constant 0 : index
    %c0_14 = arith.constant 0 : index
    %28 = vector.load %arg4[%c0_12, %c0_13, %c0_14] : memref<2x32x32xf32, #tpu.memory_space<vmem>>, vector<1x32x32xf32>
    %29 = vector.shape_cast %28 : vector<1x32x32xf32> to vector<32x32xf32>
    %cst_15 = arith.constant dense<0.000000e+00> : vector<16x32xf32>
    %30 = tpu.matmul %27, %29, %cst_15 {dimension_numbers = #tpu.dot_dimension_numbers<[1], [0], [0], [1], [0, 0, 1, 1], [], []>} : vector<16x32xf32>, vector<32x32xf32>, vector<16x32xf32> -> vector<16x32xf32>
    %c0_16 = arith.constant 0 : index
    %c0_17 = arith.constant 0 : index
    %c0_18 = arith.constant 0 : index
    %31 = vector.load %arg5[%c0_16, %c0_17, %c0_18] : memref<2x1x32xf32, #tpu.memory_space<vmem>>, vector<1x1x32xf32>
    %32 = vector.shape_cast %31 : vector<1x1x32xf32> to vector<1x32xf32>
    %33 = vector.broadcast %32 : vector<1x32xf32> to vector<16x32xf32>
    %34 = arith.addf %30, %33 : vector<16x32xf32>
    %c0_19 = arith.constant 0 : index
    %c0_20 = arith.constant 0 : index
    %c0_21 = arith.constant 0 : index
    %35 = vector.load %arg6[%c0_19, %c0_20, %c0_21] : memref<2x32x32xf32, #tpu.memory_space<vmem>>, vector<1x32x32xf32>
    %36 = vector.shape_cast %35 : vector<1x32x32xf32> to vector<32x32xf32>
    %cst_22 = arith.constant dense<0.000000e+00> : vector<16x32xf32>
    %37 = tpu.matmul %27, %36, %cst_22 {dimension_numbers = #tpu.dot_dimension_numbers<[1], [0], [0], [1], [0, 0, 1, 1], [], []>} : vector<16x32xf32>, vector<32x32xf32>, vector<16x32xf32> -> vector<16x32xf32>
    %c0_23 = arith.constant 0 : index
    %c0_24 = arith.constant 0 : index
    %c0_25 = arith.constant 0 : index
    %38 = vector.load %arg7[%c0_23, %c0_24, %c0_25] : memref<2x1x32xf32, #tpu.memory_space<vmem>>, vector<1x1x32xf32>
    %39 = vector.shape_cast %38 : vector<1x1x32xf32> to vector<1x32xf32>
    %40 = vector.broadcast %39 : vector<1x32xf32> to vector<16x32xf32>
    %41 = arith.addf %37, %40 : vector<16x32xf32>
    %c0_26 = arith.constant 0 : index
    %c0_27 = arith.constant 0 : index
    %c0_28 = arith.constant 0 : index
    %42 = vector.load %arg8[%c0_26, %c0_27, %c0_28] : memref<2x32x32xf32, #tpu.memory_space<vmem>>, vector<1x32x32xf32>
    %43 = vector.shape_cast %42 : vector<1x32x32xf32> to vector<32x32xf32>
    %cst_29 = arith.constant dense<0.000000e+00> : vector<16x32xf32>
    %44 = tpu.matmul %27, %43, %cst_29 {dimension_numbers = #tpu.dot_dimension_numbers<[1], [0], [0], [1], [0, 0, 1, 1], [], []>} : vector<16x32xf32>, vector<32x32xf32>, vector<16x32xf32> -> vector<16x32xf32>
    %c0_30 = arith.constant 0 : index
    %c0_31 = arith.constant 0 : index
    %c0_32 = arith.constant 0 : index
    %45 = vector.load %arg9[%c0_30, %c0_31, %c0_32] : memref<2x1x32xf32, #tpu.memory_space<vmem>>, vector<1x1x32xf32>
    %46 = vector.shape_cast %45 : vector<1x1x32xf32> to vector<1x32xf32>
    %47 = vector.broadcast %46 : vector<1x32xf32> to vector<16x32xf32>
    %48 = arith.addf %44, %47 : vector<16x32xf32>
    %cst_33 = arith.constant 0.353553385 : f32
    %49 = vector.broadcast %cst_33 : f32 to vector<16x32xf32>
    %50 = arith.mulf %34, %49 : vector<16x32xf32>
    %51 = vector.shape_cast %50 : vector<16x32xf32> to vector<2x8x32xf32>
    %52 = vector.shape_cast %41 : vector<16x32xf32> to vector<2x8x32xf32>
    %53 = vector.shape_cast %48 : vector<16x32xf32> to vector<2x8x32xf32>
    %54 = vector.extract_strided_slice %51 {offsets = [0, 0, 0], sizes = [2, 8, 8], strides = [1, 1, 1]} : vector<2x8x32xf32> to vector<2x8x8xf32>
    %55 = vector.extract_strided_slice %52 {offsets = [0, 0, 0], sizes = [2, 8, 8], strides = [1, 1, 1]} : vector<2x8x32xf32> to vector<2x8x8xf32>
    "tpu.trace_start"() <{level = 10 : i32, message = "bqd,bkd->bqk"}> : () -> ()
    %cst_34 = arith.constant dense<0.000000e+00> : vector<2x8x8xf32>
    %56 = tpu.matmul %54, %55, %cst_34 {dimension_numbers = #tpu.dot_dimension_numbers<[2], [2], [1], [1], [0, 0, 0, 1, 1, 1], [0], [0]>} : vector<2x8x8xf32>, vector<2x8x8xf32>, vector<2x8x8xf32> -> vector<2x8x8xf32>
    "tpu.trace_stop"() : () -> ()
    %cst_35 = arith.constant dense<0xFF800000> : vector<2x8xf32>
    %57 = vector.multi_reduction <maximumf>, %56, %cst_35 [2] : vector<2x8x8xf32> to vector<2x8xf32>
    %58 = vector.shape_cast %57 : vector<2x8xf32> to vector<2x8x1xf32>
    %59 = vector.broadcast %58 : vector<2x8x1xf32> to vector<2x8x8xf32>
    %60 = arith.subf %56, %59 : vector<2x8x8xf32>
    %61 = math.exp %60 : vector<2x8x8xf32>
    %cst_36 = arith.constant dense<0.000000e+00> : vector<2x8xf32>
    %62 = vector.multi_reduction <add>, %61, %cst_36 [2] : vector<2x8x8xf32> to vector<2x8xf32>
    %63 = vector.shape_cast %62 : vector<2x8xf32> to vector<2x8x1xf32>
    %64 = tpu.reciprocal %63 {approx = true} : vector<2x8x1xf32> -> vector<2x8x1xf32>
    %65 = vector.broadcast %64 : vector<2x8x1xf32> to vector<2x8x8xf32>
    %66 = arith.mulf %61, %65 : vector<2x8x8xf32>
    %67 = vector.extract_strided_slice %53 {offsets = [0, 0, 0], sizes = [2, 8, 8], strides = [1, 1, 1]} : vector<2x8x32xf32> to vector<2x8x8xf32>
    "tpu.trace_start"() <{level = 10 : i32, message = "bqk,bkd->bqd"}> : () -> ()
    %cst_37 = arith.constant dense<0.000000e+00> : vector<2x8x8xf32>
    %68 = tpu.matmul %66, %67, %cst_37 {dimension_numbers = #tpu.dot_dimension_numbers<[2], [1], [1], [2], [0, 0, 0, 1, 1, 2], [0], [0]>} : vector<2x8x8xf32>, vector<2x8x8xf32>, vector<2x8x8xf32> -> vector<2x8x8xf32>
    "tpu.trace_stop"() : () -> ()
    %69 = vector.extract_strided_slice %51 {offsets = [0, 0, 8], sizes = [2, 8, 8], strides = [1, 1, 1]} : vector<2x8x32xf32> to vector<2x8x8xf32>
    %70 = vector.extract_strided_slice %52 {offsets = [0, 0, 8], sizes = [2, 8, 8], strides = [1, 1, 1]} : vector<2x8x32xf32> to vector<2x8x8xf32>
    "tpu.trace_start"() <{level = 10 : i32, message = "bqd,bkd->bqk"}> : () -> ()
    %cst_38 = arith.constant dense<0.000000e+00> : vector<2x8x8xf32>
    %71 = tpu.matmul %69, %70, %cst_38 {dimension_numbers = #tpu.dot_dimension_numbers<[2], [2], [1], [1], [0, 0, 0, 1, 1, 1], [0], [0]>} : vector<2x8x8xf32>, vector<2x8x8xf32>, vector<2x8x8xf32> -> vector<2x8x8xf32>
    "tpu.trace_stop"() : () -> ()
    %cst_39 = arith.constant dense<0xFF800000> : vector<2x8xf32>
    %72 = vector.multi_reduction <maximumf>, %71, %cst_39 [2] : vector<2x8x8xf32> to vector<2x8xf32>
    %73 = vector.shape_cast %72 : vector<2x8xf32> to vector<2x8x1xf32>
    %74 = vector.broadcast %73 : vector<2x8x1xf32> to vector<2x8x8xf32>
    %75 = arith.subf %71, %74 : vector<2x8x8xf32>
    %76 = math.exp %75 : vector<2x8x8xf32>
    %cst_40 = arith.constant dense<0.000000e+00> : vector<2x8xf32>
    %77 = vector.multi_reduction <add>, %76, %cst_40 [2] : vector<2x8x8xf32> to vector<2x8xf32>
    %78 = vector.shape_cast %77 : vector<2x8xf32> to vector<2x8x1xf32>
    %79 = tpu.reciprocal %78 {approx = true} : vector<2x8x1xf32> -> vector<2x8x1xf32>
    %80 = vector.broadcast %79 : vector<2x8x1xf32> to vector<2x8x8xf32>
    %81 = arith.mulf %76, %80 : vector<2x8x8xf32>
    %82 = vector.extract_strided_slice %53 {offsets = [0, 0, 8], sizes = [2, 8, 8], strides = [1, 1, 1]} : vector<2x8x32xf32> to vector<2x8x8xf32>
    "tpu.trace_start"() <{level = 10 : i32, message = "bqk,bkd->bqd"}> : () -> ()
    %cst_41 = arith.constant dense<0.000000e+00> : vector<2x8x8xf32>
    %83 = tpu.matmul %81, %82, %cst_41 {dimension_numbers = #tpu.dot_dimension_numbers<[2], [1], [1], [2], [0, 0, 0, 1, 1, 2], [0], [0]>} : vector<2x8x8xf32>, vector<2x8x8xf32>, vector<2x8x8xf32> -> vector<2x8x8xf32>
    "tpu.trace_stop"() : () -> ()
    %84 = vector.extract_strided_slice %51 {offsets = [0, 0, 16], sizes = [2, 8, 8], strides = [1, 1, 1]} : vector<2x8x32xf32> to vector<2x8x8xf32>
    %85 = vector.extract_strided_slice %52 {offsets = [0, 0, 16], sizes = [2, 8, 8], strides = [1, 1, 1]} : vector<2x8x32xf32> to vector<2x8x8xf32>
    "tpu.trace_start"() <{level = 10 : i32, message = "bqd,bkd->bqk"}> : () -> ()
    %cst_42 = arith.constant dense<0.000000e+00> : vector<2x8x8xf32>
    %86 = tpu.matmul %84, %85, %cst_42 {dimension_numbers = #tpu.dot_dimension_numbers<[2], [2], [1], [1], [0, 0, 0, 1, 1, 1], [0], [0]>} : vector<2x8x8xf32>, vector<2x8x8xf32>, vector<2x8x8xf32> -> vector<2x8x8xf32>
    "tpu.trace_stop"() : () -> ()
    %cst_43 = arith.constant dense<0xFF800000> : vector<2x8xf32>
    %87 = vector.multi_reduction <maximumf>, %86, %cst_43 [2] : vector<2x8x8xf32> to vector<2x8xf32>
    %88 = vector.shape_cast %87 : vector<2x8xf32> to vector<2x8x1xf32>
    %89 = vector.broadcast %88 : vector<2x8x1xf32> to vector<2x8x8xf32>
    %90 = arith.subf %86, %89 : vector<2x8x8xf32>
    %91 = math.exp %90 : vector<2x8x8xf32>
    %cst_44 = arith.constant dense<0.000000e+00> : vector<2x8xf32>
    %92 = vector.multi_reduction <add>, %91, %cst_44 [2] : vector<2x8x8xf32> to vector<2x8xf32>
    %93 = vector.shape_cast %92 : vector<2x8xf32> to vector<2x8x1xf32>
    %94 = tpu.reciprocal %93 {approx = true} : vector<2x8x1xf32> -> vector<2x8x1xf32>
    %95 = vector.broadcast %94 : vector<2x8x1xf32> to vector<2x8x8xf32>
    %96 = arith.mulf %91, %95 : vector<2x8x8xf32>
    %97 = vector.extract_strided_slice %53 {offsets = [0, 0, 16], sizes = [2, 8, 8], strides = [1, 1, 1]} : vector<2x8x32xf32> to vector<2x8x8xf32>
    "tpu.trace_start"() <{level = 10 : i32, message = "bqk,bkd->bqd"}> : () -> ()
    %cst_45 = arith.constant dense<0.000000e+00> : vector<2x8x8xf32>
    %98 = tpu.matmul %96, %97, %cst_45 {dimension_numbers = #tpu.dot_dimension_numbers<[2], [1], [1], [2], [0, 0, 0, 1, 1, 2], [0], [0]>} : vector<2x8x8xf32>, vector<2x8x8xf32>, vector<2x8x8xf32> -> vector<2x8x8xf32>
    "tpu.trace_stop"() : () -> ()
    %99 = vector.extract_strided_slice %51 {offsets = [0, 0, 24], sizes = [2, 8, 8], strides = [1, 1, 1]} : vector<2x8x32xf32> to vector<2x8x8xf32>
    %100 = vector.extract_strided_slice %52 {offsets = [0, 0, 24], sizes = [2, 8, 8], strides = [1, 1, 1]} : vector<2x8x32xf32> to vector<2x8x8xf32>
    "tpu.trace_start"() <{level = 10 : i32, message = "bqd,bkd->bqk"}> : () -> ()
    %cst_46 = arith.constant dense<0.000000e+00> : vector<2x8x8xf32>
    %101 = tpu.matmul %99, %100, %cst_46 {dimension_numbers = #tpu.dot_dimension_numbers<[2], [2], [1], [1], [0, 0, 0, 1, 1, 1], [0], [0]>} : vector<2x8x8xf32>, vector<2x8x8xf32>, vector<2x8x8xf32> -> vector<2x8x8xf32>
    "tpu.trace_stop"() : () -> ()
    %cst_47 = arith.constant dense<0xFF800000> : vector<2x8xf32>
    %102 = vector.multi_reduction <maximumf>, %101, %cst_47 [2] : vector<2x8x8xf32> to vector<2x8xf32>
    %103 = vector.shape_cast %102 : vector<2x8xf32> to vector<2x8x1xf32>
    %104 = vector.broadcast %103 : vector<2x8x1xf32> to vector<2x8x8xf32>
    %105 = arith.subf %101, %104 : vector<2x8x8xf32>
    %106 = math.exp %105 : vector<2x8x8xf32>
    %cst_48 = arith.constant dense<0.000000e+00> : vector<2x8xf32>
    %107 = vector.multi_reduction <add>, %106, %cst_48 [2] : vector<2x8x8xf32> to vector<2x8xf32>
    %108 = vector.shape_cast %107 : vector<2x8xf32> to vector<2x8x1xf32>
    %109 = tpu.reciprocal %108 {approx = true} : vector<2x8x1xf32> -> vector<2x8x1xf32>
    %110 = vector.broadcast %109 : vector<2x8x1xf32> to vector<2x8x8xf32>
    %111 = arith.mulf %106, %110 : vector<2x8x8xf32>
    %112 = vector.extract_strided_slice %53 {offsets = [0, 0, 24], sizes = [2, 8, 8], strides = [1, 1, 1]} : vector<2x8x32xf32> to vector<2x8x8xf32>
    "tpu.trace_start"() <{level = 10 : i32, message = "bqk,bkd->bqd"}> : () -> ()
    %cst_49 = arith.constant dense<0.000000e+00> : vector<2x8x8xf32>
    %113 = tpu.matmul %111, %112, %cst_49 {dimension_numbers = #tpu.dot_dimension_numbers<[2], [1], [1], [2], [0, 0, 0, 1, 1, 2], [0], [0]>} : vector<2x8x8xf32>, vector<2x8x8xf32>, vector<2x8x8xf32> -> vector<2x8x8xf32>
    "tpu.trace_stop"() : () -> ()
    %114 = tpu.concatenate %68, %83, %98, %113 in 2 : vector<2x8x8xf32>, vector<2x8x8xf32>, vector<2x8x8xf32>, vector<2x8x8xf32> -> vector<2x8x32xf32>
    %115 = vector.shape_cast %114 : vector<2x8x32xf32> to vector<16x32xf32>
    %c0_50 = arith.constant 0 : index
    %c0_51 = arith.constant 0 : index
    %c0_52 = arith.constant 0 : index
    %116 = vector.load %arg10[%c0_50, %c0_51, %c0_52] : memref<2x32x32xf32, #tpu.memory_space<vmem>>, vector<1x32x32xf32>
    %117 = vector.shape_cast %116 : vector<1x32x32xf32> to vector<32x32xf32>
    %cst_53 = arith.constant dense<0.000000e+00> : vector<16x32xf32>
    %118 = tpu.matmul %115, %117, %cst_53 {dimension_numbers = #tpu.dot_dimension_numbers<[1], [0], [0], [1], [0, 0, 1, 1], [], []>} : vector<16x32xf32>, vector<32x32xf32>, vector<16x32xf32> -> vector<16x32xf32>
    %c0_54 = arith.constant 0 : index
    %c0_55 = arith.constant 0 : index
    %c0_56 = arith.constant 0 : index
    %119 = vector.load %arg11[%c0_54, %c0_55, %c0_56] : memref<2x1x32xf32, #tpu.memory_space<vmem>>, vector<1x1x32xf32>
    %120 = vector.shape_cast %119 : vector<1x1x32xf32> to vector<1x32xf32>
    %121 = vector.broadcast %120 : vector<1x32xf32> to vector<16x32xf32>
    %122 = arith.addf %118, %121 : vector<16x32xf32>
    %123 = arith.addf %1, %122 : vector<16x32xf32>
    %c0_57 = arith.constant 0 : index
    %c0_58 = arith.constant 0 : index
    %c0_59 = arith.constant 0 : index
    %124 = vector.load %arg12[%c0_57, %c0_58, %c0_59] : memref<2x1x32xf32, #tpu.memory_space<vmem>>, vector<1x1x32xf32>
    %125 = vector.shape_cast %124 : vector<1x1x32xf32> to vector<1x32xf32>
    %c0_60 = arith.constant 0 : index
    %c0_61 = arith.constant 0 : index
    %c0_62 = arith.constant 0 : index
    %126 = vector.load %arg13[%c0_60, %c0_61, %c0_62] : memref<2x1x32xf32, #tpu.memory_space<vmem>>, vector<1x1x32xf32>
    %127 = vector.shape_cast %126 : vector<1x1x32xf32> to vector<1x32xf32>
    %cst_63 = arith.constant dense<0.000000e+00> : vector<16xf32>
    %128 = vector.multi_reduction <add>, %123, %cst_63 [1] : vector<16x32xf32> to vector<16xf32>
    %129 = vector.shape_cast %128 : vector<16xf32> to vector<16x1xf32>
    %cst_64 = arith.constant 3.200000e+01 : f32
    %130 = vector.broadcast %cst_64 : f32 to vector<16x1xf32>
    %131 = arith.divf %129, %130 : vector<16x1xf32>
    %132 = vector.broadcast %131 : vector<16x1xf32> to vector<16x32xf32>
    %133 = arith.subf %123, %132 : vector<16x32xf32>
    %134 = arith.mulf %133, %133 : vector<16x32xf32>
    %cst_65 = arith.constant dense<0.000000e+00> : vector<16xf32>
    %135 = vector.multi_reduction <add>, %134, %cst_65 [1] : vector<16x32xf32> to vector<16xf32>
    %136 = vector.shape_cast %135 : vector<16xf32> to vector<16x1xf32>
    %cst_66 = arith.constant 3.200000e+01 : f32
    %137 = vector.broadcast %cst_66 : f32 to vector<16x1xf32>
    %138 = arith.divf %136, %137 : vector<16x1xf32>
    %139 = vector.broadcast %131 : vector<16x1xf32> to vector<16x32xf32>
    %140 = arith.subf %123, %139 : vector<16x32xf32>
    %cst_67 = arith.constant 9.99999997E-7 : f32
    %141 = vector.broadcast %cst_67 : f32 to vector<16x1xf32>
    %142 = arith.addf %138, %141 : vector<16x1xf32>
    %143 = math.rsqrt %142 : vector<16x1xf32>
    %144 = vector.broadcast %143 : vector<16x1xf32> to vector<16x32xf32>
    %145 = arith.mulf %140, %144 : vector<16x32xf32>
    %146 = vector.broadcast %125 : vector<1x32xf32> to vector<16x32xf32>
    %147 = arith.mulf %145, %146 : vector<16x32xf32>
    %148 = vector.broadcast %127 : vector<1x32xf32> to vector<16x32xf32>
    %149 = arith.addf %147, %148 : vector<16x32xf32>
    %c0_68 = arith.constant 0 : index
    %c0_69 = arith.constant 0 : index
    %c0_70 = arith.constant 0 : index
    %150 = vector.load %arg14[%c0_68, %c0_69, %c0_70] : memref<2x32x64xf32, #tpu.memory_space<vmem>>, vector<1x32x64xf32>
    %151 = vector.shape_cast %150 : vector<1x32x64xf32> to vector<32x64xf32>
    %cst_71 = arith.constant dense<0.000000e+00> : vector<16x64xf32>
    %152 = tpu.matmul %149, %151, %cst_71 {dimension_numbers = #tpu.dot_dimension_numbers<[1], [0], [0], [1], [0, 0, 1, 1], [], []>} : vector<16x32xf32>, vector<32x64xf32>, vector<16x64xf32> -> vector<16x64xf32>
    %c0_72 = arith.constant 0 : index
    %c0_73 = arith.constant 0 : index
    %c0_74 = arith.constant 0 : index
    %153 = vector.load %arg15[%c0_72, %c0_73, %c0_74] : memref<2x1x64xf32, #tpu.memory_space<vmem>>, vector<1x1x64xf32>
    %154 = vector.shape_cast %153 : vector<1x1x64xf32> to vector<1x64xf32>
    %155 = vector.broadcast %154 : vector<1x64xf32> to vector<16x64xf32>
    %156 = arith.addf %152, %155 : vector<16x64xf32>
    %cst_75 = arith.constant 5.000000e-01 : f32
    %157 = vector.broadcast %cst_75 : f32 to vector<16x64xf32>
    %158 = arith.mulf %157, %156 : vector<16x64xf32>
    %cst_76 = arith.constant 0.707106769 : f32
    %159 = vector.broadcast %cst_76 : f32 to vector<16x64xf32>
    %160 = arith.mulf %156, %159 : vector<16x64xf32>
    %161 = math.erf %160 : vector<16x64xf32>
    %cst_77 = arith.constant 1.000000e+00 : f32
    %162 = vector.broadcast %cst_77 : f32 to vector<16x64xf32>
    %163 = arith.addf %162, %161 : vector<16x64xf32>
    %164 = arith.mulf %158, %163 : vector<16x64xf32>
    %c0_78 = arith.constant 0 : index
    %c0_79 = arith.constant 0 : index
    %c0_80 = arith.constant 0 : index
    %165 = vector.load %arg16[%c0_78, %c0_79, %c0_80] : memref<2x64x32xf32, #tpu.memory_space<vmem>>, vector<1x64x32xf32>
    %166 = vector.shape_cast %165 : vector<1x64x32xf32> to vector<64x32xf32>
    %cst_81 = arith.constant dense<0.000000e+00> : vector<16x32xf32>
    %167 = tpu.matmul %164, %166, %cst_81 {dimension_numbers = #tpu.dot_dimension_numbers<[1], [0], [0], [1], [0, 0, 1, 1], [], []>} : vector<16x64xf32>, vector<64x32xf32>, vector<16x32xf32> -> vector<16x32xf32>
    %c0_82 = arith.constant 0 : index
    %c0_83 = arith.constant 0 : index
    %c0_84 = arith.constant 0 : index
    %168 = vector.load %arg17[%c0_82, %c0_83, %c0_84] : memref<2x1x32xf32, #tpu.memory_space<vmem>>, vector<1x1x32xf32>
    %169 = vector.shape_cast %168 : vector<1x1x32xf32> to vector<1x32xf32>
    %170 = vector.broadcast %169 : vector<1x32xf32> to vector<16x32xf32>
    %171 = arith.addf %167, %170 : vector<16x32xf32>
    %172 = arith.addf %123, %171 : vector<16x32xf32>
    %c1 = arith.constant 1 : index
    %c0_85 = arith.constant 0 : index
    %c0_86 = arith.constant 0 : index
    %173 = vector.load %arg2[%c1, %c0_85, %c0_86] : memref<2x1x32xf32, #tpu.memory_space<vmem>>, vector<1x1x32xf32>
    %174 = vector.shape_cast %173 : vector<1x1x32xf32> to vector<1x32xf32>
    %c1_87 = arith.constant 1 : index
    %c0_88 = arith.constant 0 : index
    %c0_89 = arith.constant 0 : index
    %175 = vector.load %arg3[%c1_87, %c0_88, %c0_89] : memref<2x1x32xf32, #tpu.memory_space<vmem>>, vector<1x1x32xf32>
    %176 = vector.shape_cast %175 : vector<1x1x32xf32> to vector<1x32xf32>
    %cst_90 = arith.constant dense<0.000000e+00> : vector<16xf32>
    %177 = vector.multi_reduction <add>, %172, %cst_90 [1] : vector<16x32xf32> to vector<16xf32>
    %178 = vector.shape_cast %177 : vector<16xf32> to vector<16x1xf32>
    %cst_91 = arith.constant 3.200000e+01 : f32
    %179 = vector.broadcast %cst_91 : f32 to vector<16x1xf32>
    %180 = arith.divf %178, %179 : vector<16x1xf32>
    %181 = vector.broadcast %180 : vector<16x1xf32> to vector<16x32xf32>
    %182 = arith.subf %172, %181 : vector<16x32xf32>
    %183 = arith.mulf %182, %182 : vector<16x32xf32>
    %cst_92 = arith.constant dense<0.000000e+00> : vector<16xf32>
    %184 = vector.multi_reduction <add>, %183, %cst_92 [1] : vector<16x32xf32> to vector<16xf32>
    %185 = vector.shape_cast %184 : vector<16xf32> to vector<16x1xf32>
    %cst_93 = arith.constant 3.200000e+01 : f32
    %186 = vector.broadcast %cst_93 : f32 to vector<16x1xf32>
    %187 = arith.divf %185, %186 : vector<16x1xf32>
    %188 = vector.broadcast %180 : vector<16x1xf32> to vector<16x32xf32>
    %189 = arith.subf %172, %188 : vector<16x32xf32>
    %cst_94 = arith.constant 9.99999997E-7 : f32
    %190 = vector.broadcast %cst_94 : f32 to vector<16x1xf32>
    %191 = arith.addf %187, %190 : vector<16x1xf32>
    %192 = math.rsqrt %191 : vector<16x1xf32>
    %193 = vector.broadcast %192 : vector<16x1xf32> to vector<16x32xf32>
    %194 = arith.mulf %189, %193 : vector<16x32xf32>
    %195 = vector.broadcast %174 : vector<1x32xf32> to vector<16x32xf32>
    %196 = arith.mulf %194, %195 : vector<16x32xf32>
    %197 = vector.broadcast %176 : vector<1x32xf32> to vector<16x32xf32>
    %198 = arith.addf %196, %197 : vector<16x32xf32>
    %c1_95 = arith.constant 1 : index
    %c0_96 = arith.constant 0 : index
    %c0_97 = arith.constant 0 : index
    %199 = vector.load %arg4[%c1_95, %c0_96, %c0_97] : memref<2x32x32xf32, #tpu.memory_space<vmem>>, vector<1x32x32xf32>
    %200 = vector.shape_cast %199 : vector<1x32x32xf32> to vector<32x32xf32>
    %cst_98 = arith.constant dense<0.000000e+00> : vector<16x32xf32>
    %201 = tpu.matmul %198, %200, %cst_98 {dimension_numbers = #tpu.dot_dimension_numbers<[1], [0], [0], [1], [0, 0, 1, 1], [], []>} : vector<16x32xf32>, vector<32x32xf32>, vector<16x32xf32> -> vector<16x32xf32>
    %c1_99 = arith.constant 1 : index
    %c0_100 = arith.constant 0 : index
    %c0_101 = arith.constant 0 : index
    %202 = vector.load %arg5[%c1_99, %c0_100, %c0_101] : memref<2x1x32xf32, #tpu.memory_space<vmem>>, vector<1x1x32xf32>
    %203 = vector.shape_cast %202 : vector<1x1x32xf32> to vector<1x32xf32>
    %204 = vector.broadcast %203 : vector<1x32xf32> to vector<16x32xf32>
    %205 = arith.addf %201, %204 : vector<16x32xf32>
    %c1_102 = arith.constant 1 : index
    %c0_103 = arith.constant 0 : index
    %c0_104 = arith.constant 0 : index
    %206 = vector.load %arg6[%c1_102, %c0_103, %c0_104] : memref<2x32x32xf32, #tpu.memory_space<vmem>>, vector<1x32x32xf32>
    %207 = vector.shape_cast %206 : vector<1x32x32xf32> to vector<32x32xf32>
    %cst_105 = arith.constant dense<0.000000e+00> : vector<16x32xf32>
    %208 = tpu.matmul %198, %207, %cst_105 {dimension_numbers = #tpu.dot_dimension_numbers<[1], [0], [0], [1], [0, 0, 1, 1], [], []>} : vector<16x32xf32>, vector<32x32xf32>, vector<16x32xf32> -> vector<16x32xf32>
    %c1_106 = arith.constant 1 : index
    %c0_107 = arith.constant 0 : index
    %c0_108 = arith.constant 0 : index
    %209 = vector.load %arg7[%c1_106, %c0_107, %c0_108] : memref<2x1x32xf32, #tpu.memory_space<vmem>>, vector<1x1x32xf32>
    %210 = vector.shape_cast %209 : vector<1x1x32xf32> to vector<1x32xf32>
    %211 = vector.broadcast %210 : vector<1x32xf32> to vector<16x32xf32>
    %212 = arith.addf %208, %211 : vector<16x32xf32>
    %c1_109 = arith.constant 1 : index
    %c0_110 = arith.constant 0 : index
    %c0_111 = arith.constant 0 : index
    %213 = vector.load %arg8[%c1_109, %c0_110, %c0_111] : memref<2x32x32xf32, #tpu.memory_space<vmem>>, vector<1x32x32xf32>
    %214 = vector.shape_cast %213 : vector<1x32x32xf32> to vector<32x32xf32>
    %cst_112 = arith.constant dense<0.000000e+00> : vector<16x32xf32>
    %215 = tpu.matmul %198, %214, %cst_112 {dimension_numbers = #tpu.dot_dimension_numbers<[1], [0], [0], [1], [0, 0, 1, 1], [], []>} : vector<16x32xf32>, vector<32x32xf32>, vector<16x32xf32> -> vector<16x32xf32>
    %c1_113 = arith.constant 1 : index
    %c0_114 = arith.constant 0 : index
    %c0_115 = arith.constant 0 : index
    %216 = vector.load %arg9[%c1_113, %c0_114, %c0_115] : memref<2x1x32xf32, #tpu.memory_space<vmem>>, vector<1x1x32xf32>
    %217 = vector.shape_cast %216 : vector<1x1x32xf32> to vector<1x32xf32>
    %218 = vector.broadcast %217 : vector<1x32xf32> to vector<16x32xf32>
    %219 = arith.addf %215, %218 : vector<16x32xf32>
    %cst_116 = arith.constant 0.353553385 : f32
    %220 = vector.broadcast %cst_116 : f32 to vector<16x32xf32>
    %221 = arith.mulf %205, %220 : vector<16x32xf32>
    %222 = vector.shape_cast %221 : vector<16x32xf32> to vector<2x8x32xf32>
    %223 = vector.shape_cast %212 : vector<16x32xf32> to vector<2x8x32xf32>
    %224 = vector.shape_cast %219 : vector<16x32xf32> to vector<2x8x32xf32>
    %225 = vector.extract_strided_slice %222 {offsets = [0, 0, 0], sizes = [2, 8, 8], strides = [1, 1, 1]} : vector<2x8x32xf32> to vector<2x8x8xf32>
    %226 = vector.extract_strided_slice %223 {offsets = [0, 0, 0], sizes = [2, 8, 8], strides = [1, 1, 1]} : vector<2x8x32xf32> to vector<2x8x8xf32>
    "tpu.trace_start"() <{level = 10 : i32, message = "bqd,bkd->bqk"}> : () -> ()
    %cst_117 = arith.constant dense<0.000000e+00> : vector<2x8x8xf32>
    %227 = tpu.matmul %225, %226, %cst_117 {dimension_numbers = #tpu.dot_dimension_numbers<[2], [2], [1], [1], [0, 0, 0, 1, 1, 1], [0], [0]>} : vector<2x8x8xf32>, vector<2x8x8xf32>, vector<2x8x8xf32> -> vector<2x8x8xf32>
    "tpu.trace_stop"() : () -> ()
    %cst_118 = arith.constant dense<0xFF800000> : vector<2x8xf32>
    %228 = vector.multi_reduction <maximumf>, %227, %cst_118 [2] : vector<2x8x8xf32> to vector<2x8xf32>
    %229 = vector.shape_cast %228 : vector<2x8xf32> to vector<2x8x1xf32>
    %230 = vector.broadcast %229 : vector<2x8x1xf32> to vector<2x8x8xf32>
    %231 = arith.subf %227, %230 : vector<2x8x8xf32>
    %232 = math.exp %231 : vector<2x8x8xf32>
    %cst_119 = arith.constant dense<0.000000e+00> : vector<2x8xf32>
    %233 = vector.multi_reduction <add>, %232, %cst_119 [2] : vector<2x8x8xf32> to vector<2x8xf32>
    %234 = vector.shape_cast %233 : vector<2x8xf32> to vector<2x8x1xf32>
    %235 = tpu.reciprocal %234 {approx = true} : vector<2x8x1xf32> -> vector<2x8x1xf32>
    %236 = vector.broadcast %235 : vector<2x8x1xf32> to vector<2x8x8xf32>
    %237 = arith.mulf %232, %236 : vector<2x8x8xf32>
    %238 = vector.extract_strided_slice %224 {offsets = [0, 0, 0], sizes = [2, 8, 8], strides = [1, 1, 1]} : vector<2x8x32xf32> to vector<2x8x8xf32>
    "tpu.trace_start"() <{level = 10 : i32, message = "bqk,bkd->bqd"}> : () -> ()
    %cst_120 = arith.constant dense<0.000000e+00> : vector<2x8x8xf32>
    %239 = tpu.matmul %237, %238, %cst_120 {dimension_numbers = #tpu.dot_dimension_numbers<[2], [1], [1], [2], [0, 0, 0, 1, 1, 2], [0], [0]>} : vector<2x8x8xf32>, vector<2x8x8xf32>, vector<2x8x8xf32> -> vector<2x8x8xf32>
    "tpu.trace_stop"() : () -> ()
    %240 = vector.extract_strided_slice %222 {offsets = [0, 0, 8], sizes = [2, 8, 8], strides = [1, 1, 1]} : vector<2x8x32xf32> to vector<2x8x8xf32>
    %241 = vector.extract_strided_slice %223 {offsets = [0, 0, 8], sizes = [2, 8, 8], strides = [1, 1, 1]} : vector<2x8x32xf32> to vector<2x8x8xf32>
    "tpu.trace_start"() <{level = 10 : i32, message = "bqd,bkd->bqk"}> : () -> ()
    %cst_121 = arith.constant dense<0.000000e+00> : vector<2x8x8xf32>
    %242 = tpu.matmul %240, %241, %cst_121 {dimension_numbers = #tpu.dot_dimension_numbers<[2], [2], [1], [1], [0, 0, 0, 1, 1, 1], [0], [0]>} : vector<2x8x8xf32>, vector<2x8x8xf32>, vector<2x8x8xf32> -> vector<2x8x8xf32>
    "tpu.trace_stop"() : () -> ()
    %cst_122 = arith.constant dense<0xFF800000> : vector<2x8xf32>
    %243 = vector.multi_reduction <maximumf>, %242, %cst_122 [2] : vector<2x8x8xf32> to vector<2x8xf32>
    %244 = vector.shape_cast %243 : vector<2x8xf32> to vector<2x8x1xf32>
    %245 = vector.broadcast %244 : vector<2x8x1xf32> to vector<2x8x8xf32>
    %246 = arith.subf %242, %245 : vector<2x8x8xf32>
    %247 = math.exp %246 : vector<2x8x8xf32>
    %cst_123 = arith.constant dense<0.000000e+00> : vector<2x8xf32>
    %248 = vector.multi_reduction <add>, %247, %cst_123 [2] : vector<2x8x8xf32> to vector<2x8xf32>
    %249 = vector.shape_cast %248 : vector<2x8xf32> to vector<2x8x1xf32>
    %250 = tpu.reciprocal %249 {approx = true} : vector<2x8x1xf32> -> vector<2x8x1xf32>
    %251 = vector.broadcast %250 : vector<2x8x1xf32> to vector<2x8x8xf32>
    %252 = arith.mulf %247, %251 : vector<2x8x8xf32>
    %253 = vector.extract_strided_slice %224 {offsets = [0, 0, 8], sizes = [2, 8, 8], strides = [1, 1, 1]} : vector<2x8x32xf32> to vector<2x8x8xf32>
    "tpu.trace_start"() <{level = 10 : i32, message = "bqk,bkd->bqd"}> : () -> ()
    %cst_124 = arith.constant dense<0.000000e+00> : vector<2x8x8xf32>
    %254 = tpu.matmul %252, %253, %cst_124 {dimension_numbers = #tpu.dot_dimension_numbers<[2], [1], [1], [2], [0, 0, 0, 1, 1, 2], [0], [0]>} : vector<2x8x8xf32>, vector<2x8x8xf32>, vector<2x8x8xf32> -> vector<2x8x8xf32>
    "tpu.trace_stop"() : () -> ()
    %255 = vector.extract_strided_slice %222 {offsets = [0, 0, 16], sizes = [2, 8, 8], strides = [1, 1, 1]} : vector<2x8x32xf32> to vector<2x8x8xf32>
    %256 = vector.extract_strided_slice %223 {offsets = [0, 0, 16], sizes = [2, 8, 8], strides = [1, 1, 1]} : vector<2x8x32xf32> to vector<2x8x8xf32>
    "tpu.trace_start"() <{level = 10 : i32, message = "bqd,bkd->bqk"}> : () -> ()
    %cst_125 = arith.constant dense<0.000000e+00> : vector<2x8x8xf32>
    %257 = tpu.matmul %255, %256, %cst_125 {dimension_numbers = #tpu.dot_dimension_numbers<[2], [2], [1], [1], [0, 0, 0, 1, 1, 1], [0], [0]>} : vector<2x8x8xf32>, vector<2x8x8xf32>, vector<2x8x8xf32> -> vector<2x8x8xf32>
    "tpu.trace_stop"() : () -> ()
    %cst_126 = arith.constant dense<0xFF800000> : vector<2x8xf32>
    %258 = vector.multi_reduction <maximumf>, %257, %cst_126 [2] : vector<2x8x8xf32> to vector<2x8xf32>
    %259 = vector.shape_cast %258 : vector<2x8xf32> to vector<2x8x1xf32>
    %260 = vector.broadcast %259 : vector<2x8x1xf32> to vector<2x8x8xf32>
    %261 = arith.subf %257, %260 : vector<2x8x8xf32>
    %262 = math.exp %261 : vector<2x8x8xf32>
    %cst_127 = arith.constant dense<0.000000e+00> : vector<2x8xf32>
    %263 = vector.multi_reduction <add>, %262, %cst_127 [2] : vector<2x8x8xf32> to vector<2x8xf32>
    %264 = vector.shape_cast %263 : vector<2x8xf32> to vector<2x8x1xf32>
    %265 = tpu.reciprocal %264 {approx = true} : vector<2x8x1xf32> -> vector<2x8x1xf32>
    %266 = vector.broadcast %265 : vector<2x8x1xf32> to vector<2x8x8xf32>
    %267 = arith.mulf %262, %266 : vector<2x8x8xf32>
    %268 = vector.extract_strided_slice %224 {offsets = [0, 0, 16], sizes = [2, 8, 8], strides = [1, 1, 1]} : vector<2x8x32xf32> to vector<2x8x8xf32>
    "tpu.trace_start"() <{level = 10 : i32, message = "bqk,bkd->bqd"}> : () -> ()
    %cst_128 = arith.constant dense<0.000000e+00> : vector<2x8x8xf32>
    %269 = tpu.matmul %267, %268, %cst_128 {dimension_numbers = #tpu.dot_dimension_numbers<[2], [1], [1], [2], [0, 0, 0, 1, 1, 2], [0], [0]>} : vector<2x8x8xf32>, vector<2x8x8xf32>, vector<2x8x8xf32> -> vector<2x8x8xf32>
    "tpu.trace_stop"() : () -> ()
    %270 = vector.extract_strided_slice %222 {offsets = [0, 0, 24], sizes = [2, 8, 8], strides = [1, 1, 1]} : vector<2x8x32xf32> to vector<2x8x8xf32>
    %271 = vector.extract_strided_slice %223 {offsets = [0, 0, 24], sizes = [2, 8, 8], strides = [1, 1, 1]} : vector<2x8x32xf32> to vector<2x8x8xf32>
    "tpu.trace_start"() <{level = 10 : i32, message = "bqd,bkd->bqk"}> : () -> ()
    %cst_129 = arith.constant dense<0.000000e+00> : vector<2x8x8xf32>
    %272 = tpu.matmul %270, %271, %cst_129 {dimension_numbers = #tpu.dot_dimension_numbers<[2], [2], [1], [1], [0, 0, 0, 1, 1, 1], [0], [0]>} : vector<2x8x8xf32>, vector<2x8x8xf32>, vector<2x8x8xf32> -> vector<2x8x8xf32>
    "tpu.trace_stop"() : () -> ()
    %cst_130 = arith.constant dense<0xFF800000> : vector<2x8xf32>
    %273 = vector.multi_reduction <maximumf>, %272, %cst_130 [2] : vector<2x8x8xf32> to vector<2x8xf32>
    %274 = vector.shape_cast %273 : vector<2x8xf32> to vector<2x8x1xf32>
    %275 = vector.broadcast %274 : vector<2x8x1xf32> to vector<2x8x8xf32>
    %276 = arith.subf %272, %275 : vector<2x8x8xf32>
    %277 = math.exp %276 : vector<2x8x8xf32>
    %cst_131 = arith.constant dense<0.000000e+00> : vector<2x8xf32>
    %278 = vector.multi_reduction <add>, %277, %cst_131 [2] : vector<2x8x8xf32> to vector<2x8xf32>
    %279 = vector.shape_cast %278 : vector<2x8xf32> to vector<2x8x1xf32>
    %280 = tpu.reciprocal %279 {approx = true} : vector<2x8x1xf32> -> vector<2x8x1xf32>
    %281 = vector.broadcast %280 : vector<2x8x1xf32> to vector<2x8x8xf32>
    %282 = arith.mulf %277, %281 : vector<2x8x8xf32>
    %283 = vector.extract_strided_slice %224 {offsets = [0, 0, 24], sizes = [2, 8, 8], strides = [1, 1, 1]} : vector<2x8x32xf32> to vector<2x8x8xf32>
    "tpu.trace_start"() <{level = 10 : i32, message = "bqk,bkd->bqd"}> : () -> ()
    %cst_132 = arith.constant dense<0.000000e+00> : vector<2x8x8xf32>
    %284 = tpu.matmul %282, %283, %cst_132 {dimension_numbers = #tpu.dot_dimension_numbers<[2], [1], [1], [2], [0, 0, 0, 1, 1, 2], [0], [0]>} : vector<2x8x8xf32>, vector<2x8x8xf32>, vector<2x8x8xf32> -> vector<2x8x8xf32>
    "tpu.trace_stop"() : () -> ()
    %285 = tpu.concatenate %239, %254, %269, %284 in 2 : vector<2x8x8xf32>, vector<2x8x8xf32>, vector<2x8x8xf32>, vector<2x8x8xf32> -> vector<2x8x32xf32>
    %286 = vector.shape_cast %285 : vector<2x8x32xf32> to vector<16x32xf32>
    %c1_133 = arith.constant 1 : index
    %c0_134 = arith.constant 0 : index
    %c0_135 = arith.constant 0 : index
    %287 = vector.load %arg10[%c1_133, %c0_134, %c0_135] : memref<2x32x32xf32, #tpu.memory_space<vmem>>, vector<1x32x32xf32>
    %288 = vector.shape_cast %287 : vector<1x32x32xf32> to vector<32x32xf32>
    %cst_136 = arith.constant dense<0.000000e+00> : vector<16x32xf32>
    %289 = tpu.matmul %286, %288, %cst_136 {dimension_numbers = #tpu.dot_dimension_numbers<[1], [0], [0], [1], [0, 0, 1, 1], [], []>} : vector<16x32xf32>, vector<32x32xf32>, vector<16x32xf32> -> vector<16x32xf32>
    %c1_137 = arith.constant 1 : index
    %c0_138 = arith.constant 0 : index
    %c0_139 = arith.constant 0 : index
    %290 = vector.load %arg11[%c1_137, %c0_138, %c0_139] : memref<2x1x32xf32, #tpu.memory_space<vmem>>, vector<1x1x32xf32>
    %291 = vector.shape_cast %290 : vector<1x1x32xf32> to vector<1x32xf32>
    %292 = vector.broadcast %291 : vector<1x32xf32> to vector<16x32xf32>
    %293 = arith.addf %289, %292 : vector<16x32xf32>
    %294 = arith.addf %172, %293 : vector<16x32xf32>
    %c1_140 = arith.constant 1 : index
    %c0_141 = arith.constant 0 : index
    %c0_142 = arith.constant 0 : index
    %295 = vector.load %arg12[%c1_140, %c0_141, %c0_142] : memref<2x1x32xf32, #tpu.memory_space<vmem>>, vector<1x1x32xf32>
    %296 = vector.shape_cast %295 : vector<1x1x32xf32> to vector<1x32xf32>
    %c1_143 = arith.constant 1 : index
    %c0_144 = arith.constant 0 : index
    %c0_145 = arith.constant 0 : index
    %297 = vector.load %arg13[%c1_143, %c0_144, %c0_145] : memref<2x1x32xf32, #tpu.memory_space<vmem>>, vector<1x1x32xf32>
    %298 = vector.shape_cast %297 : vector<1x1x32xf32> to vector<1x32xf32>
    %cst_146 = arith.constant dense<0.000000e+00> : vector<16xf32>
    %299 = vector.multi_reduction <add>, %294, %cst_146 [1] : vector<16x32xf32> to vector<16xf32>
    %300 = vector.shape_cast %299 : vector<16xf32> to vector<16x1xf32>
    %cst_147 = arith.constant 3.200000e+01 : f32
    %301 = vector.broadcast %cst_147 : f32 to vector<16x1xf32>
    %302 = arith.divf %300, %301 : vector<16x1xf32>
    %303 = vector.broadcast %302 : vector<16x1xf32> to vector<16x32xf32>
    %304 = arith.subf %294, %303 : vector<16x32xf32>
    %305 = arith.mulf %304, %304 : vector<16x32xf32>
    %cst_148 = arith.constant dense<0.000000e+00> : vector<16xf32>
    %306 = vector.multi_reduction <add>, %305, %cst_148 [1] : vector<16x32xf32> to vector<16xf32>
    %307 = vector.shape_cast %306 : vector<16xf32> to vector<16x1xf32>
    %cst_149 = arith.constant 3.200000e+01 : f32
    %308 = vector.broadcast %cst_149 : f32 to vector<16x1xf32>
    %309 = arith.divf %307, %308 : vector<16x1xf32>
    %310 = vector.broadcast %302 : vector<16x1xf32> to vector<16x32xf32>
    %311 = arith.subf %294, %310 : vector<16x32xf32>
    %cst_150 = arith.constant 9.99999997E-7 : f32
    %312 = vector.broadcast %cst_150 : f32 to vector<16x1xf32>
    %313 = arith.addf %309, %312 : vector<16x1xf32>
    %314 = math.rsqrt %313 : vector<16x1xf32>
    %315 = vector.broadcast %314 : vector<16x1xf32> to vector<16x32xf32>
    %316 = arith.mulf %311, %315 : vector<16x32xf32>
    %317 = vector.broadcast %296 : vector<1x32xf32> to vector<16x32xf32>
    %318 = arith.mulf %316, %317 : vector<16x32xf32>
    %319 = vector.broadcast %298 : vector<1x32xf32> to vector<16x32xf32>
    %320 = arith.addf %318, %319 : vector<16x32xf32>
    %c1_151 = arith.constant 1 : index
    %c0_152 = arith.constant 0 : index
    %c0_153 = arith.constant 0 : index
    %321 = vector.load %arg14[%c1_151, %c0_152, %c0_153] : memref<2x32x64xf32, #tpu.memory_space<vmem>>, vector<1x32x64xf32>
    %322 = vector.shape_cast %321 : vector<1x32x64xf32> to vector<32x64xf32>
    %cst_154 = arith.constant dense<0.000000e+00> : vector<16x64xf32>
    %323 = tpu.matmul %320, %322, %cst_154 {dimension_numbers = #tpu.dot_dimension_numbers<[1], [0], [0], [1], [0, 0, 1, 1], [], []>} : vector<16x32xf32>, vector<32x64xf32>, vector<16x64xf32> -> vector<16x64xf32>
    %c1_155 = arith.constant 1 : index
    %c0_156 = arith.constant 0 : index
    %c0_157 = arith.constant 0 : index
    %324 = vector.load %arg15[%c1_155, %c0_156, %c0_157] : memref<2x1x64xf32, #tpu.memory_space<vmem>>, vector<1x1x64xf32>
    %325 = vector.shape_cast %324 : vector<1x1x64xf32> to vector<1x64xf32>
    %326 = vector.broadcast %325 : vector<1x64xf32> to vector<16x64xf32>
    %327 = arith.addf %323, %326 : vector<16x64xf32>
    %cst_158 = arith.constant 5.000000e-01 : f32
    %328 = vector.broadcast %cst_158 : f32 to vector<16x64xf32>
    %329 = arith.mulf %328, %327 : vector<16x64xf32>
    %cst_159 = arith.constant 0.707106769 : f32
    %330 = vector.broadcast %cst_159 : f32 to vector<16x64xf32>
    %331 = arith.mulf %327, %330 : vector<16x64xf32>
    %332 = math.erf %331 : vector<16x64xf32>
    %cst_160 = arith.constant 1.000000e+00 : f32
    %333 = vector.broadcast %cst_160 : f32 to vector<16x64xf32>
    %334 = arith.addf %333, %332 : vector<16x64xf32>
    %335 = arith.mulf %329, %334 : vector<16x64xf32>
    %c1_161 = arith.constant 1 : index
    %c0_162 = arith.constant 0 : index
    %c0_163 = arith.constant 0 : index
    %336 = vector.load %arg16[%c1_161, %c0_162, %c0_163] : memref<2x64x32xf32, #tpu.memory_space<vmem>>, vector<1x64x32xf32>
    %337 = vector.shape_cast %336 : vector<1x64x32xf32> to vector<64x32xf32>
    %cst_164 = arith.constant dense<0.000000e+00> : vector<16x32xf32>
    %338 = tpu.matmul %335, %337, %cst_164 {dimension_numbers = #tpu.dot_dimension_numbers<[1], [0], [0], [1], [0, 0, 1, 1], [], []>} : vector<16x64xf32>, vector<64x32xf32>, vector<16x32xf32> -> vector<16x32xf32>
    %c1_165 = arith.constant 1 : index
    %c0_166 = arith.constant 0 : index
    %c0_167 = arith.constant 0 : index
    %339 = vector.load %arg17[%c1_165, %c0_166, %c0_167] : memref<2x1x32xf32, #tpu.memory_space<vmem>>, vector<1x1x32xf32>
    %340 = vector.shape_cast %339 : vector<1x1x32xf32> to vector<1x32xf32>
    %341 = vector.broadcast %340 : vector<1x32xf32> to vector<16x32xf32>
    %342 = arith.addf %338, %341 : vector<16x32xf32>
    %343 = arith.addf %294, %342 : vector<16x32xf32>
    %c0_168 = arith.constant 0 : index
    %c0_169 = arith.constant 0 : index
    %344 = vector.load %arg18[%c0_168, %c0_169] : memref<1x32xf32, #tpu.memory_space<vmem>>, vector<1x32xf32>
    %c0_170 = arith.constant 0 : index
    %c0_171 = arith.constant 0 : index
    %345 = vector.load %arg19[%c0_170, %c0_171] : memref<1x32xf32, #tpu.memory_space<vmem>>, vector<1x32xf32>
    %cst_172 = arith.constant dense<0.000000e+00> : vector<16xf32>
    %346 = vector.multi_reduction <add>, %343, %cst_172 [1] : vector<16x32xf32> to vector<16xf32>
    %347 = vector.shape_cast %346 : vector<16xf32> to vector<16x1xf32>
    %cst_173 = arith.constant 3.200000e+01 : f32
    %348 = vector.broadcast %cst_173 : f32 to vector<16x1xf32>
    %349 = arith.divf %347, %348 : vector<16x1xf32>
    %350 = vector.broadcast %349 : vector<16x1xf32> to vector<16x32xf32>
    %351 = arith.subf %343, %350 : vector<16x32xf32>
    %352 = arith.mulf %351, %351 : vector<16x32xf32>
    %cst_174 = arith.constant dense<0.000000e+00> : vector<16xf32>
    %353 = vector.multi_reduction <add>, %352, %cst_174 [1] : vector<16x32xf32> to vector<16xf32>
    %354 = vector.shape_cast %353 : vector<16xf32> to vector<16x1xf32>
    %cst_175 = arith.constant 3.200000e+01 : f32
    %355 = vector.broadcast %cst_175 : f32 to vector<16x1xf32>
    %356 = arith.divf %354, %355 : vector<16x1xf32>
    %357 = vector.broadcast %349 : vector<16x1xf32> to vector<16x32xf32>
    %358 = arith.subf %343, %357 : vector<16x32xf32>
    %cst_176 = arith.constant 9.99999997E-7 : f32
    %359 = vector.broadcast %cst_176 : f32 to vector<16x1xf32>
    %360 = arith.addf %356, %359 : vector<16x1xf32>
    %361 = math.rsqrt %360 : vector<16x1xf32>
    %362 = vector.broadcast %361 : vector<16x1xf32> to vector<16x32xf32>
    %363 = arith.mulf %358, %362 : vector<16x32xf32>
    %364 = vector.broadcast %344 : vector<1x32xf32> to vector<16x32xf32>
    %365 = arith.mulf %363, %364 : vector<16x32xf32>
    %366 = vector.broadcast %345 : vector<1x32xf32> to vector<16x32xf32>
    %367 = arith.addf %365, %366 : vector<16x32xf32>
    %368 = vector.shape_cast %367 : vector<16x32xf32> to vector<2x8x32xf32>
    %c0_177 = arith.constant 0 : index
    %c0_178 = arith.constant 0 : index
    %c0_179 = arith.constant 0 : index
    %369 = vector.load %arg20[%c0_177, %c0_178, %c0_179] : memref<2x8x32xf32, #tpu.memory_space<vmem>>, vector<2x8x32xf32>
    tpu.vector_store %arg20[%c0_177, %c0_178, %c0_179], %368 {strides = array<i32>} : memref<2x8x32xf32, #tpu.memory_space<vmem>>, vector<2x8x32xf32>,
    return
  }
  func.func @transform_0(%arg0: i32) -> (i32, i32, i32) {
    %c0_i32 = arith.constant 0 : i32
    %c0_i32_0 = arith.constant 0 : i32
    %c0_i32_1 = arith.constant 0 : i32
    return %arg0, %c0_i32, %c0_i32_0 : i32, i32, i32
  }
  func.func @transform_1(%arg0: i32) -> (i32, i32, i32) {
    %c0_i32 = arith.constant 0 : i32
    %c0_i32_0 = arith.constant 0 : i32
    %c0_i32_1 = arith.constant 0 : i32
    %c0_i32_2 = arith.constant 0 : i32
    return %c0_i32, %c0_i32_0, %c0_i32_1 : i32, i32, i32
  }
  func.func @transform_2(%arg0: i32) -> (i32, i32, i32) {
    %c0_i32 = arith.constant 0 : i32
    %c0_i32_0 = arith.constant 0 : i32
    %c0_i32_1 = arith.constant 0 : i32
    %c0_i32_2 = arith.constant 0 : i32
    return %c0_i32, %c0_i32_0, %c0_i32_1 : i32, i32, i32
  }
  func.func @transform_3(%arg0: i32) -> (i32, i32, i32) {
    %c0_i32 = arith.constant 0 : i32
    %c0_i32_0 = arith.constant 0 : i32
    %c0_i32_1 = arith.constant 0 : i32
    %c0_i32_2 = arith.constant 0 : i32
    return %c0_i32, %c0_i32_0, %c0_i32_1 : i32, i32, i32
  }
  func.func @transform_4(%arg0: i32) -> (i32, i32, i32) {
    %c0_i32 = arith.constant 0 : i32
    %c0_i32_0 = arith.constant 0 : i32
    %c0_i32_1 = arith.constant 0 : i32
    %c0_i32_2 = arith.constant 0 : i32
    return %c0_i32, %c0_i32_0, %c0_i32_1 : i32, i32, i32
  }
  func.func @transform_5(%arg0: i32) -> (i32, i32, i32) {
    %c0_i32 = arith.constant 0 : i32
    %c0_i32_0 = arith.constant 0 : i32
    %c0_i32_1 = arith.constant 0 : i32
    %c0_i32_2 = arith.constant 0 : i32
    return %c0_i32, %c0_i32_0, %c0_i32_1 : i32, i32, i32
  }
  func.func @transform_6(%arg0: i32) -> (i32, i32, i32) {
    %c0_i32 = arith.constant 0 : i32
    %c0_i32_0 = arith.constant 0 : i32
    %c0_i32_1 = arith.constant 0 : i32
    %c0_i32_2 = arith.constant 0 : i32
    return %c0_i32, %c0_i32_0, %c0_i32_1 : i32, i32, i32
  }
  func.func @transform_7(%arg0: i32) -> (i32, i32, i32) {
    %c0_i32 = arith.constant 0 : i32
    %c0_i32_0 = arith.constant 0 : i32
    %c0_i32_1 = arith.constant 0 : i32
    %c0_i32_2 = arith.constant 0 : i32
    return %c0_i32, %c0_i32_0, %c0_i32_1 : i32, i32, i32
  }
  func.func @transform_8(%arg0: i32) -> (i32, i32, i32) {
    %c0_i32 = arith.constant 0 : i32
    %c0_i32_0 = arith.constant 0 : i32
    %c0_i32_1 = arith.constant 0 : i32
    %c0_i32_2 = arith.constant 0 : i32
    return %c0_i32, %c0_i32_0, %c0_i32_1 : i32, i32, i32
  }
  func.func @transform_9(%arg0: i32) -> (i32, i32, i32) {
    %c0_i32 = arith.constant 0 : i32
    %c0_i32_0 = arith.constant 0 : i32
    %c0_i32_1 = arith.constant 0 : i32
    %c0_i32_2 = arith.constant 0 : i32
    return %c0_i32, %c0_i32_0, %c0_i32_1 : i32, i32, i32
  }
  func.func @transform_10(%arg0: i32) -> (i32, i32, i32) {
    %c0_i32 = arith.constant 0 : i32
    %c0_i32_0 = arith.constant 0 : i32
    %c0_i32_1 = arith.constant 0 : i32
    %c0_i32_2 = arith.constant 0 : i32
    return %c0_i32, %c0_i32_0, %c0_i32_1 : i32, i32, i32
  }
  func.func @transform_11(%arg0: i32) -> (i32, i32, i32) {
    %c0_i32 = arith.constant 0 : i32
    %c0_i32_0 = arith.constant 0 : i32
    %c0_i32_1 = arith.constant 0 : i32
    %c0_i32_2 = arith.constant 0 : i32
    return %c0_i32, %c0_i32_0, %c0_i32_1 : i32, i32, i32
  }
  func.func @transform_12(%arg0: i32) -> (i32, i32, i32) {
    %c0_i32 = arith.constant 0 : i32
    %c0_i32_0 = arith.constant 0 : i32
    %c0_i32_1 = arith.constant 0 : i32
    %c0_i32_2 = arith.constant 0 : i32
    return %c0_i32, %c0_i32_0, %c0_i32_1 : i32, i32, i32
  }
  func.func @transform_13(%arg0: i32) -> (i32, i32, i32) {
    %c0_i32 = arith.constant 0 : i32
    %c0_i32_0 = arith.constant 0 : i32
    %c0_i32_1 = arith.constant 0 : i32
    %c0_i32_2 = arith.constant 0 : i32
    return %c0_i32, %c0_i32_0, %c0_i32_1 : i32, i32, i32
  }
  func.func @transform_14(%arg0: i32) -> (i32, i32, i32) {
    %c0_i32 = arith.constant 0 : i32
    %c0_i32_0 = arith.constant 0 : i32
    %c0_i32_1 = arith.constant 0 : i32
    %c0_i32_2 = arith.constant 0 : i32
    return %c0_i32, %c0_i32_0, %c0_i32_1 : i32, i32, i32
  }
  func.func @transform_15(%arg0: i32) -> (i32, i32, i32) {
    %c0_i32 = arith.constant 0 : i32
    %c0_i32_0 = arith.constant 0 : i32
    %c0_i32_1 = arith.constant 0 : i32
    %c0_i32_2 = arith.constant 0 : i32
    return %c0_i32, %c0_i32_0, %c0_i32_1 : i32, i32, i32
  }
  func.func @transform_16(%arg0: i32) -> (i32, i32, i32) {
    %c0_i32 = arith.constant 0 : i32
    %c0_i32_0 = arith.constant 0 : i32
    %c0_i32_1 = arith.constant 0 : i32
    %c0_i32_2 = arith.constant 0 : i32
    return %c0_i32, %c0_i32_0, %c0_i32_1 : i32, i32, i32
  }
  func.func @transform_17(%arg0: i32) -> (i32, i32) {
    %c0_i32 = arith.constant 0 : i32
    %c0_i32_0 = arith.constant 0 : i32
    %c0_i32_1 = arith.constant 0 : i32
    return %c0_i32, %c0_i32_0 : i32, i32
  }
  func.func @transform_18(%arg0: i32) -> (i32, i32) {
    %c0_i32 = arith.constant 0 : i32
    %c0_i32_0 = arith.constant 0 : i32
    %c0_i32_1 = arith.constant 0 : i32
    return %c0_i32, %c0_i32_0 : i32, i32
  }
  func.func @transform_19(%arg0: i32) -> (i32, i32, i32) {
    %c0_i32 = arith.constant 0 : i32
    %c0_i32_0 = arith.constant 0 : i32
    %c0_i32_1 = arith.constant 0 : i32
    return %arg0, %c0_i32, %c0_i32_0 : i32, i32, i32
  }
}

</mosaic_0001>

<llo_original>
// kernel: tpu_custom_call.1
$region0: #{tpu_custom_call.1}
  #allocation0 [shape = 'u32[]', space=smem, size = 0x4, offset = 0x4, fixed_abs, tag = 'smem constant byte address 0x4 - core index']
  #allocation1 [shape = 'u32[144,128]{1,0:T(1,128)}', space=vmem, size = 0x12000, scoped, tag = 'internal scratch']
  %s0 = inlined_call_operand.hbm [shape: f32[2,8,32], index: 0, kind: input, shape index: {}]
  %s1 = inlined_call_operand.hbm [shape: f32[2,1,32], index: 1, kind: input, shape index: {}]
  %s2 = inlined_call_operand.vmem [shape: f32[2,1,32], index: 2, kind: input, shape index: {}]
  %s3 = inlined_call_operand.vmem [shape: f32[2,32,32], index: 3, kind: input, shape index: {}]
  %s4 = inlined_call_operand.vmem [shape: f32[2,1,32], index: 4, kind: input, shape index: {}]
  %s5 = inlined_call_operand.vmem [shape: f32[2,32,32], index: 5, kind: input, shape index: {}]
  %s6 = inlined_call_operand.vmem [shape: f32[2,1,32], index: 6, kind: input, shape index: {}]
  %s7 = inlined_call_operand.vmem [shape: f32[2,32,32], index: 7, kind: input, shape index: {}]
  %s8 = inlined_call_operand.vmem [shape: f32[2,1,32], index: 8, kind: input, shape index: {}]
  %s9 = inlined_call_operand.hbm [shape: f32[2,32,32], index: 9, kind: input, shape index: {}]
  %s10 = inlined_call_operand.vmem [shape: f32[2,1,32], index: 10, kind: input, shape index: {}]
  %s11 = inlined_call_operand.vmem [shape: f32[2,1,32], index: 11, kind: input, shape index: {}]
  %s12 = inlined_call_operand.vmem [shape: f32[2,1,32], index: 12, kind: input, shape index: {}]
  %s13 = inlined_call_operand.hbm [shape: f32[2,32,64], index: 13, kind: input, shape index: {}]
  %s14 = inlined_call_operand.vmem [shape: f32[2,1,64], index: 14, kind: input, shape index: {}]
  %s15 = inlined_call_operand.vmem [shape: f32[2,64,32], index: 15, kind: input, shape index: {}]
  %s16 = inlined_call_operand.vmem [shape: f32[2,1,32], index: 16, kind: input, shape index: {}]
  %s17 = inlined_call_operand.vmem [shape: f32[1,32], index: 17, kind: input, shape index: {}]
  %s18 = inlined_call_operand.vmem [shape: f32[1,32], index: 18, kind: input, shape index: {}]
  %s19 = inlined_call_operand.hbm [shape: f32[2,8,32], index: 19, kind: output, shape index: {}]
  %s20 = sld [smem:[#allocation0]]
  $region102: #{tpu_custom_call.1} parent=0
    _
  %s22 = ssub.s32 1, %s20
  %s23 = scalar_select 0, %s22, %s20
  $region1: #{tpu_custom_call.1} parent=0
    #allocation2 [shape = 'u8[8192]{0}', space=vmem, size = 0x2000, scoped, tag = 'input window, operand 0, single buffered']
    #allocation3 [shape = 's32[1]{0}', space=sflag, size = 0x4, scoped, tag = 'scoped memory for tpu_custom_call.1']
    #allocation4 [shape = 's32[1]{0}', space=sflag, size = 0x4, scoped, tag = 'scoped memory for tpu_custom_call.1']
    #allocation5 [shape = 'u8[1024]{0}', space=vmem, size = 0x400, scoped, tag = 'input window, operand 1, single buffered']
    #allocation6 [shape = 's32[1]{0}', space=sflag, size = 0x4, scoped, tag = 'scoped memory for tpu_custom_call.1']
    #allocation7 [shape = 'u8[32768]{0}', space=vmem, size = 0x8000, scoped, tag = 'input window, operand 9, single buffered']
    #allocation8 [shape = 'u8[32768]{0}', space=vmem, size = 0x8000, scoped, tag = 'input window, operand 13, single buffered']
    #allocation9 [shape = 's32[1]{0}', space=sflag, size = 0x4, scoped, tag = 'scoped memory for tpu_custom_call.1']
    #allocation10 [shape = 'u8[8192]{0}', space=vmem, size = 0x2000, scoped, tag = 'output window, operand 0, single buffered']
    %24 = vsyncpa [#allocation3], 0
    %25 = vsyncpa [#allocation6], 0
    %26 = vsyncpa [#allocation9], 0
    %27 = vsyncpa [#allocation4], 0
    // Predicated region
    $region2: #{tpu_custom_call.1} parent=1 // pred_check
      _
    $region3: #{tpu_custom_call.1} parent=1 // pred_check_branch
      %29 = sbr.rel (0) target = $region5
    $region4: #{tpu_custom_call.1} parent=1 // pred_region
      %s31 = ssub.s32 256, 256
      %32 = vsyncadd [#allocation3], %s31
      %s33 = sshll.u32 [#allocation2], 4
      %s34 = int_to_ptr.vmem [resolvable:$true] %s33
      %39 = dma.hbm_to_vmem [thread:$0]  %s0, 256, %s34, [#allocation3], 128, 128, 8
    $region5: #{tpu_custom_call.1} parent=1 // pred_fallthru
      _
    // Predicated region
    $region6: #{tpu_custom_call.1} parent=1 // pred_check
      _
    $region7: #{tpu_custom_call.1} parent=1 // pred_check_branch
      %41 = sbr.rel (0) target = $region9
    $region8: #{tpu_custom_call.1} parent=1 // pred_region
      %s43 = ssub.s32 32, 32
      %44 = vsyncadd [#allocation6], %s43
      %s45 = sshll.u32 [#allocation5], 4
      %s46 = int_to_ptr.vmem [resolvable:$true] %s45
      %51 = dma.hbm_to_vmem [thread:$0]  %s1, 32, %s46, [#allocation6], 16, 16, 1
    $region9: #{tpu_custom_call.1} parent=1 // pred_fallthru
      _
    // Predicated region
    $region10: #{tpu_custom_call.1} parent=1 // pred_check
      _
    $region11: #{tpu_custom_call.1} parent=1 // pred_check_branch
      %53 = sbr.rel (0) target = $region13
    $region12: #{tpu_custom_call.1} parent=1 // pred_region
      _
    $region13: #{tpu_custom_call.1} parent=1 // pred_fallthru
      _
    // Predicated region
    $region14: #{tpu_custom_call.1} parent=1 // pred_check
      _
    $region15: #{tpu_custom_call.1} parent=1 // pred_check_branch
      %55 = sbr.rel (0) target = $region17
    $region16: #{tpu_custom_call.1} parent=1 // pred_region
      _
    $region17: #{tpu_custom_call.1} parent=1 // pred_fallthru
      _
    // Predicated region
    $region18: #{tpu_custom_call.1} parent=1 // pred_check
      _
    $region19: #{tpu_custom_call.1} parent=1 // pred_check_branch
      %57 = sbr.rel (0) target = $region21
    $region20: #{tpu_custom_call.1} parent=1 // pred_region
      _
    $region21: #{tpu_custom_call.1} parent=1 // pred_fallthru
      _
    // Predicated region
    $region22: #{tpu_custom_call.1} parent=1 // pred_check
      _
    $region23: #{tpu_custom_call.1} parent=1 // pred_check_branch
      %59 = sbr.rel (0) target = $region25
    $region24: #{tpu_custom_call.1} parent=1 // pred_region
      _
    $region25: #{tpu_custom_call.1} parent=1 // pred_fallthru
      _
    // Predicated region
    $region26: #{tpu_custom_call.1} parent=1 // pred_check
      _
    $region27: #{tpu_custom_call.1} parent=1 // pred_check_branch
      %61 = sbr.rel (0) target = $region29
    $region28: #{tpu_custom_call.1} parent=1 // pred_region
      _
    $region29: #{tpu_custom_call.1} parent=1 // pred_fallthru
      _
    // Predicated region
    $region30: #{tpu_custom_call.1} parent=1 // pred_check
      _
    $region31: #{tpu_custom_call.1} parent=1 // pred_check_branch
      %63 = sbr.rel (0) target = $region33
    $region32: #{tpu_custom_call.1} parent=1 // pred_region
      _
    $region33: #{tpu_custom_call.1} parent=1 // pred_fallthru
      _
    // Predicated region
    $region34: #{tpu_custom_call.1} parent=1 // pred_check
      _
    $region35: #{tpu_custom_call.1} parent=1 // pred_check_branch
      %65 = sbr.rel (0) target = $region37
    $region36: #{tpu_custom_call.1} parent=1 // pred_region
      _
    $region37: #{tpu_custom_call.1} parent=1 // pred_fallthru
      _
    // Predicated region
    $region38: #{tpu_custom_call.1} parent=1 // pred_check
      _
    $region39: #{tpu_custom_call.1} parent=1 // pred_check_branch
      %67 = sbr.rel (0) target = $region41
    $region40: #{tpu_custom_call.1} parent=1 // pred_region
      %s69 = ssub.s32 1024, 1024
      %70 = vsyncadd [#allocation6], %s69
      %s71 = sshll.u32 [#allocation7], 4
      %s72 = int_to_ptr.vmem [resolvable:$true] %s71
      %77 = dma.hbm_to_vmem [thread:$0]  %s9, 1024, %s72, [#allocation6], 128, 128, 8
    $region41: #{tpu_custom_call.1} parent=1 // pred_fallthru
      _
    // Predicated region
    $region42: #{tpu_custom_call.1} parent=1 // pred_check
      _
    $region43: #{tpu_custom_call.1} parent=1 // pred_check_branch
      %79 = sbr.rel (0) target = $region45
    $region44: #{tpu_custom_call.1} parent=1 // pred_region
      _
    $region45: #{tpu_custom_call.1} parent=1 // pred_fallthru
      _
    // Predicated region
    $region46: #{tpu_custom_call.1} parent=1 // pred_check
      _
    $region47: #{tpu_custom_call.1} parent=1 // pred_check_branch
      %81 = sbr.rel (0) target = $region49
    $region48: #{tpu_custom_call.1} parent=1 // pred_region
      _
    $region49: #{tpu_custom_call.1} parent=1 // pred_fallthru
      _
    // Predicated region
    $region50: #{tpu_custom_call.1} parent=1 // pred_check
      _
    $region51: #{tpu_custom_call.1} parent=1 // pred_check_branch
      %83 = sbr.rel (0) target = $region53
    $region52: #{tpu_custom_call.1} parent=1 // pred_region
      _
    $region53: #{tpu_custom_call.1} parent=1 // pred_fallthru
      _
    // Predicated region
    $region54: #{tpu_custom_call.1} parent=1 // pred_check
      _
    $region55: #{tpu_custom_call.1} parent=1 // pred_check_branch
      %85 = sbr.rel (0) target = $region57
    $region56: #{tpu_custom_call.1} parent=1 // pred_region
      %s87 = ssub.s32 1024, 1024
      %88 = vsyncadd [#allocation9], %s87
      %s89 = sshll.u32 [#allocation8], 4
      %s90 = int_to_ptr.vmem [resolvable:$true] %s89
      %95 = dma.hbm_to_vmem [thread:$0]  %s13, 1024, %s90, [#allocation9], 128, 128, 8
    $region57: #{tpu_custom_call.1} parent=1 // pred_fallthru
      _
    // Predicated region
    $region58: #{tpu_custom_call.1} parent=1 // pred_check
      _
    $region59: #{tpu_custom_call.1} parent=1 // pred_check_branch
      %97 = sbr.rel (0) target = $region61
    $region60: #{tpu_custom_call.1} parent=1 // pred_region
      _
    $region61: #{tpu_custom_call.1} parent=1 // pred_fallthru
      _
    // Predicated region
    $region62: #{tpu_custom_call.1} parent=1 // pred_check
      _
    $region63: #{tpu_custom_call.1} parent=1 // pred_check_branch
      %99 = sbr.rel (0) target = $region65
    $region64: #{tpu_custom_call.1} parent=1 // pred_region
      _
    $region65: #{tpu_custom_call.1} parent=1 // pred_fallthru
      _
    // Predicated region
    $region66: #{tpu_custom_call.1} parent=1 // pred_check
      _
    $region67: #{tpu_custom_call.1} parent=1 // pred_check_branch
      %101 = sbr.rel (0) target = $region69
    $region68: #{tpu_custom_call.1} parent=1 // pred_region
      _
    $region69: #{tpu_custom_call.1} parent=1 // pred_fallthru
      _
    // Predicated region
    $region70: #{tpu_custom_call.1} parent=1 // pred_check
      _
    $region71: #{tpu_custom_call.1} parent=1 // pred_check_branch
      %103 = sbr.rel (0) target = $region73
    $region72: #{tpu_custom_call.1} parent=1 // pred_region
      _
    $region73: #{tpu_custom_call.1} parent=1 // pred_fallthru
      _
    // Predicated region
    $region74: #{tpu_custom_call.1} parent=1 // pred_check
      _
    $region75: #{tpu_custom_call.1} parent=1 // pred_check_branch
      %105 = sbr.rel (0) target = $region77
    $region76: #{tpu_custom_call.1} parent=1 // pred_region
      _
    $region77: #{tpu_custom_call.1} parent=1 // pred_fallthru
      _
    // Predicated region
    $region78: #{tpu_custom_call.1} parent=1 // pred_check
      _
    $region79: #{tpu_custom_call.1} parent=1 // pred_check_branch
      %107 = sbr.rel (0) target = $region81
    $region80: #{tpu_custom_call.1} parent=1 // pred_region
      %108 = dma.done [#allocation3], 256
    $region81: #{tpu_custom_call.1} parent=1 // pred_fallthru
      _
    // Predicated region
    $region82: #{tpu_custom_call.1} parent=1 // pred_check
      _
    $region83: #{tpu_custom_call.1} parent=1 // pred_check_branch
      %110 = sbr.rel (0) target = $region85
    $region84: #{tpu_custom_call.1} parent=1 // pred_region
      %111 = dma.done [#allocation6], 32
    $region85: #{tpu_custom_call.1} parent=1 // pred_fallthru
      _
    // Predicated region
    $region86: #{tpu_custom_call.1} parent=1 // pred_check
      _
    $region87: #{tpu_custom_call.1} parent=1 // pred_check_branch
      %113 = sbr.rel (0) target = $region89
    $region88: #{tpu_custom_call.1} parent=1 // pred_region
      %114 = dma.done [#allocation6], 1024
    $region89: #{tpu_custom_call.1} parent=1 // pred_fallthru
      _
    // Predicated region
    $region90: #{tpu_custom_call.1} parent=1 // pred_check
      _
    $region91: #{tpu_custom_call.1} parent=1 // pred_check_branch
      %116 = sbr.rel (0) target = $region93
    $region92: #{tpu_custom_call.1} parent=1 // pred_region
      %117 = dma.done [#allocation9], 1024
    $region93: #{tpu_custom_call.1} parent=1 // pred_fallthru
      _
    %v118 = vld [vmem:[#allocation2] sm:$0xff]
    %v119 = vld [vmem:[#allocation2 + $0x8] sm:$0xff]
    %v120 = vld [vmem:[#allocation5] sm:$0x1]
    %v121 = vld [vmem:[%s2] sm:$0x1]
    %vm122 = vcmask 261120
    %v123 = vsel %vm122, %v118, 0.0
    %124 = vadd.xlane.f32.xlu0 %v123
    %v125 = vpop.xlane.xlu0 %124
    %v126 = vsel %vm122, %v119, 0.0
    %127 = vadd.xlane.f32.xlu0 %v126
    %v128 = vpop.xlane.xlu0 %127
    %v129 = vrcp.pop 32.0
    %v130 = vmul.f32 %v125, %v129
    %v131 = vmul.f32 %v128, %v129
    %v132 = vsub.f32 %v118, %v130
    %v133 = vsub.f32 %v119, %v131
    %v134 = vmul.f32 %v132, %v132
    %v135 = vmul.f32 %v133, %v133
    %v136 = vsel %vm122, %v134, 0.0
    %137 = vadd.xlane.f32.xlu0 %v136
    %v138 = vpop.xlane.xlu0 %137
    %v139 = vsel %vm122, %v135, 0.0
    %140 = vadd.xlane.f32.xlu0 %v139
    %v141 = vpop.xlane.xlu0 %140
    %v142 = vmul.f32 %v138, %v129
    %v143 = vmul.f32 %v141, %v129
    %v144 = vadd.f32 %v142, 1e-06
    %v145 = vadd.f32 %v143, 1e-06
    %v146 = vrsqrt.pop %v144
    %v147 = vrsqrt.pop %v145
    %v148 = vmul.f32 %v132, %v146
    %v149 = vmul.f32 %v133, %v147
    %v151 = vlaneseq
    %v152 = vshrl.u32 %v151, 7
    %v153 = vsub.s32 0, %v152
    %v154 = vrot.slane %v120, %v153
    %v156 = vmul.f32 %v148, %v154
    %v157 = vmul.f32 %v149, %v154
    %v159 = vlaneseq
    %v160 = vshrl.u32 %v159, 7
    %v161 = vsub.s32 0, %v160
    %v162 = vrot.slane %v121, %v161
    %v164 = vadd.f32 %v156, %v162
    %v165 = vadd.f32 %v157, %v162
    %v166 = vld [vmem:[%s3] sm:$0xff]
    %v167 = vld [vmem:[%s3 + $0x8] sm:$0xff]
    %v168 = vld [vmem:[%s3 + $0x10] sm:$0xff]
    %v169 = vld [vmem:[%s3 + $0x18] sm:$0xff]
    %v170 = vld [vmem:[%s4] sm:$0x1]
    %v172 = vlaneseq
    %v173 = vshrl.u32 %v172, 7
    %v174 = vsub.s32 0, %v173
    %v175 = vrot.slane %v170, %v174
    %v178 = vsel %vm122, %v164, 0
    %v181 = vsel %vm122, %v165, 0
    %183 = vmatprep.subr.mxu0 0.0
    %184 = vmatpush1.msra.mxu0 0.0
    %185 = vmatprep.subr.mxu0 0.0
    %186 = vmatpush1.msra.mxu0 0.0
    %187 = vmatprep.subr.mxu0 0.0
    %188 = vmatpush1.msra.mxu0 0.0
    %189 = vmatprep.subr.mxu0 0.0
    %190 = vmatpush1.msra.mxu0 0.0
    %191 = vmatprep.subr.mxu0 0.0
    %192 = vmatpush1.msra.mxu0 0.0
    %193 = vmatprep.subr.mxu0 0.0
    %194 = vmatpush1.msra.mxu0 0.0
    %195 = vmatprep.subr.mxu0 0.0
    %196 = vmatpush1.msra.mxu0 0.0
    %197 = vmatprep.subr.mxu0 0.0
    %198 = vmatpush1.msra.mxu0 0.0
    %199 = vmatprep.subr.mxu0 0.0
    %200 = vmatpush1.msra.mxu0 0.0
    %201 = vmatprep.subr.mxu0 0.0
    %202 = vmatpush1.msra.mxu0 0.0
    %203 = vmatprep.subr.mxu0 0.0
    %204 = vmatpush1.msra.mxu0 0.0
    %205 = vmatprep.subr.mxu0 0.0
    %206 = vmatpush1.msra.mxu0 0.0
    %207 = vmatprep.subr.mxu0 0.0
    %208 = vmatpush1.msra.mxu0 %v169
    %209 = vmatprep.subr.mxu0 0.0
    %210 = vmatpush1.msra.mxu0 %v168
    %211 = vmatprep.subr.mxu0 0.0
    %212 = vmatpush1.msra.mxu0 %v167
    %213 = vmatprep.subr.mxu0 0.0
    %214 = vmatpush1.msra.mxu0 %v166
    %215 = vmatprep.subr.mxu0 0.0
    %216 = vmatpush2.msra.mxu0 0.0
    %217 = vmatprep.subr.mxu0 0.0
    %218 = vmatpush2.msra.mxu0 0.0
    %219 = vmatprep.subr.mxu0 0.0
    %220 = vmatpush2.msra.mxu0 0.0
    %221 = vmatprep.subr.mxu0 0.0
    %222 = vmatpush2.msra.mxu0 0.0
    %223 = vmatprep.subr.mxu0 0.0
    %224 = vmatpush2.msra.mxu0 0.0
    %225 = vmatprep.subr.mxu0 0.0
    %226 = vmatpush2.msra.mxu0 0.0
    %227 = vmatprep.subr.mxu0 0.0
    %228 = vmatpush2.msra.mxu0 0.0
    %229 = vmatprep.subr.mxu0 0.0
    %230 = vmatpush2.msra.mxu0 0.0
    %231 = vmatprep.subr.mxu0 0.0
    %232 = vmatpush2.msra.mxu0 0.0
    %233 = vmatprep.subr.mxu0 0.0
    %234 = vmatpush2.msra.mxu0 0.0
    %235 = vmatprep.subr.mxu0 0.0
    %236 = vmatpush2.msra.mxu0 0.0
    %237 = vmatprep.subr.mxu0 0.0
    %238 = vmatpush2.msra.mxu0 0.0
    %239 = vmatprep.subr.mxu0 0.0
    %240 = vmatpush2.msra.mxu0 0.0
    %241 = vmatprep.subr.mxu0 0.0
    %242 = vmatpush2.msra.mxu0 0.0
    %243 = vmatprep.subr.mxu0 0.0
    %244 = vmatpush2.msra.mxu0 0.0
    %245 = vmatprep.subr.mxu0 0.0
    %246 = vmatpush2.msra.mxu0 0.0
    %247 = vmatprep.mubr.f32.mxu0 0.0
    %248 = vmatmul.mubr.f32.gmra.mxu0 %v178
    %v249 = vpop.f32.mrf.mxu0
    %v250 = vadd.f32 %v175, %v249
    %v251 = vpop.f32.mrf.mxu0
    %252 = vmatprep.mubr.f32.mxu0 0.0
    %253 = vmatmul.mubr.f32.gmra.mxu0 %v181
    %v254 = vpop.f32.mrf.mxu0
    %v255 = vadd.f32 %v175, %v254
    %v256 = vpop.f32.mrf.mxu0
    %257 = vdwg.mxu0
    %v258 = vld [vmem:[%s5] sm:$0xff]
    %v259 = vld [vmem:[%s5 + $0x8] sm:$0xff]
    %v260 = vld [vmem:[%s5 + $0x10] sm:$0xff]
    %v261 = vld [vmem:[%s5 + $0x18] sm:$0xff]
    %v262 = vld [vmem:[%s6] sm:$0x1]
    %v264 = vlaneseq
    %v265 = vshrl.u32 %v264, 7
    %v266 = vsub.s32 0, %v265
    %v267 = vrot.slane %v262, %v266
    %269 = vmatprep.subr.mxu0 0.0
    %270 = vmatpush1.msra.mxu0 0.0
    %271 = vmatprep.subr.mxu0 0.0
    %272 = vmatpush1.msra.mxu0 0.0
    %273 = vmatprep.subr.mxu0 0.0
    %274 = vmatpush1.msra.mxu0 0.0
    %275 = vmatprep.subr.mxu0 0.0
    %276 = vmatpush1.msra.mxu0 0.0
    %277 = vmatprep.subr.mxu0 0.0
    %278 = vmatpush1.msra.mxu0 0.0
    %279 = vmatprep.subr.mxu0 0.0
    %280 = vmatpush1.msra.mxu0 0.0
    %281 = vmatprep.subr.mxu0 0.0
    %282 = vmatpush1.msra.mxu0 0.0
    %283 = vmatprep.subr.mxu0 0.0
    %284 = vmatpush1.msra.mxu0 0.0
    %285 = vmatprep.subr.mxu0 0.0
    %286 = vmatpush1.msra.mxu0 0.0
    %287 = vmatprep.subr.mxu0 0.0
    %288 = vmatpush1.msra.mxu0 0.0
    %289 = vmatprep.subr.mxu0 0.0
    %290 = vmatpush1.msra.mxu0 0.0
    %291 = vmatprep.subr.mxu0 0.0
    %292 = vmatpush1.msra.mxu0 0.0
    %293 = vmatprep.subr.mxu0 0.0
    %294 = vmatpush1.msra.mxu0 %v261
    %295 = vmatprep.subr.mxu0 0.0
    %296 = vmatpush1.msra.mxu0 %v260
    %297 = vmatprep.subr.mxu0 0.0
    %298 = vmatpush1.msra.mxu0 %v259
    %299 = vmatprep.subr.mxu0 0.0
    %300 = vmatpush1.msra.mxu0 %v258
    %301 = vmatprep.subr.mxu0 0.0
    %302 = vmatpush2.msra.mxu0 0.0
    %303 = vmatprep.subr.mxu0 0.0
    %304 = vmatpush2.msra.mxu0 0.0
    %305 = vmatprep.subr.mxu0 0.0
    %306 = vmatpush2.msra.mxu0 0.0
    %307 = vmatprep.subr.mxu0 0.0
    %308 = vmatpush2.msra.mxu0 0.0
    %309 = vmatprep.subr.mxu0 0.0
    %310 = vmatpush2.msra.mxu0 0.0
    %311 = vmatprep.subr.mxu0 0.0
    %312 = vmatpush2.msra.mxu0 0.0
    %313 = vmatprep.subr.mxu0 0.0
    %314 = vmatpush2.msra.mxu0 0.0
    %315 = vmatprep.subr.mxu0 0.0
    %316 = vmatpush2.msra.mxu0 0.0
    %317 = vmatprep.subr.mxu0 0.0
    %318 = vmatpush2.msra.mxu0 0.0
    %319 = vmatprep.subr.mxu0 0.0
    %320 = vmatpush2.msra.mxu0 0.0
    %321 = vmatprep.subr.mxu0 0.0
    %322 = vmatpush2.msra.mxu0 0.0
    %323 = vmatprep.subr.mxu0 0.0
    %324 = vmatpush2.msra.mxu0 0.0
    %325 = vmatprep.subr.mxu0 0.0
    %326 = vmatpush2.msra.mxu0 0.0
    %327 = vmatprep.subr.mxu0 0.0
    %328 = vmatpush2.msra.mxu0 0.0
    %329 = vmatprep.subr.mxu0 0.0
    %330 = vmatpush2.msra.mxu0 0.0
    %331 = vmatprep.subr.mxu0 0.0
    %332 = vmatpush2.msra.mxu0 0.0
    %333 = vmatprep.mubr.f32.mxu0 0.0
    %334 = vmatmul.mubr.f32.gmra.mxu0 %v178
    %v335 = vpop.f32.mrf.mxu0
    %v336 = vadd.f32 %v267, %v335
    %v337 = vpop.f32.mrf.mxu0
    %338 = vmatprep.mubr.f32.mxu0 0.0
    %339 = vmatmul.mubr.f32.gmra.mxu0 %v181
    %v340 = vpop.f32.mrf.mxu0
    %v341 = vadd.f32 %v267, %v340
    %v342 = vpop.f32.mrf.mxu0
    %343 = vdwg.mxu0
    %v344 = vld [vmem:[%s7] sm:$0xff]
    %v345 = vld [vmem:[%s7 + $0x8] sm:$0xff]
    %v346 = vld [vmem:[%s7 + $0x10] sm:$0xff]
    %v347 = vld [vmem:[%s7 + $0x18] sm:$0xff]
    %v348 = vld [vmem:[%s8] sm:$0x1]
    %v350 = vlaneseq
    %v351 = vshrl.u32 %v350, 7
    %v352 = vsub.s32 0, %v351
    %v353 = vrot.slane %v348, %v352
    %355 = vmatprep.subr.mxu0 0.0
    %356 = vmatpush1.msra.mxu0 0.0
    %357 = vmatprep.subr.mxu0 0.0
    %358 = vmatpush1.msra.mxu0 0.0
    %359 = vmatprep.subr.mxu0 0.0
    %360 = vmatpush1.msra.mxu0 0.0
    %361 = vmatprep.subr.mxu0 0.0
    %362 = vmatpush1.msra.mxu0 0.0
    %363 = vmatprep.subr.mxu0 0.0
    %364 = vmatpush1.msra.mxu0 0.0
    %365 = vmatprep.subr.mxu0 0.0
    %366 = vmatpush1.msra.mxu0 0.0
    %367 = vmatprep.subr.mxu0 0.0
    %368 = vmatpush1.msra.mxu0 0.0
    %369 = vmatprep.subr.mxu0 0.0
    %370 = vmatpush1.msra.mxu0 0.0
    %371 = vmatprep.subr.mxu0 0.0
    %372 = vmatpush1.msra.mxu0 0.0
    %373 = vmatprep.subr.mxu0 0.0
    %374 = vmatpush1.msra.mxu0 0.0
    %375 = vmatprep.subr.mxu0 0.0
    %376 = vmatpush1.msra.mxu0 0.0
    %377 = vmatprep.subr.mxu0 0.0
    %378 = vmatpush1.msra.mxu0 0.0
    %379 = vmatprep.subr.mxu0 0.0
    %380 = vmatpush1.msra.mxu0 %v347
    %381 = vmatprep.subr.mxu0 0.0
    %382 = vmatpush1.msra.mxu0 %v346
    %383 = vmatprep.subr.mxu0 0.0
    %384 = vmatpush1.msra.mxu0 %v345
    %385 = vmatprep.subr.mxu0 0.0
    %386 = vmatpush1.msra.mxu0 %v344
    %387 = vmatprep.subr.mxu0 0.0
    %388 = vmatpush2.msra.mxu0 0.0
    %389 = vmatprep.subr.mxu0 0.0
    %390 = vmatpush2.msra.mxu0 0.0
    %391 = vmatprep.subr.mxu0 0.0
    %392 = vmatpush2.msra.mxu0 0.0
    %393 = vmatprep.subr.mxu0 0.0
    %394 = vmatpush2.msra.mxu0 0.0
    %395 = vmatprep.subr.mxu0 0.0
    %396 = vmatpush2.msra.mxu0 0.0
    %397 = vmatprep.subr.mxu0 0.0
    %398 = vmatpush2.msra.mxu0 0.0
    %399 = vmatprep.subr.mxu0 0.0
    %400 = vmatpush2.msra.mxu0 0.0
    %401 = vmatprep.subr.mxu0 0.0
    %402 = vmatpush2.msra.mxu0 0.0
    %403 = vmatprep.subr.mxu0 0.0
    %404 = vmatpush2.msra.mxu0 0.0
    %405 = vmatprep.subr.mxu0 0.0
    %406 = vmatpush2.msra.mxu0 0.0
    %407 = vmatprep.subr.mxu0 0.0
    %408 = vmatpush2.msra.mxu0 0.0
    %409 = vmatprep.subr.mxu0 0.0
    %410 = vmatpush2.msra.mxu0 0.0
    %411 = vmatprep.subr.mxu0 0.0
    %412 = vmatpush2.msra.mxu0 0.0
    %413 = vmatprep.subr.mxu0 0.0
    %414 = vmatpush2.msra.mxu0 0.0
    %415 = vmatprep.subr.mxu0 0.0
    %416 = vmatpush2.msra.mxu0 0.0
    %417 = vmatprep.subr.mxu0 0.0
    %418 = vmatpush2.msra.mxu0 0.0
    %419 = vmatprep.mubr.f32.mxu0 0.0
    %420 = vmatmul.mubr.f32.gmra.mxu0 %v178
    %v421 = vpop.f32.mrf.mxu0
    %v422 = vadd.f32 %v353, %v421
    %v423 = vpop.f32.mrf.mxu0
    %424 = vmatprep.mubr.f32.mxu0 0.0
    %425 = vmatmul.mubr.f32.gmra.mxu0 %v181
    %v426 = vpop.f32.mrf.mxu0
    %v427 = vadd.f32 %v353, %v426
    %v428 = vpop.f32.mrf.mxu0
    %429 = vdwg.mxu0
    %v430 = vmul.f32 %v250, 0.35355338
    %v431 = vmul.f32 %v255, 0.35355338
    %vm432 = vcmask 64512
    %v434 = vsel %vm432, %v430, 0
    %v437 = vsel %vm432, %v336, 0
    %439 = vmatprep.subr.mxu0 0.0
    %440 = vmatpush1.xpose.msra.mxu0 0.0
    %441 = vmatprep.subr.mxu0 0.0
    %442 = vmatpush1.xpose.msra.mxu0 0.0
    %443 = vmatprep.subr.mxu0 0.0
    %444 = vmatpush1.xpose.msra.mxu0 0.0
    %445 = vmatprep.subr.mxu0 0.0
    %446 = vmatpush1.xpose.msra.mxu0 0.0
    %447 = vmatprep.subr.mxu0 0.0
    %448 = vmatpush1.xpose.msra.mxu0 0.0
    %449 = vmatprep.subr.mxu0 0.0
    %450 = vmatpush1.xpose.msra.mxu0 0.0
    %451 = vmatprep.subr.mxu0 0.0
    %452 = vmatpush1.xpose.msra.mxu0 0.0
    %453 = vmatprep.subr.mxu0 0.0
    %454 = vmatpush1.xpose.msra.mxu0 0.0
    %455 = vmatprep.subr.mxu0 0.0
    %456 = vmatpush1.xpose.msra.mxu0 0.0
    %457 = vmatprep.subr.mxu0 0.0
    %458 = vmatpush1.xpose.msra.mxu0 0.0
    %459 = vmatprep.subr.mxu0 0.0
    %460 = vmatpush1.xpose.msra.mxu0 0.0
    %461 = vmatprep.subr.mxu0 0.0
    %462 = vmatpush1.xpose.msra.mxu0 0.0
    %463 = vmatprep.subr.mxu0 0.0
    %464 = vmatpush1.xpose.msra.mxu0 0.0
    %465 = vmatprep.subr.mxu0 0.0
    %466 = vmatpush1.xpose.msra.mxu0 0.0
    %467 = vmatprep.subr.mxu0 0.0
    %468 = vmatpush1.xpose.msra.mxu0 0.0
    %469 = vmatprep.subr.mxu0 0.0
    %470 = vmatpush1.xpose.msra.mxu0 %v437
    %471 = vmatprep.subr.mxu0 0.0
    %472 = vmatpush2.xpose.msra.mxu0 0.0
    %473 = vmatprep.subr.mxu0 0.0
    %474 = vmatpush2.xpose.msra.mxu0 0.0
    %475 = vmatprep.subr.mxu0 0.0
    %476 = vmatpush2.xpose.msra.mxu0 0.0
    %477 = vmatprep.subr.mxu0 0.0
    %478 = vmatpush2.xpose.msra.mxu0 0.0
    %479 = vmatprep.subr.mxu0 0.0
    %480 = vmatpush2.xpose.msra.mxu0 0.0
    %481 = vmatprep.subr.mxu0 0.0
    %482 = vmatpush2.xpose.msra.mxu0 0.0
    %483 = vmatprep.subr.mxu0 0.0
    %484 = vmatpush2.xpose.msra.mxu0 0.0
    %485 = vmatprep.subr.mxu0 0.0
    %486 = vmatpush2.xpose.msra.mxu0 0.0
    %487 = vmatprep.subr.mxu0 0.0
    %488 = vmatpush2.xpose.msra.mxu0 0.0
    %489 = vmatprep.subr.mxu0 0.0
    %490 = vmatpush2.xpose.msra.mxu0 0.0
    %491 = vmatprep.subr.mxu0 0.0
    %492 = vmatpush2.xpose.msra.mxu0 0.0
    %493 = vmatprep.subr.mxu0 0.0
    %494 = vmatpush2.xpose.msra.mxu0 0.0
    %495 = vmatprep.subr.mxu0 0.0
    %496 = vmatpush2.xpose.msra.mxu0 0.0
    %497 = vmatprep.subr.mxu0 0.0
    %498 = vmatpush2.xpose.msra.mxu0 0.0
    %499 = vmatprep.subr.mxu0 0.0
    %500 = vmatpush2.xpose.msra.mxu0 0.0
    %501 = vmatprep.subr.mxu0 0.0
    %502 = vmatpush2.xpose.msra.mxu0 0.0
    %503 = vmatprep.mubr.f32.mxu0 0.0
    %504 = vmatmul.mubr.f32.gmra.mxu0 %v434
    %v505 = vpop.f32.mrf.mxu0
    %v506 = vadd.f32 0.0, %v505
    %v507 = vpop.f32.mrf.mxu0
    %508 = vdwg.mxu0
    %v510 = vsel %vm432, %v431, 0
    %v513 = vsel %vm432, %v341, 0
    %515 = vmatprep.subr.mxu0 0.0
    %516 = vmatpush1.xpose.msra.mxu0 0.0
    %517 = vmatprep.subr.mxu0 0.0
    %518 = vmatpush1.xpose.msra.mxu0 0.0
    %519 = vmatprep.subr.mxu0 0.0
    %520 = vmatpush1.xpose.msra.mxu0 0.0
    %521 = vmatprep.subr.mxu0 0.0
    %522 = vmatpush1.xpose.msra.mxu0 0.0
    %523 = vmatprep.subr.mxu0 0.0
    %524 = vmatpush1.xpose.msra.mxu0 0.0
    %525 = vmatprep.subr.mxu0 0.0
    %526 = vmatpush1.xpose.msra.mxu0 0.0
    %527 = vmatprep.subr.mxu0 0.0
    %528 = vmatpush1.xpose.msra.mxu0 0.0
    %529 = vmatprep.subr.mxu0 0.0
    %530 = vmatpush1.xpose.msra.mxu0 0.0
    %531 = vmatprep.subr.mxu0 0.0
    %532 = vmatpush1.xpose.msra.mxu0 0.0
    %533 = vmatprep.subr.mxu0 0.0
    %534 = vmatpush1.xpose.msra.mxu0 0.0
    %535 = vmatprep.subr.mxu0 0.0
    %536 = vmatpush1.xpose.msra.mxu0 0.0
    %537 = vmatprep.subr.mxu0 0.0
    %538 = vmatpush1.xpose.msra.mxu0 0.0
    %539 = vmatprep.subr.mxu0 0.0
    %540 = vmatpush1.xpose.msra.mxu0 0.0
    %541 = vmatprep.subr.mxu0 0.0
    %542 = vmatpush1.xpose.msra.mxu0 0.0
    %543 = vmatprep.subr.mxu0 0.0
    %544 = vmatpush1.xpose.msra.mxu0 0.0
    %545 = vmatprep.subr.mxu0 0.0
    %546 = vmatpush1.xpose.msra.mxu0 %v513
    %547 = vmatprep.subr.mxu0 0.0
    %548 = vmatpush2.xpose.msra.mxu0 0.0
    %549 = vmatprep.subr.mxu0 0.0
    %550 = vmatpush2.xpose.msra.mxu0 0.0
    %551 = vmatprep.subr.mxu0 0.0
    %552 = vmatpush2.xpose.msra.mxu0 0.0
    %553 = vmatprep.subr.mxu0 0.0
    %554 = vmatpush2.xpose.msra.mxu0 0.0
    %555 = vmatprep.subr.mxu0 0.0
    %556 = vmatpush2.xpose.msra.mxu0 0.0
    %557 = vmatprep.subr.mxu0 0.0
    %558 = vmatpush2.xpose.msra.mxu0 0.0
    %559 = vmatprep.subr.mxu0 0.0
    %560 = vmatpush2.xpose.msra.mxu0 0.0
    %561 = vmatprep.subr.mxu0 0.0
    %562 = vmatpush2.xpose.msra.mxu0 0.0
    %563 = vmatprep.subr.mxu0 0.0
    %564 = vmatpush2.xpose.msra.mxu0 0.0
    %565 = vmatprep.subr.mxu0 0.0
    %566 = vmatpush2.xpose.msra.mxu0 0.0
    %567 = vmatprep.subr.mxu0 0.0
    %568 = vmatpush2.xpose.msra.mxu0 0.0
    %569 = vmatprep.subr.mxu0 0.0
    %570 = vmatpush2.xpose.msra.mxu0 0.0
    %571 = vmatprep.subr.mxu0 0.0
    %572 = vmatpush2.xpose.msra.mxu0 0.0
    %573 = vmatprep.subr.mxu0 0.0
    %574 = vmatpush2.xpose.msra.mxu0 0.0
    %575 = vmatprep.subr.mxu0 0.0
    %576 = vmatpush2.xpose.msra.mxu0 0.0
    %577 = vmatprep.subr.mxu0 0.0
    %578 = vmatpush2.xpose.msra.mxu0 0.0
    %579 = vmatprep.mubr.f32.mxu0 0.0
    %580 = vmatmul.mubr.f32.gmra.mxu0 %v510
    %v581 = vpop.f32.mrf.mxu0
    %v582 = vadd.f32 0.0, %v581
    %v583 = vpop.f32.mrf.mxu0
    %584 = vdwg.mxu0
    %v585 = vsel %vm432, %v506, -inf
    %586 = vmax.xlane.f32.xlu0 %v585
    %v587 = vpop.xlane.xlu0 %586
    %v588 = vsel %vm432, %v582, -inf
    %589 = vmax.xlane.f32.xlu0 %v588
    %v590 = vpop.xlane.xlu0 %589
    %v591 = vsub.f32 %v506, %v587
    %v592 = vsub.f32 %v582, %v590
    %v593 = vmul.f32 %v591, 1.442695
    %v594 = vpow.pop %v593
    %v595 = vmul.f32 %v592, 1.442695
    %v596 = vpow.pop %v595
    %v597 = vsel %vm432, %v594, 0.0
    %598 = vadd.xlane.f32.xlu0 %v597
    %v599 = vpop.xlane.xlu0 %598
    %v600 = vsel %vm432, %v596, 0.0
    %601 = vadd.xlane.f32.xlu0 %v600
    %v602 = vpop.xlane.xlu0 %601
    %v603 = vrcp.pop %v599
    %v604 = vrcp.pop %v602
    %v605 = vmul.f32 %v594, %v603
    %v606 = vmul.f32 %v596, %v604
    %v608 = vsel %vm432, %v605, 0
    %610 = vmatprep.subr.mxu0 0.0
    %611 = vmatpush1.msra.mxu0 0.0
    %612 = vmatprep.subr.mxu0 0.0
    %613 = vmatpush1.msra.mxu0 0.0
    %614 = vmatprep.subr.mxu0 0.0
    %615 = vmatpush1.msra.mxu0 0.0
    %616 = vmatprep.subr.mxu0 0.0
    %617 = vmatpush1.msra.mxu0 0.0
    %618 = vmatprep.subr.mxu0 0.0
    %619 = vmatpush1.msra.mxu0 0.0
    %620 = vmatprep.subr.mxu0 0.0
    %621 = vmatpush1.msra.mxu0 0.0
    %622 = vmatprep.subr.mxu0 0.0
    %623 = vmatpush1.msra.mxu0 0.0
    %624 = vmatprep.subr.mxu0 0.0
    %625 = vmatpush1.msra.mxu0 0.0
    %626 = vmatprep.subr.mxu0 0.0
    %627 = vmatpush1.msra.mxu0 0.0
    %628 = vmatprep.subr.mxu0 0.0
    %629 = vmatpush1.msra.mxu0 0.0
    %630 = vmatprep.subr.mxu0 0.0
    %631 = vmatpush1.msra.mxu0 0.0
    %632 = vmatprep.subr.mxu0 0.0
    %633 = vmatpush1.msra.mxu0 0.0
    %634 = vmatprep.subr.mxu0 0.0
    %635 = vmatpush1.msra.mxu0 0.0
    %636 = vmatprep.subr.mxu0 0.0
    %637 = vmatpush1.msra.mxu0 0.0
    %638 = vmatprep.subr.mxu0 0.0
    %639 = vmatpush1.msra.mxu0 0.0
    %640 = vmatprep.subr.mxu0 0.0
    %641 = vmatpush1.msra.mxu0 %v422
    %642 = vmatprep.subr.mxu0 0.0
    %643 = vmatpush2.msra.mxu0 0.0
    %644 = vmatprep.subr.mxu0 0.0
    %645 = vmatpush2.msra.mxu0 0.0
    %646 = vmatprep.subr.mxu0 0.0
    %647 = vmatpush2.msra.mxu0 0.0
    %648 = vmatprep.subr.mxu0 0.0
    %649 = vmatpush2.msra.mxu0 0.0
    %650 = vmatprep.subr.mxu0 0.0
    %651 = vmatpush2.msra.mxu0 0.0
    %652 = vmatprep.subr.mxu0 0.0
    %653 = vmatpush2.msra.mxu0 0.0
    %654 = vmatprep.subr.mxu0 0.0
    %655 = vmatpush2.msra.mxu0 0.0
    %656 = vmatprep.subr.mxu0 0.0
    %657 = vmatpush2.msra.mxu0 0.0
    %658 = vmatprep.subr.mxu0 0.0
    %659 = vmatpush2.msra.mxu0 0.0
    %660 = vmatprep.subr.mxu0 0.0
    %661 = vmatpush2.msra.mxu0 0.0
    %662 = vmatprep.subr.mxu0 0.0
    %663 = vmatpush2.msra.mxu0 0.0
    %664 = vmatprep.subr.mxu0 0.0
    %665 = vmatpush2.msra.mxu0 0.0
    %666 = vmatprep.subr.mxu0 0.0
    %667 = vmatpush2.msra.mxu0 0.0
    %668 = vmatprep.subr.mxu0 0.0
    %669 = vmatpush2.msra.mxu0 0.0
    %670 = vmatprep.subr.mxu0 0.0
    %671 = vmatpush2.msra.mxu0 0.0
    %672 = vmatprep.subr.mxu0 0.0
    %673 = vmatpush2.msra.mxu0 0.0
    %674 = vmatprep.mubr.f32.mxu0 0.0
    %675 = vmatmul.mubr.f32.gmra.mxu0 %v608
    %v676 = vpop.f32.mrf.mxu0
    %v677 = vadd.f32 0.0, %v676
    %v678 = vpop.f32.mrf.mxu0
    %679 = vdwg.mxu0
    %v681 = vsel %vm432, %v606, 0
    %683 = vmatprep.subr.mxu0 0.0
    %684 = vmatpush1.msra.mxu0 0.0
    %685 = vmatprep.subr.mxu0 0.0
    %686 = vmatpush1.msra.mxu0 0.0
    %687 = vmatprep.subr.mxu0 0.0
    %688 = vmatpush1.msra.mxu0 0.0
    %689 = vmatprep.subr.mxu0 0.0
    %690 = vmatpush1.msra.mxu0 0.0
    %691 = vmatprep.subr.mxu0 0.0
    %692 = vmatpush1.msra.mxu0 0.0
    %693 = vmatprep.subr.mxu0 0.0
    %694 = vmatpush1.msra.mxu0 0.0
    %695 = vmatprep.subr.mxu0 0.0
    %696 = vmatpush1.msra.mxu0 0.0
    %697 = vmatprep.subr.mxu0 0.0
    %698 = vmatpush1.msra.mxu0 0.0
    %699 = vmatprep.subr.mxu0 0.0
    %700 = vmatpush1.msra.mxu0 0.0
    %701 = vmatprep.subr.mxu0 0.0
    %702 = vmatpush1.msra.mxu0 0.0
    %703 = vmatprep.subr.mxu0 0.0
    %704 = vmatpush1.msra.mxu0 0.0
    %705 = vmatprep.subr.mxu0 0.0
    %706 = vmatpush1.msra.mxu0 0.0
    %707 = vmatprep.subr.mxu0 0.0
    %708 = vmatpush1.msra.mxu0 0.0
    %709 = vmatprep.subr.mxu0 0.0
    %710 = vmatpush1.msra.mxu0 0.0
    %711 = vmatprep.subr.mxu0 0.0
    %712 = vmatpush1.msra.mxu0 0.0
    %713 = vmatprep.subr.mxu0 0.0
    %714 = vmatpush1.msra.mxu0 %v427
    %715 = vmatprep.subr.mxu0 0.0
    %716 = vmatpush2.msra.mxu0 0.0
    %717 = vmatprep.subr.mxu0 0.0
    %718 = vmatpush2.msra.mxu0 0.0
    %719 = vmatprep.subr.mxu0 0.0
    %720 = vmatpush2.msra.mxu0 0.0
    %721 = vmatprep.subr.mxu0 0.0
    %722 = vmatpush2.msra.mxu0 0.0
    %723 = vmatprep.subr.mxu0 0.0
    %724 = vmatpush2.msra.mxu0 0.0
    %725 = vmatprep.subr.mxu0 0.0
    %726 = vmatpush2.msra.mxu0 0.0
    %727 = vmatprep.subr.mxu0 0.0
    %728 = vmatpush2.msra.mxu0 0.0
    %729 = vmatprep.subr.mxu0 0.0
    %730 = vmatpush2.msra.mxu0 0.0
    %731 = vmatprep.subr.mxu0 0.0
    %732 = vmatpush2.msra.mxu0 0.0
    %733 = vmatprep.subr.mxu0 0.0
    %734 = vmatpush2.msra.mxu0 0.0
    %735 = vmatprep.subr.mxu0 0.0
    %736 = vmatpush2.msra.mxu0 0.0
    %737 = vmatprep.subr.mxu0 0.0
    %738 = vmatpush2.msra.mxu0 0.0
    %739 = vmatprep.subr.mxu0 0.0
    %740 = vmatpush2.msra.mxu0 0.0
    %741 = vmatprep.subr.mxu0 0.0
    %742 = vmatpush2.msra.mxu0 0.0
    %743 = vmatprep.subr.mxu0 0.0
    %744 = vmatpush2.msra.mxu0 0.0
    %745 = vmatprep.subr.mxu0 0.0
    %746 = vmatpush2.msra.mxu0 0.0
    %747 = vmatprep.mubr.f32.mxu0 0.0
    %748 = vmatmul.mubr.f32.gmra.mxu0 %v681
    %v749 = vpop.f32.mrf.mxu0
    %v750 = vadd.f32 0.0, %v749
    %v751 = vpop.f32.mrf.mxu0
    %752 = vdwg.mxu0
    %753 = vrot.lane.b32.xlu0 %v430, 120
    %v754 = vpop.permute.xlu0 %753
    %755 = vrot.lane.b32.xlu0 %v336, 120
    %v756 = vpop.permute.xlu0 %755
    %v757 = vsel %vm432, %v754, 0
    %v759 = vsel %vm432, %v756, 0
    %761 = vmatprep.subr.mxu0 0.0
    %762 = vmatpush1.xpose.msra.mxu0 0.0
    %763 = vmatprep.subr.mxu0 0.0
    %764 = vmatpush1.xpose.msra.mxu0 0.0
    %765 = vmatprep.subr.mxu0 0.0
    %766 = vmatpush1.xpose.msra.mxu0 0.0
    %767 = vmatprep.subr.mxu0 0.0
    %768 = vmatpush1.xpose.msra.mxu0 0.0
    %769 = vmatprep.subr.mxu0 0.0
    %770 = vmatpush1.xpose.msra.mxu0 0.0
    %771 = vmatprep.subr.mxu0 0.0
    %772 = vmatpush1.xpose.msra.mxu0 0.0
    %773 = vmatprep.subr.mxu0 0.0
    %774 = vmatpush1.xpose.msra.mxu0 0.0
    %775 = vmatprep.subr.mxu0 0.0
    %776 = vmatpush1.xpose.msra.mxu0 0.0
    %777 = vmatprep.subr.mxu0 0.0
    %778 = vmatpush1.xpose.msra.mxu0 0.0
    %779 = vmatprep.subr.mxu0 0.0
    %780 = vmatpush1.xpose.msra.mxu0 0.0
    %781 = vmatprep.subr.mxu0 0.0
    %782 = vmatpush1.xpose.msra.mxu0 0.0
    %783 = vmatprep.subr.mxu0 0.0
    %784 = vmatpush1.xpose.msra.mxu0 0.0
    %785 = vmatprep.subr.mxu0 0.0
    %786 = vmatpush1.xpose.msra.mxu0 0.0
    %787 = vmatprep.subr.mxu0 0.0
    %788 = vmatpush1.xpose.msra.mxu0 0.0
    %789 = vmatprep.subr.mxu0 0.0
    %790 = vmatpush1.xpose.msra.mxu0 0.0
    %791 = vmatprep.subr.mxu0 0.0
    %792 = vmatpush1.xpose.msra.mxu0 %v759
    %793 = vmatprep.subr.mxu0 0.0
    %794 = vmatpush2.xpose.msra.mxu0 0.0
    %795 = vmatprep.subr.mxu0 0.0
    %796 = vmatpush2.xpose.msra.mxu0 0.0
    %797 = vmatprep.subr.mxu0 0.0
    %798 = vmatpush2.xpose.msra.mxu0 0.0
    %799 = vmatprep.subr.mxu0 0.0
    %800 = vmatpush2.xpose.msra.mxu0 0.0
    %801 = vmatprep.subr.mxu0 0.0
    %802 = vmatpush2.xpose.msra.mxu0 0.0
    %803 = vmatprep.subr.mxu0 0.0
    %804 = vmatpush2.xpose.msra.mxu0 0.0
    %805 = vmatprep.subr.mxu0 0.0
    %806 = vmatpush2.xpose.msra.mxu0 0.0
    %807 = vmatprep.subr.mxu0 0.0
    %808 = vmatpush2.xpose.msra.mxu0 0.0
    %809 = vmatprep.subr.mxu0 0.0
    %810 = vmatpush2.xpose.msra.mxu0 0.0
    %811 = vmatprep.subr.mxu0 0.0
    %812 = vmatpush2.xpose.msra.mxu0 0.0
    %813 = vmatprep.subr.mxu0 0.0
    %814 = vmatpush2.xpose.msra.mxu0 0.0
    %815 = vmatprep.subr.mxu0 0.0
    %816 = vmatpush2.xpose.msra.mxu0 0.0
    %817 = vmatprep.subr.mxu0 0.0
    %818 = vmatpush2.xpose.msra.mxu0 0.0
    %819 = vmatprep.subr.mxu0 0.0
    %820 = vmatpush2.xpose.msra.mxu0 0.0
    %821 = vmatprep.subr.mxu0 0.0
    %822 = vmatpush2.xpose.msra.mxu0 0.0
    %823 = vmatprep.subr.mxu0 0.0
    %824 = vmatpush2.xpose.msra.mxu0 0.0
    %825 = vmatprep.mubr.f32.mxu0 0.0
    %826 = vmatmul.mubr.f32.gmra.mxu0 %v757
    %v827 = vpop.f32.mrf.mxu0
    %v828 = vadd.f32 0.0, %v827
    %v829 = vpop.f32.mrf.mxu0
    %830 = vdwg.mxu0
    %831 = vrot.lane.b32.xlu0 %v431, 120
    %v832 = vpop.permute.xlu0 %831
    %833 = vrot.lane.b32.xlu0 %v341, 120
    %v834 = vpop.permute.xlu0 %833
    %v835 = vsel %vm432, %v832, 0
    %v837 = vsel %vm432, %v834, 0
    %839 = vmatprep.subr.mxu0 0.0
    %840 = vmatpush1.xpose.msra.mxu0 0.0
    %841 = vmatprep.subr.mxu0 0.0
    %842 = vmatpush1.xpose.msra.mxu0 0.0
    %843 = vmatprep.subr.mxu0 0.0
    %844 = vmatpush1.xpose.msra.mxu0 0.0
    %845 = vmatprep.subr.mxu0 0.0
    %846 = vmatpush1.xpose.msra.mxu0 0.0
    %847 = vmatprep.subr.mxu0 0.0
    %848 = vmatpush1.xpose.msra.mxu0 0.0
    %849 = vmatprep.subr.mxu0 0.0
    %850 = vmatpush1.xpose.msra.mxu0 0.0
    %851 = vmatprep.subr.mxu0 0.0
    %852 = vmatpush1.xpose.msra.mxu0 0.0
    %853 = vmatprep.subr.mxu0 0.0
    %854 = vmatpush1.xpose.msra.mxu0 0.0
    %855 = vmatprep.subr.mxu0 0.0
    %856 = vmatpush1.xpose.msra.mxu0 0.0
    %857 = vmatprep.subr.mxu0 0.0
    %858 = vmatpush1.xpose.msra.mxu0 0.0
    %859 = vmatprep.subr.mxu0 0.0
    %860 = vmatpush1.xpose.msra.mxu0 0.0
    %861 = vmatprep.subr.mxu0 0.0
    %862 = vmatpush1.xpose.msra.mxu0 0.0
    %863 = vmatprep.subr.mxu0 0.0
    %864 = vmatpush1.xpose.msra.mxu0 0.0
    %865 = vmatprep.subr.mxu0 0.0
    %866 = vmatpush1.xpose.msra.mxu0 0.0
    %867 = vmatprep.subr.mxu0 0.0
    %868 = vmatpush1.xpose.msra.mxu0 0.0
    %869 = vmatprep.subr.mxu0 0.0
    %870 = vmatpush1.xpose.msra.mxu0 %v837
    %871 = vmatprep.subr.mxu0 0.0
    %872 = vmatpush2.xpose.msra.mxu0 0.0
    %873 = vmatprep.subr.mxu0 0.0
    %874 = vmatpush2.xpose.msra.mxu0 0.0
    %875 = vmatprep.subr.mxu0 0.0
    %876 = vmatpush2.xpose.msra.mxu0 0.0
    %877 = vmatprep.subr.mxu0 0.0
    %878 = vmatpush2.xpose.msra.mxu0 0.0
    %879 = vmatprep.subr.mxu0 0.0
    %880 = vmatpush2.xpose.msra.mxu0 0.0
    %881 = vmatprep.subr.mxu0 0.0
    %882 = vmatpush2.xpose.msra.mxu0 0.0
    %883 = vmatprep.subr.mxu0 0.0
    %884 = vmatpush2.xpose.msra.mxu0 0.0
    %885 = vmatprep.subr.mxu0 0.0
    %886 = vmatpush2.xpose.msra.mxu0 0.0
    %887 = vmatprep.subr.mxu0 0.0
    %888 = vmatpush2.xpose.msra.mxu0 0.0
    %889 = vmatprep.subr.mxu0 0.0
    %890 = vmatpush2.xpose.msra.mxu0 0.0
    %891 = vmatprep.subr.mxu0 0.0
    %892 = vmatpush2.xpose.msra.mxu0 0.0
    %893 = vmatprep.subr.mxu0 0.0
    %894 = vmatpush2.xpose.msra.mxu0 0.0
    %895 = vmatprep.subr.mxu0 0.0
    %896 = vmatpush2.xpose.msra.mxu0 0.0
    %897 = vmatprep.subr.mxu0 0.0
    %898 = vmatpush2.xpose.msra.mxu0 0.0
    %899 = vmatprep.subr.mxu0 0.0
    %900 = vmatpush2.xpose.msra.mxu0 0.0
    %901 = vmatprep.subr.mxu0 0.0
    %902 = vmatpush2.xpose.msra.mxu0 0.0
    %903 = vmatprep.mubr.f32.mxu0 0.0
    %904 = vmatmul.mubr.f32.gmra.mxu0 %v835
    %v905 = vpop.f32.mrf.mxu0
    %v906 = vadd.f32 0.0, %v905
    %v907 = vpop.f32.mrf.mxu0
    %908 = vdwg.mxu0
    %v909 = vsel %vm432, %v828, -inf
    %910 = vmax.xlane.f32.xlu0 %v909
    %v911 = vpop.xlane.xlu0 %910
    %v912 = vsel %vm432, %v906, -inf
    %913 = vmax.xlane.f32.xlu0 %v912
    %v914 = vpop.xlane.xlu0 %913
    %v915 = vsub.f32 %v828, %v911
    %v916 = vsub.f32 %v906, %v914
    %v917 = vmul.f32 %v915, 1.442695
    %v918 = vpow.pop %v917
    %v919 = vmul.f32 %v916, 1.442695
    %v920 = vpow.pop %v919
    %v921 = vsel %vm432, %v918, 0.0
    %922 = vadd.xlane.f32.xlu0 %v921
    %v923 = vpop.xlane.xlu0 %922
    %v924 = vsel %vm432, %v920, 0.0
    %925 = vadd.xlane.f32.xlu0 %v924
    %v926 = vpop.xlane.xlu0 %925
    %v927 = vrcp.pop %v923
    %v928 = vrcp.pop %v926
    %v929 = vmul.f32 %v918, %v927
    %v930 = vmul.f32 %v920, %v928
    %932 = vrot.lane.b32.xlu0 %v422, 120
    %v933 = vpop.permute.xlu0 %932
    %v936 = vsel %vm432, %v929, 0
    %938 = vmatprep.subr.mxu0 0.0
    %939 = vmatpush1.msra.mxu0 0.0
    %940 = vmatprep.subr.mxu0 0.0
    %941 = vmatpush1.msra.mxu0 0.0
    %942 = vmatprep.subr.mxu0 0.0
    %943 = vmatpush1.msra.mxu0 0.0
    %944 = vmatprep.subr.mxu0 0.0
    %945 = vmatpush1.msra.mxu0 0.0
    %946 = vmatprep.subr.mxu0 0.0
    %947 = vmatpush1.msra.mxu0 0.0
    %948 = vmatprep.subr.mxu0 0.0
    %949 = vmatpush1.msra.mxu0 0.0
    %950 = vmatprep.subr.mxu0 0.0
    %951 = vmatpush1.msra.mxu0 0.0
    %952 = vmatprep.subr.mxu0 0.0
    %953 = vmatpush1.msra.mxu0 0.0
    %954 = vmatprep.subr.mxu0 0.0
    %955 = vmatpush1.msra.mxu0 0.0
    %956 = vmatprep.subr.mxu0 0.0
    %957 = vmatpush1.msra.mxu0 0.0
    %958 = vmatprep.subr.mxu0 0.0
    %959 = vmatpush1.msra.mxu0 0.0
    %960 = vmatprep.subr.mxu0 0.0
    %961 = vmatpush1.msra.mxu0 0.0
    %962 = vmatprep.subr.mxu0 0.0
    %963 = vmatpush1.msra.mxu0 0.0
    %964 = vmatprep.subr.mxu0 0.0
    %965 = vmatpush1.msra.mxu0 0.0
    %966 = vmatprep.subr.mxu0 0.0
    %967 = vmatpush1.msra.mxu0 0.0
    %968 = vmatprep.subr.mxu0 0.0
    %969 = vmatpush1.msra.mxu0 %v933
    %970 = vmatprep.subr.mxu0 0.0
    %971 = vmatpush2.msra.mxu0 0.0
    %972 = vmatprep.subr.mxu0 0.0
    %973 = vmatpush2.msra.mxu0 0.0
    %974 = vmatprep.subr.mxu0 0.0
    %975 = vmatpush2.msra.mxu0 0.0
    %976 = vmatprep.subr.mxu0 0.0
    %977 = vmatpush2.msra.mxu0 0.0
    %978 = vmatprep.subr.mxu0 0.0
    %979 = vmatpush2.msra.mxu0 0.0
    %980 = vmatprep.subr.mxu0 0.0
    %981 = vmatpush2.msra.mxu0 0.0
    %982 = vmatprep.subr.mxu0 0.0
    %983 = vmatpush2.msra.mxu0 0.0
    %984 = vmatprep.subr.mxu0 0.0
    %985 = vmatpush2.msra.mxu0 0.0
    %986 = vmatprep.subr.mxu0 0.0
    %987 = vmatpush2.msra.mxu0 0.0
    %988 = vmatprep.subr.mxu0 0.0
    %989 = vmatpush2.msra.mxu0 0.0
    %990 = vmatprep.subr.mxu0 0.0
    %991 = vmatpush2.msra.mxu0 0.0
    %992 = vmatprep.subr.mxu0 0.0
    %993 = vmatpush2.msra.mxu0 0.0
    %994 = vmatprep.subr.mxu0 0.0
    %995 = vmatpush2.msra.mxu0 0.0
    %996 = vmatprep.subr.mxu0 0.0
    %997 = vmatpush2.msra.mxu0 0.0
    %998 = vmatprep.subr.mxu0 0.0
    %999 = vmatpush2.msra.mxu0 0.0
    %1000 = vmatprep.subr.mxu0 0.0
    %1001 = vmatpush2.msra.mxu0 0.0
    %1002 = vmatprep.mubr.f32.mxu0 0.0
    %1003 = vmatmul.mubr.f32.gmra.mxu0 %v936
    %v1004 = vpop.f32.mrf.mxu0
    %v1005 = vadd.f32 0.0, %v1004
    %v1006 = vpop.f32.mrf.mxu0
    %1007 = vdwg.mxu0
    %1009 = vrot.lane.b32.xlu0 %v427, 120
    %v1010 = vpop.permute.xlu0 %1009
    %v1013 = vsel %vm432, %v930, 0
    %1015 = vmatprep.subr.mxu0 0.0
    %1016 = vmatpush1.msra.mxu0 0.0
    %1017 = vmatprep.subr.mxu0 0.0
    %1018 = vmatpush1.msra.mxu0 0.0
    %1019 = vmatprep.subr.mxu0 0.0
    %1020 = vmatpush1.msra.mxu0 0.0
    %1021 = vmatprep.subr.mxu0 0.0
    %1022 = vmatpush1.msra.mxu0 0.0
    %1023 = vmatprep.subr.mxu0 0.0
    %1024 = vmatpush1.msra.mxu0 0.0
    %1025 = vmatprep.subr.mxu0 0.0
    %1026 = vmatpush1.msra.mxu0 0.0
    %1027 = vmatprep.subr.mxu0 0.0
    %1028 = vmatpush1.msra.mxu0 0.0
    %1029 = vmatprep.subr.mxu0 0.0
    %1030 = vmatpush1.msra.mxu0 0.0
    %1031 = vmatprep.subr.mxu0 0.0
    %1032 = vmatpush1.msra.mxu0 0.0
    %1033 = vmatprep.subr.mxu0 0.0
    %1034 = vmatpush1.msra.mxu0 0.0
    %1035 = vmatprep.subr.mxu0 0.0
    %1036 = vmatpush1.msra.mxu0 0.0
    %1037 = vmatprep.subr.mxu0 0.0
    %1038 = vmatpush1.msra.mxu0 0.0
    %1039 = vmatprep.subr.mxu0 0.0
    %1040 = vmatpush1.msra.mxu0 0.0
    %1041 = vmatprep.subr.mxu0 0.0
    %1042 = vmatpush1.msra.mxu0 0.0
    %1043 = vmatprep.subr.mxu0 0.0
    %1044 = vmatpush1.msra.mxu0 0.0
    %1045 = vmatprep.subr.mxu0 0.0
    %1046 = vmatpush1.msra.mxu0 %v1010
    %1047 = vmatprep.subr.mxu0 0.0
    %1048 = vmatpush2.msra.mxu0 0.0
    %1049 = vmatprep.subr.mxu0 0.0
    %1050 = vmatpush2.msra.mxu0 0.0
    %1051 = vmatprep.subr.mxu0 0.0
    %1052 = vmatpush2.msra.mxu0 0.0
    %1053 = vmatprep.subr.mxu0 0.0
    %1054 = vmatpush2.msra.mxu0 0.0
    %1055 = vmatprep.subr.mxu0 0.0
    %1056 = vmatpush2.msra.mxu0 0.0
    %1057 = vmatprep.subr.mxu0 0.0
    %1058 = vmatpush2.msra.mxu0 0.0
    %1059 = vmatprep.subr.mxu0 0.0
    %1060 = vmatpush2.msra.mxu0 0.0
    %1061 = vmatprep.subr.mxu0 0.0
    %1062 = vmatpush2.msra.mxu0 0.0
    %1063 = vmatprep.subr.mxu0 0.0
    %1064 = vmatpush2.msra.mxu0 0.0
    %1065 = vmatprep.subr.mxu0 0.0
    %1066 = vmatpush2.msra.mxu0 0.0
    %1067 = vmatprep.subr.mxu0 0.0
    %1068 = vmatpush2.msra.mxu0 0.0
    %1069 = vmatprep.subr.mxu0 0.0
    %1070 = vmatpush2.msra.mxu0 0.0
    %1071 = vmatprep.subr.mxu0 0.0
    %1072 = vmatpush2.msra.mxu0 0.0
    %1073 = vmatprep.subr.mxu0 0.0
    %1074 = vmatpush2.msra.mxu0 0.0
    %1075 = vmatprep.subr.mxu0 0.0
    %1076 = vmatpush2.msra.mxu0 0.0
    %1077 = vmatprep.subr.mxu0 0.0
    %1078 = vmatpush2.msra.mxu0 0.0
    %1079 = vmatprep.mubr.f32.mxu0 0.0
    %1080 = vmatmul.mubr.f32.gmra.mxu0 %v1013
    %v1081 = vpop.f32.mrf.mxu0
    %v1082 = vadd.f32 0.0, %v1081
    %v1083 = vpop.f32.mrf.mxu0
    %1084 = vdwg.mxu0
    %1085 = vrot.lane.b32.xlu0 %v430, 112
    %v1086 = vpop.permute.xlu0 %1085
    %1087 = vrot.lane.b32.xlu0 %v336, 112
    %v1088 = vpop.permute.xlu0 %1087
    %v1089 = vsel %vm432, %v1086, 0
    %v1091 = vsel %vm432, %v1088, 0
    %1093 = vmatprep.subr.mxu0 0.0
    %1094 = vmatpush1.xpose.msra.mxu0 0.0
    %1095 = vmatprep.subr.mxu0 0.0
    %1096 = vmatpush1.xpose.msra.mxu0 0.0
    %1097 = vmatprep.subr.mxu0 0.0
    %1098 = vmatpush1.xpose.msra.mxu0 0.0
    %1099 = vmatprep.subr.mxu0 0.0
    %1100 = vmatpush1.xpose.msra.mxu0 0.0
    %1101 = vmatprep.subr.mxu0 0.0
    %1102 = vmatpush1.xpose.msra.mxu0 0.0
    %1103 = vmatprep.subr.mxu0 0.0
    %1104 = vmatpush1.xpose.msra.mxu0 0.0
    %1105 = vmatprep.subr.mxu0 0.0
    %1106 = vmatpush1.xpose.msra.mxu0 0.0
    %1107 = vmatprep.subr.mxu0 0.0
    %1108 = vmatpush1.xpose.msra.mxu0 0.0
    %1109 = vmatprep.subr.mxu0 0.0
    %1110 = vmatpush1.xpose.msra.mxu0 0.0
    %1111 = vmatprep.subr.mxu0 0.0
    %1112 = vmatpush1.xpose.msra.mxu0 0.0
    %1113 = vmatprep.subr.mxu0 0.0
    %1114 = vmatpush1.xpose.msra.mxu0 0.0
    %1115 = vmatprep.subr.mxu0 0.0
    %1116 = vmatpush1.xpose.msra.mxu0 0.0
    %1117 = vmatprep.subr.mxu0 0.0
    %1118 = vmatpush1.xpose.msra.mxu0 0.0
    %1119 = vmatprep.subr.mxu0 0.0
    %1120 = vmatpush1.xpose.msra.mxu0 0.0
    %1121 = vmatprep.subr.mxu0 0.0
    %1122 = vmatpush1.xpose.msra.mxu0 0.0
    %1123 = vmatprep.subr.mxu0 0.0
    %1124 = vmatpush1.xpose.msra.mxu0 %v1091
    %1125 = vmatprep.subr.mxu0 0.0
    %1126 = vmatpush2.xpose.msra.mxu0 0.0
    %1127 = vmatprep.subr.mxu0 0.0
    %1128 = vmatpush2.xpose.msra.mxu0 0.0
    %1129 = vmatprep.subr.mxu0 0.0
    %1130 = vmatpush2.xpose.msra.mxu0 0.0
    %1131 = vmatprep.subr.mxu0 0.0
    %1132 = vmatpush2.xpose.msra.mxu0 0.0
    %1133 = vmatprep.subr.mxu0 0.0
    %1134 = vmatpush2.xpose.msra.mxu0 0.0
    %1135 = vmatprep.subr.mxu0 0.0
    %1136 = vmatpush2.xpose.msra.mxu0 0.0
    %1137 = vmatprep.subr.mxu0 0.0
    %1138 = vmatpush2.xpose.msra.mxu0 0.0
    %1139 = vmatprep.subr.mxu0 0.0
    %1140 = vmatpush2.xpose.msra.mxu0 0.0
    %1141 = vmatprep.subr.mxu0 0.0
    %1142 = vmatpush2.xpose.msra.mxu0 0.0
    %1143 = vmatprep.subr.mxu0 0.0
    %1144 = vmatpush2.xpose.msra.mxu0 0.0
    %1145 = vmatprep.subr.mxu0 0.0
    %1146 = vmatpush2.xpose.msra.mxu0 0.0
    %1147 = vmatprep.subr.mxu0 0.0
    %1148 = vmatpush2.xpose.msra.mxu0 0.0
    %1149 = vmatprep.subr.mxu0 0.0
    %1150 = vmatpush2.xpose.msra.mxu0 0.0
    %1151 = vmatprep.subr.mxu0 0.0
    %1152 = vmatpush2.xpose.msra.mxu0 0.0
    %1153 = vmatprep.subr.mxu0 0.0
    %1154 = vmatpush2.xpose.msra.mxu0 0.0
    %1155 = vmatprep.subr.mxu0 0.0
    %1156 = vmatpush2.xpose.msra.mxu0 0.0
    %1157 = vmatprep.mubr.f32.mxu0 0.0
    %1158 = vmatmul.mubr.f32.gmra.mxu0 %v1089
    %v1159 = vpop.f32.mrf.mxu0
    %v1160 = vadd.f32 0.0, %v1159
    %v1161 = vpop.f32.mrf.mxu0
    %1162 = vdwg.mxu0
    %1163 = vrot.lane.b32.xlu0 %v431, 112
    %v1164 = vpop.permute.xlu0 %1163
    %1165 = vrot.lane.b32.xlu0 %v341, 112
    %v1166 = vpop.permute.xlu0 %1165
    %v1167 = vsel %vm432, %v1164, 0
    %v1169 = vsel %vm432, %v1166, 0
    %1171 = vmatprep.subr.mxu0 0.0
    %1172 = vmatpush1.xpose.msra.mxu0 0.0
    %1173 = vmatprep.subr.mxu0 0.0
    %1174 = vmatpush1.xpose.msra.mxu0 0.0
    %1175 = vmatprep.subr.mxu0 0.0
    %1176 = vmatpush1.xpose.msra.mxu0 0.0
    %1177 = vmatprep.subr.mxu0 0.0
    %1178 = vmatpush1.xpose.msra.mxu0 0.0
    %1179 = vmatprep.subr.mxu0 0.0
    %1180 = vmatpush1.xpose.msra.mxu0 0.0
    %1181 = vmatprep.subr.mxu0 0.0
    %1182 = vmatpush1.xpose.msra.mxu0 0.0
    %1183 = vmatprep.subr.mxu0 0.0
    %1184 = vmatpush1.xpose.msra.mxu0 0.0
    %1185 = vmatprep.subr.mxu0 0.0
    %1186 = vmatpush1.xpose.msra.mxu0 0.0
    %1187 = vmatprep.subr.mxu0 0.0
    %1188 = vmatpush1.xpose.msra.mxu0 0.0
    %1189 = vmatprep.subr.mxu0 0.0
    %1190 = vmatpush1.xpose.msra.mxu0 0.0
    %1191 = vmatprep.subr.mxu0 0.0
    %1192 = vmatpush1.xpose.msra.mxu0 0.0
    %1193 = vmatprep.subr.mxu0 0.0
    %1194 = vmatpush1.xpose.msra.mxu0 0.0
    %1195 = vmatprep.subr.mxu0 0.0
    %1196 = vmatpush1.xpose.msra.mxu0 0.0
    %1197 = vmatprep.subr.mxu0 0.0
    %1198 = vmatpush1.xpose.msra.mxu0 0.0
    %1199 = vmatprep.subr.mxu0 0.0
    %1200 = vmatpush1.xpose.msra.mxu0 0.0
    %1201 = vmatprep.subr.mxu0 0.0
    %1202 = vmatpush1.xpose.msra.mxu0 %v1169
    %1203 = vmatprep.subr.mxu0 0.0
    %1204 = vmatpush2.xpose.msra.mxu0 0.0
    %1205 = vmatprep.subr.mxu0 0.0
    %1206 = vmatpush2.xpose.msra.mxu0 0.0
    %1207 = vmatprep.subr.mxu0 0.0
    %1208 = vmatpush2.xpose.msra.mxu0 0.0
    %1209 = vmatprep.subr.mxu0 0.0
    %1210 = vmatpush2.xpose.msra.mxu0 0.0
    %1211 = vmatprep.subr.mxu0 0.0
    %1212 = vmatpush2.xpose.msra.mxu0 0.0
    %1213 = vmatprep.subr.mxu0 0.0
    %1214 = vmatpush2.xpose.msra.mxu0 0.0
    %1215 = vmatprep.subr.mxu0 0.0
    %1216 = vmatpush2.xpose.msra.mxu0 0.0
    %1217 = vmatprep.subr.mxu0 0.0
    %1218 = vmatpush2.xpose.msra.mxu0 0.0
    %1219 = vmatprep.subr.mxu0 0.0
    %1220 = vmatpush2.xpose.msra.mxu0 0.0
    %1221 = vmatprep.subr.mxu0 0.0
    %1222 = vmatpush2.xpose.msra.mxu0 0.0
    %1223 = vmatprep.subr.mxu0 0.0
    %1224 = vmatpush2.xpose.msra.mxu0 0.0
    %1225 = vmatprep.subr.mxu0 0.0
    %1226 = vmatpush2.xpose.msra.mxu0 0.0
    %1227 = vmatprep.subr.mxu0 0.0
    %1228 = vmatpush2.xpose.msra.mxu0 0.0
    %1229 = vmatprep.subr.mxu0 0.0
    %1230 = vmatpush2.xpose.msra.mxu0 0.0
    %1231 = vmatprep.subr.mxu0 0.0
    %1232 = vmatpush2.xpose.msra.mxu0 0.0
    %1233 = vmatprep.subr.mxu0 0.0
    %1234 = vmatpush2.xpose.msra.mxu0 0.0
    %1235 = vmatprep.mubr.f32.mxu0 0.0
    %1236 = vmatmul.mubr.f32.gmra.mxu0 %v1167
    %v1237 = vpop.f32.mrf.mxu0
    %v1238 = vadd.f32 0.0, %v1237
    %v1239 = vpop.f32.mrf.mxu0
    %1240 = vdwg.mxu0
    %v1241 = vsel %vm432, %v1160, -inf
    %1242 = vmax.xlane.f32.xlu0 %v1241
    %v1243 = vpop.xlane.xlu0 %1242
    %v1244 = vsel %vm432, %v1238, -inf
    %1245 = vmax.xlane.f32.xlu0 %v1244
    %v1246 = vpop.xlane.xlu0 %1245
    %v1247 = vsub.f32 %v1160, %v1243
    %v1248 = vsub.f32 %v1238, %v1246
    %v1249 = vmul.f32 %v1247, 1.442695
    %v1250 = vpow.pop %v1249
    %v1251 = vmul.f32 %v1248, 1.442695
    %v1252 = vpow.pop %v1251
    %v1253 = vsel %vm432, %v1250, 0.0
    %1254 = vadd.xlane.f32.xlu0 %v1253
    %v1255 = vpop.xlane.xlu0 %1254
    %v1256 = vsel %vm432, %v1252, 0.0
    %1257 = vadd.xlane.f32.xlu0 %v1256
    %v1258 = vpop.xlane.xlu0 %1257
    %v1259 = vrcp.pop %v1255
    %v1260 = vrcp.pop %v1258
    %v1261 = vmul.f32 %v1250, %v1259
    %v1262 = vmul.f32 %v1252, %v1260
    %1263 = vrot.lane.b32.xlu0 %v422, 112
    %v1264 = vpop.permute.xlu0 %1263
    %v1267 = vsel %vm432, %v1261, 0
    %1269 = vmatprep.subr.mxu0 0.0
    %1270 = vmatpush1.msra.mxu0 0.0
    %1271 = vmatprep.subr.mxu0 0.0
    %1272 = vmatpush1.msra.mxu0 0.0
    %1273 = vmatprep.subr.mxu0 0.0
    %1274 = vmatpush1.msra.mxu0 0.0
    %1275 = vmatprep.subr.mxu0 0.0
    %1276 = vmatpush1.msra.mxu0 0.0
    %1277 = vmatprep.subr.mxu0 0.0
    %1278 = vmatpush1.msra.mxu0 0.0
    %1279 = vmatprep.subr.mxu0 0.0
    %1280 = vmatpush1.msra.mxu0 0.0
    %1281 = vmatprep.subr.mxu0 0.0
    %1282 = vmatpush1.msra.mxu0 0.0
    %1283 = vmatprep.subr.mxu0 0.0
    %1284 = vmatpush1.msra.mxu0 0.0
    %1285 = vmatprep.subr.mxu0 0.0
    %1286 = vmatpush1.msra.mxu0 0.0
    %1287 = vmatprep.subr.mxu0 0.0
    %1288 = vmatpush1.msra.mxu0 0.0
    %1289 = vmatprep.subr.mxu0 0.0
    %1290 = vmatpush1.msra.mxu0 0.0
    %1291 = vmatprep.subr.mxu0 0.0
    %1292 = vmatpush1.msra.mxu0 0.0
    %1293 = vmatprep.subr.mxu0 0.0
    %1294 = vmatpush1.msra.mxu0 0.0
    %1295 = vmatprep.subr.mxu0 0.0
    %1296 = vmatpush1.msra.mxu0 0.0
    %1297 = vmatprep.subr.mxu0 0.0
    %1298 = vmatpush1.msra.mxu0 0.0
    %1299 = vmatprep.subr.mxu0 0.0
    %1300 = vmatpush1.msra.mxu0 %v1264
    %1301 = vmatprep.subr.mxu0 0.0
    %1302 = vmatpush2.msra.mxu0 0.0
    %1303 = vmatprep.subr.mxu0 0.0
    %1304 = vmatpush2.msra.mxu0 0.0
    %1305 = vmatprep.subr.mxu0 0.0
    %1306 = vmatpush2.msra.mxu0 0.0
    %1307 = vmatprep.subr.mxu0 0.0
    %1308 = vmatpush2.msra.mxu0 0.0
    %1309 = vmatprep.subr.mxu0 0.0
    %1310 = vmatpush2.msra.mxu0 0.0
    %1311 = vmatprep.subr.mxu0 0.0
    %1312 = vmatpush2.msra.mxu0 0.0
    %1313 = vmatprep.subr.mxu0 0.0
    %1314 = vmatpush2.msra.mxu0 0.0
    %1315 = vmatprep.subr.mxu0 0.0
    %1316 = vmatpush2.msra.mxu0 0.0
    %1317 = vmatprep.subr.mxu0 0.0
    %1318 = vmatpush2.msra.mxu0 0.0
    %1319 = vmatprep.subr.mxu0 0.0
    %1320 = vmatpush2.msra.mxu0 0.0
    %1321 = vmatprep.subr.mxu0 0.0
    %1322 = vmatpush2.msra.mxu0 0.0
    %1323 = vmatprep.subr.mxu0 0.0
    %1324 = vmatpush2.msra.mxu0 0.0
    %1325 = vmatprep.subr.mxu0 0.0
    %1326 = vmatpush2.msra.mxu0 0.0
    %1327 = vmatprep.subr.mxu0 0.0
    %1328 = vmatpush2.msra.mxu0 0.0
    %1329 = vmatprep.subr.mxu0 0.0
    %1330 = vmatpush2.msra.mxu0 0.0
    %1331 = vmatprep.subr.mxu0 0.0
    %1332 = vmatpush2.msra.mxu0 0.0
    %1333 = vmatprep.mubr.f32.mxu0 0.0
    %1334 = vmatmul.mubr.f32.gmra.mxu0 %v1267
    %v1335 = vpop.f32.mrf.mxu0
    %v1336 = vadd.f32 0.0, %v1335
    %v1337 = vpop.f32.mrf.mxu0
    %1338 = vdwg.mxu0
    %1339 = vrot.lane.b32.xlu0 %v427, 112
    %v1340 = vpop.permute.xlu0 %1339
    %v1343 = vsel %vm432, %v1262, 0
    %1345 = vmatprep.subr.mxu0 0.0
    %1346 = vmatpush1.msra.mxu0 0.0
    %1347 = vmatprep.subr.mxu0 0.0
    %1348 = vmatpush1.msra.mxu0 0.0
    %1349 = vmatprep.subr.mxu0 0.0
    %1350 = vmatpush1.msra.mxu0 0.0
    %1351 = vmatprep.subr.mxu0 0.0
    %1352 = vmatpush1.msra.mxu0 0.0
    %1353 = vmatprep.subr.mxu0 0.0
    %1354 = vmatpush1.msra.mxu0 0.0
    %1355 = vmatprep.subr.mxu0 0.0
    %1356 = vmatpush1.msra.mxu0 0.0
    %1357 = vmatprep.subr.mxu0 0.0
    %1358 = vmatpush1.msra.mxu0 0.0
    %1359 = vmatprep.subr.mxu0 0.0
    %1360 = vmatpush1.msra.mxu0 0.0
    %1361 = vmatprep.subr.mxu0 0.0
    %1362 = vmatpush1.msra.mxu0 0.0
    %1363 = vmatprep.subr.mxu0 0.0
    %1364 = vmatpush1.msra.mxu0 0.0
    %1365 = vmatprep.subr.mxu0 0.0
    %1366 = vmatpush1.msra.mxu0 0.0
    %1367 = vmatprep.subr.mxu0 0.0
    %1368 = vmatpush1.msra.mxu0 0.0
    %1369 = vmatprep.subr.mxu0 0.0
    %1370 = vmatpush1.msra.mxu0 0.0
    %1371 = vmatprep.subr.mxu0 0.0
    %1372 = vmatpush1.msra.mxu0 0.0
    %1373 = vmatprep.subr.mxu0 0.0
    %1374 = vmatpush1.msra.mxu0 0.0
    %1375 = vmatprep.subr.mxu0 0.0
    %1376 = vmatpush1.msra.mxu0 %v1340
    %1377 = vmatprep.subr.mxu0 0.0
    %1378 = vmatpush2.msra.mxu0 0.0
    %1379 = vmatprep.subr.mxu0 0.0
    %1380 = vmatpush2.msra.mxu0 0.0
    %1381 = vmatprep.subr.mxu0 0.0
    %1382 = vmatpush2.msra.mxu0 0.0
    %1383 = vmatprep.subr.mxu0 0.0
    %1384 = vmatpush2.msra.mxu0 0.0
    %1385 = vmatprep.subr.mxu0 0.0
    %1386 = vmatpush2.msra.mxu0 0.0
    %1387 = vmatprep.subr.mxu0 0.0
    %1388 = vmatpush2.msra.mxu0 0.0
    %1389 = vmatprep.subr.mxu0 0.0
    %1390 = vmatpush2.msra.mxu0 0.0
    %1391 = vmatprep.subr.mxu0 0.0
    %1392 = vmatpush2.msra.mxu0 0.0
    %1393 = vmatprep.subr.mxu0 0.0
    %1394 = vmatpush2.msra.mxu0 0.0
    %1395 = vmatprep.subr.mxu0 0.0
    %1396 = vmatpush2.msra.mxu0 0.0
    %1397 = vmatprep.subr.mxu0 0.0
    %1398 = vmatpush2.msra.mxu0 0.0
    %1399 = vmatprep.subr.mxu0 0.0
    %1400 = vmatpush2.msra.mxu0 0.0
    %1401 = vmatprep.subr.mxu0 0.0
    %1402 = vmatpush2.msra.mxu0 0.0
    %1403 = vmatprep.subr.mxu0 0.0
    %1404 = vmatpush2.msra.mxu0 0.0
    %1405 = vmatprep.subr.mxu0 0.0
    %1406 = vmatpush2.msra.mxu0 0.0
    %1407 = vmatprep.subr.mxu0 0.0
    %1408 = vmatpush2.msra.mxu0 0.0
    %1409 = vmatprep.mubr.f32.mxu0 0.0
    %1410 = vmatmul.mubr.f32.gmra.mxu0 %v1343
    %v1411 = vpop.f32.mrf.mxu0
    %v1412 = vadd.f32 0.0, %v1411
    %v1413 = vpop.f32.mrf.mxu0
    %1414 = vdwg.mxu0
    %1415 = vrot.lane.b32.xlu0 %v430, 104
    %v1416 = vpop.permute.xlu0 %1415
    %1417 = vrot.lane.b32.xlu0 %v336, 104
    %v1418 = vpop.permute.xlu0 %1417
    %v1419 = vsel %vm432, %v1416, 0
    %v1421 = vsel %vm432, %v1418, 0
    %1423 = vmatprep.subr.mxu0 0.0
    %1424 = vmatpush1.xpose.msra.mxu0 0.0
    %1425 = vmatprep.subr.mxu0 0.0
    %1426 = vmatpush1.xpose.msra.mxu0 0.0
    %1427 = vmatprep.subr.mxu0 0.0
    %1428 = vmatpush1.xpose.msra.mxu0 0.0
    %1429 = vmatprep.subr.mxu0 0.0
    %1430 = vmatpush1.xpose.msra.mxu0 0.0
    %1431 = vmatprep.subr.mxu0 0.0
    %1432 = vmatpush1.xpose.msra.mxu0 0.0
    %1433 = vmatprep.subr.mxu0 0.0
    %1434 = vmatpush1.xpose.msra.mxu0 0.0
    %1435 = vmatprep.subr.mxu0 0.0
    %1436 = vmatpush1.xpose.msra.mxu0 0.0
    %1437 = vmatprep.subr.mxu0 0.0
    %1438 = vmatpush1.xpose.msra.mxu0 0.0
    %1439 = vmatprep.subr.mxu0 0.0
    %1440 = vmatpush1.xpose.msra.mxu0 0.0
    %1441 = vmatprep.subr.mxu0 0.0
    %1442 = vmatpush1.xpose.msra.mxu0 0.0
    %1443 = vmatprep.subr.mxu0 0.0
    %1444 = vmatpush1.xpose.msra.mxu0 0.0
    %1445 = vmatprep.subr.mxu0 0.0
    %1446 = vmatpush1.xpose.msra.mxu0 0.0
    %1447 = vmatprep.subr.mxu0 0.0
    %1448 = vmatpush1.xpose.msra.mxu0 0.0
    %1449 = vmatprep.subr.mxu0 0.0
    %1450 = vmatpush1.xpose.msra.mxu0 0.0
    %1451 = vmatprep.subr.mxu0 0.0
    %1452 = vmatpush1.xpose.msra.mxu0 0.0
    %1453 = vmatprep.subr.mxu0 0.0
    %1454 = vmatpush1.xpose.msra.mxu0 %v1421
    %1455 = vmatprep.subr.mxu0 0.0
    %1456 = vmatpush2.xpose.msra.mxu0 0.0
    %1457 = vmatprep.subr.mxu0 0.0
    %1458 = vmatpush2.xpose.msra.mxu0 0.0
    %1459 = vmatprep.subr.mxu0 0.0
    %1460 = vmatpush2.xpose.msra.mxu0 0.0
    %1461 = vmatprep.subr.mxu0 0.0
    %1462 = vmatpush2.xpose.msra.mxu0 0.0
    %1463 = vmatprep.subr.mxu0 0.0
    %1464 = vmatpush2.xpose.msra.mxu0 0.0
    %1465 = vmatprep.subr.mxu0 0.0
    %1466 = vmatpush2.xpose.msra.mxu0 0.0
    %1467 = vmatprep.subr.mxu0 0.0
    %1468 = vmatpush2.xpose.msra.mxu0 0.0
    %1469 = vmatprep.subr.mxu0 0.0
    %1470 = vmatpush2.xpose.msra.mxu0 0.0
    %1471 = vmatprep.subr.mxu0 0.0
    %1472 = vmatpush2.xpose.msra.mxu0 0.0
    %1473 = vmatprep.subr.mxu0 0.0
    %1474 = vmatpush2.xpose.msra.mxu0 0.0
    %1475 = vmatprep.subr.mxu0 0.0
    %1476 = vmatpush2.xpose.msra.mxu0 0.0
    %1477 = vmatprep.subr.mxu0 0.0
    %1478 = vmatpush2.xpose.msra.mxu0 0.0
    %1479 = vmatprep.subr.mxu0 0.0
    %1480 = vmatpush2.xpose.msra.mxu0 0.0
    %1481 = vmatprep.subr.mxu0 0.0
    %1482 = vmatpush2.xpose.msra.mxu0 0.0
    %1483 = vmatprep.subr.mxu0 0.0
    %1484 = vmatpush2.xpose.msra.mxu0 0.0
    %1485 = vmatprep.subr.mxu0 0.0
    %1486 = vmatpush2.xpose.msra.mxu0 0.0
    %1487 = vmatprep.mubr.f32.mxu0 0.0
    %1488 = vmatmul.mubr.f32.gmra.mxu0 %v1419
    %v1489 = vpop.f32.mrf.mxu0
    %v1490 = vadd.f32 0.0, %v1489
    %v1491 = vpop.f32.mrf.mxu0
    %1492 = vdwg.mxu0
    %1493 = vrot.lane.b32.xlu0 %v431, 104
    %v1494 = vpop.permute.xlu0 %1493
    %1495 = vrot.lane.b32.xlu0 %v341, 104
    %v1496 = vpop.permute.xlu0 %1495
    %v1497 = vsel %vm432, %v1494, 0
    %v1499 = vsel %vm432, %v1496, 0
    %1501 = vmatprep.subr.mxu0 0.0
    %1502 = vmatpush1.xpose.msra.mxu0 0.0
    %1503 = vmatprep.subr.mxu0 0.0
    %1504 = vmatpush1.xpose.msra.mxu0 0.0
    %1505 = vmatprep.subr.mxu0 0.0
    %1506 = vmatpush1.xpose.msra.mxu0 0.0
    %1507 = vmatprep.subr.mxu0 0.0
    %1508 = vmatpush1.xpose.msra.mxu0 0.0
    %1509 = vmatprep.subr.mxu0 0.0
    %1510 = vmatpush1.xpose.msra.mxu0 0.0
    %1511 = vmatprep.subr.mxu0 0.0
    %1512 = vmatpush1.xpose.msra.mxu0 0.0
    %1513 = vmatprep.subr.mxu0 0.0
    %1514 = vmatpush1.xpose.msra.mxu0 0.0
    %1515 = vmatprep.subr.mxu0 0.0
    %1516 = vmatpush1.xpose.msra.mxu0 0.0
    %1517 = vmatprep.subr.mxu0 0.0
    %1518 = vmatpush1.xpose.msra.mxu0 0.0
    %1519 = vmatprep.subr.mxu0 0.0
    %1520 = vmatpush1.xpose.msra.mxu0 0.0
    %1521 = vmatprep.subr.mxu0 0.0
    %1522 = vmatpush1.xpose.msra.mxu0 0.0
    %1523 = vmatprep.subr.mxu0 0.0
    %1524 = vmatpush1.xpose.msra.mxu0 0.0
    %1525 = vmatprep.subr.mxu0 0.0
    %1526 = vmatpush1.xpose.msra.mxu0 0.0
    %1527 = vmatprep.subr.mxu0 0.0
    %1528 = vmatpush1.xpose.msra.mxu0 0.0
    %1529 = vmatprep.subr.mxu0 0.0
    %1530 = vmatpush1.xpose.msra.mxu0 0.0
    %1531 = vmatprep.subr.mxu0 0.0
    %1532 = vmatpush1.xpose.msra.mxu0 %v1499
    %1533 = vmatprep.subr.mxu0 0.0
    %1534 = vmatpush2.xpose.msra.mxu0 0.0
    %1535 = vmatprep.subr.mxu0 0.0
    %1536 = vmatpush2.xpose.msra.mxu0 0.0
    %1537 = vmatprep.subr.mxu0 0.0
    %1538 = vmatpush2.xpose.msra.mxu0 0.0
    %1539 = vmatprep.subr.mxu0 0.0
    %1540 = vmatpush2.xpose.msra.mxu0 0.0
    %1541 = vmatprep.subr.mxu0 0.0
    %1542 = vmatpush2.xpose.msra.mxu0 0.0
    %1543 = vmatprep.subr.mxu0 0.0
    %1544 = vmatpush2.xpose.msra.mxu0 0.0
    %1545 = vmatprep.subr.mxu0 0.0
    %1546 = vmatpush2.xpose.msra.mxu0 0.0
    %1547 = vmatprep.subr.mxu0 0.0
    %1548 = vmatpush2.xpose.msra.mxu0 0.0
    %1549 = vmatprep.subr.mxu0 0.0
    %1550 = vmatpush2.xpose.msra.mxu0 0.0
    %1551 = vmatprep.subr.mxu0 0.0
    %1552 = vmatpush2.xpose.msra.mxu0 0.0
    %1553 = vmatprep.subr.mxu0 0.0
    %1554 = vmatpush2.xpose.msra.mxu0 0.0
    %1555 = vmatprep.subr.mxu0 0.0
    %1556 = vmatpush2.xpose.msra.mxu0 0.0
    %1557 = vmatprep.subr.mxu0 0.0
    %1558 = vmatpush2.xpose.msra.mxu0 0.0
    %1559 = vmatprep.subr.mxu0 0.0
    %1560 = vmatpush2.xpose.msra.mxu0 0.0
    %1561 = vmatprep.subr.mxu0 0.0
    %1562 = vmatpush2.xpose.msra.mxu0 0.0
    %1563 = vmatprep.subr.mxu0 0.0
    %1564 = vmatpush2.xpose.msra.mxu0 0.0
    %1565 = vmatprep.mubr.f32.mxu0 0.0
    %1566 = vmatmul.mubr.f32.gmra.mxu0 %v1497
    %v1567 = vpop.f32.mrf.mxu0
    %v1568 = vadd.f32 0.0, %v1567
    %v1569 = vpop.f32.mrf.mxu0
    %1570 = vdwg.mxu0
    %v1571 = vsel %vm432, %v1490, -inf
    %1572 = vmax.xlane.f32.xlu0 %v1571
    %v1573 = vpop.xlane.xlu0 %1572
    %v1574 = vsel %vm432, %v1568, -inf
    %1575 = vmax.xlane.f32.xlu0 %v1574
    %v1576 = vpop.xlane.xlu0 %1575
    %v1577 = vsub.f32 %v1490, %v1573
    %v1578 = vsub.f32 %v1568, %v1576
    %v1579 = vmul.f32 %v1577, 1.442695
    %v1580 = vpow.pop %v1579
    %v1581 = vmul.f32 %v1578, 1.442695
    %v1582 = vpow.pop %v1581
    %v1583 = vsel %vm432, %v1580, 0.0
    %1584 = vadd.xlane.f32.xlu0 %v1583
    %v1585 = vpop.xlane.xlu0 %1584
    %v1586 = vsel %vm432, %v1582, 0.0
    %1587 = vadd.xlane.f32.xlu0 %v1586
    %v1588 = vpop.xlane.xlu0 %1587
    %v1589 = vrcp.pop %v1585
    %v1590 = vrcp.pop %v1588
    %v1591 = vmul.f32 %v1580, %v1589
    %v1592 = vmul.f32 %v1582, %v1590
    %1593 = vrot.lane.b32.xlu0 %v422, 104
    %v1594 = vpop.permute.xlu0 %1593
    %v1597 = vsel %vm432, %v1591, 0
    %1599 = vmatprep.subr.mxu0 0.0
    %1600 = vmatpush1.msra.mxu0 0.0
    %1601 = vmatprep.subr.mxu0 0.0
    %1602 = vmatpush1.msra.mxu0 0.0
    %1603 = vmatprep.subr.mxu0 0.0
    %1604 = vmatpush1.msra.mxu0 0.0
    %1605 = vmatprep.subr.mxu0 0.0
    %1606 = vmatpush1.msra.mxu0 0.0
    %1607 = vmatprep.subr.mxu0 0.0
    %1608 = vmatpush1.msra.mxu0 0.0
    %1609 = vmatprep.subr.mxu0 0.0
    %1610 = vmatpush1.msra.mxu0 0.0
    %1611 = vmatprep.subr.mxu0 0.0
    %1612 = vmatpush1.msra.mxu0 0.0
    %1613 = vmatprep.subr.mxu0 0.0
    %1614 = vmatpush1.msra.mxu0 0.0
    %1615 = vmatprep.subr.mxu0 0.0
    %1616 = vmatpush1.msra.mxu0 0.0
    %1617 = vmatprep.subr.mxu0 0.0
    %1618 = vmatpush1.msra.mxu0 0.0
    %1619 = vmatprep.subr.mxu0 0.0
    %1620 = vmatpush1.msra.mxu0 0.0
    %1621 = vmatprep.subr.mxu0 0.0
    %1622 = vmatpush1.msra.mxu0 0.0
    %1623 = vmatprep.subr.mxu0 0.0
    %1624 = vmatpush1.msra.mxu0 0.0
    %1625 = vmatprep.subr.mxu0 0.0
    %1626 = vmatpush1.msra.mxu0 0.0
    %1627 = vmatprep.subr.mxu0 0.0
    %1628 = vmatpush1.msra.mxu0 0.0
    %1629 = vmatprep.subr.mxu0 0.0
    %1630 = vmatpush1.msra.mxu0 %v1594
    %1631 = vmatprep.subr.mxu0 0.0
    %1632 = vmatpush2.msra.mxu0 0.0
    %1633 = vmatprep.subr.mxu0 0.0
    %1634 = vmatpush2.msra.mxu0 0.0
    %1635 = vmatprep.subr.mxu0 0.0
    %1636 = vmatpush2.msra.mxu0 0.0
    %1637 = vmatprep.subr.mxu0 0.0
    %1638 = vmatpush2.msra.mxu0 0.0
    %1639 = vmatprep.subr.mxu0 0.0
    %1640 = vmatpush2.msra.mxu0 0.0
    %1641 = vmatprep.subr.mxu0 0.0
    %1642 = vmatpush2.msra.mxu0 0.0
    %1643 = vmatprep.subr.mxu0 0.0
    %1644 = vmatpush2.msra.mxu0 0.0
    %1645 = vmatprep.subr.mxu0 0.0
    %1646 = vmatpush2.msra.mxu0 0.0
    %1647 = vmatprep.subr.mxu0 0.0
    %1648 = vmatpush2.msra.mxu0 0.0
    %1649 = vmatprep.subr.mxu0 0.0
    %1650 = vmatpush2.msra.mxu0 0.0
    %1651 = vmatprep.subr.mxu0 0.0
    %1652 = vmatpush2.msra.mxu0 0.0
    %1653 = vmatprep.subr.mxu0 0.0
    %1654 = vmatpush2.msra.mxu0 0.0
    %1655 = vmatprep.subr.mxu0 0.0
    %1656 = vmatpush2.msra.mxu0 0.0
    %1657 = vmatprep.subr.mxu0 0.0
    %1658 = vmatpush2.msra.mxu0 0.0
    %1659 = vmatprep.subr.mxu0 0.0
    %1660 = vmatpush2.msra.mxu0 0.0
    %1661 = vmatprep.subr.mxu0 0.0
    %1662 = vmatpush2.msra.mxu0 0.0
    %1663 = vmatprep.mubr.f32.mxu0 0.0
    %1664 = vmatmul.mubr.f32.gmra.mxu0 %v1597
    %v1665 = vpop.f32.mrf.mxu0
    %v1666 = vadd.f32 0.0, %v1665
    %v1667 = vpop.f32.mrf.mxu0
    %1668 = vdwg.mxu0
    %1669 = vrot.lane.b32.xlu0 %v427, 104
    %v1670 = vpop.permute.xlu0 %1669
    %v1673 = vsel %vm432, %v1592, 0
    %1675 = vmatprep.subr.mxu0 0.0
    %1676 = vmatpush1.msra.mxu0 0.0
    %1677 = vmatprep.subr.mxu0 0.0
    %1678 = vmatpush1.msra.mxu0 0.0
    %1679 = vmatprep.subr.mxu0 0.0
    %1680 = vmatpush1.msra.mxu0 0.0
    %1681 = vmatprep.subr.mxu0 0.0
    %1682 = vmatpush1.msra.mxu0 0.0
    %1683 = vmatprep.subr.mxu0 0.0
    %1684 = vmatpush1.msra.mxu0 0.0
    %1685 = vmatprep.subr.mxu0 0.0
    %1686 = vmatpush1.msra.mxu0 0.0
    %1687 = vmatprep.subr.mxu0 0.0
    %1688 = vmatpush1.msra.mxu0 0.0
    %1689 = vmatprep.subr.mxu0 0.0
    %1690 = vmatpush1.msra.mxu0 0.0
    %1691 = vmatprep.subr.mxu0 0.0
    %1692 = vmatpush1.msra.mxu0 0.0
    %1693 = vmatprep.subr.mxu0 0.0
    %1694 = vmatpush1.msra.mxu0 0.0
    %1695 = vmatprep.subr.mxu0 0.0
    %1696 = vmatpush1.msra.mxu0 0.0
    %1697 = vmatprep.subr.mxu0 0.0
    %1698 = vmatpush1.msra.mxu0 0.0
    %1699 = vmatprep.subr.mxu0 0.0
    %1700 = vmatpush1.msra.mxu0 0.0
    %1701 = vmatprep.subr.mxu0 0.0
    %1702 = vmatpush1.msra.mxu0 0.0
    %1703 = vmatprep.subr.mxu0 0.0
    %1704 = vmatpush1.msra.mxu0 0.0
    %1705 = vmatprep.subr.mxu0 0.0
    %1706 = vmatpush1.msra.mxu0 %v1670
    %1707 = vmatprep.subr.mxu0 0.0
    %1708 = vmatpush2.msra.mxu0 0.0
    %1709 = vmatprep.subr.mxu0 0.0
    %1710 = vmatpush2.msra.mxu0 0.0
    %1711 = vmatprep.subr.mxu0 0.0
    %1712 = vmatpush2.msra.mxu0 0.0
    %1713 = vmatprep.subr.mxu0 0.0
    %1714 = vmatpush2.msra.mxu0 0.0
    %1715 = vmatprep.subr.mxu0 0.0
    %1716 = vmatpush2.msra.mxu0 0.0
    %1717 = vmatprep.subr.mxu0 0.0
    %1718 = vmatpush2.msra.mxu0 0.0
    %1719 = vmatprep.subr.mxu0 0.0
    %1720 = vmatpush2.msra.mxu0 0.0
    %1721 = vmatprep.subr.mxu0 0.0
    %1722 = vmatpush2.msra.mxu0 0.0
    %1723 = vmatprep.subr.mxu0 0.0
    %1724 = vmatpush2.msra.mxu0 0.0
    %1725 = vmatprep.subr.mxu0 0.0
    %1726 = vmatpush2.msra.mxu0 0.0
    %1727 = vmatprep.subr.mxu0 0.0
    %1728 = vmatpush2.msra.mxu0 0.0
    %1729 = vmatprep.subr.mxu0 0.0
    %1730 = vmatpush2.msra.mxu0 0.0
    %1731 = vmatprep.subr.mxu0 0.0
    %1732 = vmatpush2.msra.mxu0 0.0
    %1733 = vmatprep.subr.mxu0 0.0
    %1734 = vmatpush2.msra.mxu0 0.0
    %1735 = vmatprep.subr.mxu0 0.0
    %1736 = vmatpush2.msra.mxu0 0.0
    %1737 = vmatprep.subr.mxu0 0.0
    %1738 = vmatpush2.msra.mxu0 0.0
    %1739 = vmatprep.mubr.f32.mxu0 0.0
    %1740 = vmatmul.mubr.f32.gmra.mxu0 %v1673
    %v1741 = vpop.f32.mrf.mxu0
    %v1742 = vadd.f32 0.0, %v1741
    %v1743 = vpop.f32.mrf.mxu0
    %1744 = vdwg.mxu0
    %1747 = vrot.lane.b32.xlu0 %v1005, 8
    %v1748 = vpop.permute.xlu0 %1747
    %1749 = vrot.lane.b32.xlu0 %v1082, 8
    %v1750 = vpop.permute.xlu0 %1749
    %1755 = vrot.lane.b32.xlu0 %v1336, 16
    %v1756 = vpop.permute.xlu0 %1755
    %1757 = vrot.lane.b32.xlu0 %v1412, 16
    %v1758 = vpop.permute.xlu0 %1757
    %1763 = vrot.lane.b32.xlu0 %v1666, 24
    %v1764 = vpop.permute.xlu0 %1763
    %1765 = vrot.lane.b32.xlu0 %v1742, 24
    %v1766 = vpop.permute.xlu0 %1765
    %v1769 = vsel %vm432, %v677, %v1748
    %v1770 = vsel %vm432, %v750, %v1750
    %vm1771 = vcmask 130048
    %v1772 = vsel %vm1771, %v1769, %v1756
    %v1773 = vsel %vm1771, %v1770, %v1758
    %vm1774 = vcmask 195584
    %v1775 = vsel %vm1774, %v1772, %v1764
    %v1776 = vsel %vm1774, %v1773, %v1766
    %v1777 = vld [vmem:[#allocation7] sm:$0xff]
    %v1778 = vld [vmem:[#allocation7 + $0x8] sm:$0xff]
    %v1779 = vld [vmem:[#allocation7 + $0x10] sm:$0xff]
    %v1780 = vld [vmem:[#allocation7 + $0x18] sm:$0xff]
    %v1781 = vld [vmem:[%s10] sm:$0x1]
    %v1783 = vlaneseq
    %v1784 = vshrl.u32 %v1783, 7
    %v1785 = vsub.s32 0, %v1784
    %v1786 = vrot.slane %v1781, %v1785
    %v1789 = vsel %vm122, %v1775, 0
    %v1792 = vsel %vm122, %v1776, 0
    %1794 = vmatprep.subr.mxu0 0.0
    %1795 = vmatpush1.msra.mxu0 0.0
    %1796 = vmatprep.subr.mxu0 0.0
    %1797 = vmatpush1.msra.mxu0 0.0
    %1798 = vmatprep.subr.mxu0 0.0
    %1799 = vmatpush1.msra.mxu0 0.0
    %1800 = vmatprep.subr.mxu0 0.0
    %1801 = vmatpush1.msra.mxu0 0.0
    %1802 = vmatprep.subr.mxu0 0.0
    %1803 = vmatpush1.msra.mxu0 0.0
    %1804 = vmatprep.subr.mxu0 0.0
    %1805 = vmatpush1.msra.mxu0 0.0
    %1806 = vmatprep.subr.mxu0 0.0
    %1807 = vmatpush1.msra.mxu0 0.0
    %1808 = vmatprep.subr.mxu0 0.0
    %1809 = vmatpush1.msra.mxu0 0.0
    %1810 = vmatprep.subr.mxu0 0.0
    %1811 = vmatpush1.msra.mxu0 0.0
    %1812 = vmatprep.subr.mxu0 0.0
    %1813 = vmatpush1.msra.mxu0 0.0
    %1814 = vmatprep.subr.mxu0 0.0
    %1815 = vmatpush1.msra.mxu0 0.0
    %1816 = vmatprep.subr.mxu0 0.0
    %1817 = vmatpush1.msra.mxu0 0.0
    %1818 = vmatprep.subr.mxu0 0.0
    %1819 = vmatpush1.msra.mxu0 %v1780
    %1820 = vmatprep.subr.mxu0 0.0
    %1821 = vmatpush1.msra.mxu0 %v1779
    %1822 = vmatprep.subr.mxu0 0.0
    %1823 = vmatpush1.msra.mxu0 %v1778
    %1824 = vmatprep.subr.mxu0 0.0
    %1825 = vmatpush1.msra.mxu0 %v1777
    %1826 = vmatprep.subr.mxu0 0.0
    %1827 = vmatpush2.msra.mxu0 0.0
    %1828 = vmatprep.subr.mxu0 0.0
    %1829 = vmatpush2.msra.mxu0 0.0
    %1830 = vmatprep.subr.mxu0 0.0
    %1831 = vmatpush2.msra.mxu0 0.0
    %1832 = vmatprep.subr.mxu0 0.0
    %1833 = vmatpush2.msra.mxu0 0.0
    %1834 = vmatprep.subr.mxu0 0.0
    %1835 = vmatpush2.msra.mxu0 0.0
    %1836 = vmatprep.subr.mxu0 0.0
    %1837 = vmatpush2.msra.mxu0 0.0
    %1838 = vmatprep.subr.mxu0 0.0
    %1839 = vmatpush2.msra.mxu0 0.0
    %1840 = vmatprep.subr.mxu0 0.0
    %1841 = vmatpush2.msra.mxu0 0.0
    %1842 = vmatprep.subr.mxu0 0.0
    %1843 = vmatpush2.msra.mxu0 0.0
    %1844 = vmatprep.subr.mxu0 0.0
    %1845 = vmatpush2.msra.mxu0 0.0
    %1846 = vmatprep.subr.mxu0 0.0
    %1847 = vmatpush2.msra.mxu0 0.0
    %1848 = vmatprep.subr.mxu0 0.0
    %1849 = vmatpush2.msra.mxu0 0.0
    %1850 = vmatprep.subr.mxu0 0.0
    %1851 = vmatpush2.msra.mxu0 0.0
    %1852 = vmatprep.subr.mxu0 0.0
    %1853 = vmatpush2.msra.mxu0 0.0
    %1854 = vmatprep.subr.mxu0 0.0
    %1855 = vmatpush2.msra.mxu0 0.0
    %1856 = vmatprep.subr.mxu0 0.0
    %1857 = vmatpush2.msra.mxu0 0.0
    %1858 = vmatprep.mubr.f32.mxu0 0.0
    %1859 = vmatmul.mubr.f32.gmra.mxu0 %v1789
    %v1860 = vpop.f32.mrf.mxu0
    %v1861 = vadd.f32 %v1786, %v1860
    %v1862 = vpop.f32.mrf.mxu0
    %1863 = vmatprep.mubr.f32.mxu0 0.0
    %1864 = vmatmul.mubr.f32.gmra.mxu0 %v1792
    %v1865 = vpop.f32.mrf.mxu0
    %v1866 = vadd.f32 %v1786, %v1865
    %v1867 = vpop.f32.mrf.mxu0
    %1868 = vdwg.mxu0
    %v1869 = vadd.f32 %v118, %v1861
    %v1870 = vadd.f32 %v119, %v1866
    %v1871 = vld [vmem:[%s11] sm:$0x1]
    %v1872 = vld [vmem:[%s12] sm:$0x1]
    %v1873 = vsel %vm122, %v1869, 0.0
    %1874 = vadd.xlane.f32.xlu0 %v1873
    %v1875 = vpop.xlane.xlu0 %1874
    %v1876 = vsel %vm122, %v1870, 0.0
    %1877 = vadd.xlane.f32.xlu0 %v1876
    %v1878 = vpop.xlane.xlu0 %1877
    %v1879 = vmul.f32 %v1875, %v129
    %v1880 = vmul.f32 %v1878, %v129
    %v1881 = vsub.f32 %v1869, %v1879
    %v1882 = vsub.f32 %v1870, %v1880
    %v1883 = vmul.f32 %v1881, %v1881
    %v1884 = vmul.f32 %v1882, %v1882
    %v1885 = vsel %vm122, %v1883, 0.0
    %1886 = vadd.xlane.f32.xlu0 %v1885
    %v1887 = vpop.xlane.xlu0 %1886
    %v1888 = vsel %vm122, %v1884, 0.0
    %1889 = vadd.xlane.f32.xlu0 %v1888
    %v1890 = vpop.xlane.xlu0 %1889
    %v1891 = vmul.f32 %v1887, %v129
    %v1892 = vmul.f32 %v1890, %v129
    %v1893 = vadd.f32 %v1891, 1e-06
    %v1894 = vadd.f32 %v1892, 1e-06
    %v1895 = vrsqrt.pop %v1893
    %v1896 = vrsqrt.pop %v1894
    %v1897 = vmul.f32 %v1881, %v1895
    %v1898 = vmul.f32 %v1882, %v1896
    %v1900 = vlaneseq
    %v1901 = vshrl.u32 %v1900, 7
    %v1902 = vsub.s32 0, %v1901
    %v1903 = vrot.slane %v1871, %v1902
    %v1905 = vmul.f32 %v1897, %v1903
    %v1906 = vmul.f32 %v1898, %v1903
    %v1908 = vlaneseq
    %v1909 = vshrl.u32 %v1908, 7
    %v1910 = vsub.s32 0, %v1909
    %v1911 = vrot.slane %v1872, %v1910
    %v1913 = vadd.f32 %v1905, %v1911
    %v1914 = vadd.f32 %v1906, %v1911
    %v1915 = vld [vmem:[#allocation8] sm:$0xff]
    %v1916 = vld [vmem:[#allocation8 + $0x8] sm:$0xff]
    %v1917 = vld [vmem:[#allocation8 + $0x10] sm:$0xff]
    %v1918 = vld [vmem:[#allocation8 + $0x18] sm:$0xff]
    %v1919 = vld [vmem:[%s14] sm:$0x1]
    %v1921 = vlaneseq
    %v1922 = vshrl.u32 %v1921, 7
    %v1923 = vsub.s32 0, %v1922
    %v1924 = vrot.slane %v1919, %v1923
    %v1927 = vsel %vm122, %v1913, 0
    %v1930 = vsel %vm122, %v1914, 0
    %1932 = vmatprep.subr.mxu0 0.0
    %1933 = vmatpush1.msra.mxu0 0.0
    %1934 = vmatprep.subr.mxu0 0.0
    %1935 = vmatpush1.msra.mxu0 0.0
    %1936 = vmatprep.subr.mxu0 0.0
    %1937 = vmatpush1.msra.mxu0 0.0
    %1938 = vmatprep.subr.mxu0 0.0
    %1939 = vmatpush1.msra.mxu0 0.0
    %1940 = vmatprep.subr.mxu0 0.0
    %1941 = vmatpush1.msra.mxu0 0.0
    %1942 = vmatprep.subr.mxu0 0.0
    %1943 = vmatpush1.msra.mxu0 0.0
    %1944 = vmatprep.subr.mxu0 0.0
    %1945 = vmatpush1.msra.mxu0 0.0
    %1946 = vmatprep.subr.mxu0 0.0
    %1947 = vmatpush1.msra.mxu0 0.0
    %1948 = vmatprep.subr.mxu0 0.0
    %1949 = vmatpush1.msra.mxu0 0.0
    %1950 = vmatprep.subr.mxu0 0.0
    %1951 = vmatpush1.msra.mxu0 0.0
    %1952 = vmatprep.subr.mxu0 0.0
    %1953 = vmatpush1.msra.mxu0 0.0
    %1954 = vmatprep.subr.mxu0 0.0
    %1955 = vmatpush1.msra.mxu0 0.0
    %1956 = vmatprep.subr.mxu0 0.0
    %1957 = vmatpush1.msra.mxu0 %v1918
    %1958 = vmatprep.subr.mxu0 0.0
    %1959 = vmatpush1.msra.mxu0 %v1917
    %1960 = vmatprep.subr.mxu0 0.0
    %1961 = vmatpush1.msra.mxu0 %v1916
    %1962 = vmatprep.subr.mxu0 0.0
    %1963 = vmatpush1.msra.mxu0 %v1915
    %1964 = vmatprep.subr.mxu0 0.0
    %1965 = vmatpush2.msra.mxu0 0.0
    %1966 = vmatprep.subr.mxu0 0.0
    %1967 = vmatpush2.msra.mxu0 0.0
    %1968 = vmatprep.subr.mxu0 0.0
    %1969 = vmatpush2.msra.mxu0 0.0
    %1970 = vmatprep.subr.mxu0 0.0
    %1971 = vmatpush2.msra.mxu0 0.0
    %1972 = vmatprep.subr.mxu0 0.0
    %1973 = vmatpush2.msra.mxu0 0.0
    %1974 = vmatprep.subr.mxu0 0.0
    %1975 = vmatpush2.msra.mxu0 0.0
    %1976 = vmatprep.subr.mxu0 0.0
    %1977 = vmatpush2.msra.mxu0 0.0
    %1978 = vmatprep.subr.mxu0 0.0
    %1979 = vmatpush2.msra.mxu0 0.0
    %1980 = vmatprep.subr.mxu0 0.0
    %1981 = vmatpush2.msra.mxu0 0.0
    %1982 = vmatprep.subr.mxu0 0.0
    %1983 = vmatpush2.msra.mxu0 0.0
    %1984 = vmatprep.subr.mxu0 0.0
    %1985 = vmatpush2.msra.mxu0 0.0
    %1986 = vmatprep.subr.mxu0 0.0
    %1987 = vmatpush2.msra.mxu0 0.0
    %1988 = vmatprep.subr.mxu0 0.0
    %1989 = vmatpush2.msra.mxu0 0.0
    %1990 = vmatprep.subr.mxu0 0.0
    %1991 = vmatpush2.msra.mxu0 0.0
    %1992 = vmatprep.subr.mxu0 0.0
    %1993 = vmatpush2.msra.mxu0 0.0
    %1994 = vmatprep.subr.mxu0 0.0
    %1995 = vmatpush2.msra.mxu0 0.0
    %1996 = vmatprep.mubr.f32.mxu0 0.0
    %1997 = vmatmul.mubr.f32.gmra.mxu0 %v1927
    %v1998 = vpop.f32.mrf.mxu0
    %v1999 = vadd.f32 %v1924, %v1998
    %v2000 = vpop.f32.mrf.mxu0
    %2001 = vmatprep.mubr.f32.mxu0 0.0
    %2002 = vmatmul.mubr.f32.gmra.mxu0 %v1930
    %v2003 = vpop.f32.mrf.mxu0
    %v2004 = vadd.f32 %v1924, %v2003
    %v2005 = vpop.f32.mrf.mxu0
    %2006 = vdwg.mxu0
    %v2007 = vmul.f32 %v1999, 0.5
    %v2008 = vmul.f32 %v2004, 0.5
    %v2009 = vmul.f32 %v1999, 0.70710677
    %v2010 = vmul.f32 %v2004, 0.70710677
    %v2011 = verf.f32.pop %v2009
    %v2012 = verf.f32.pop %v2010
    %v2013 = vadd.f32 %v2011, 1.0
    %v2014 = vadd.f32 %v2012, 1.0
    %v2015 = vmul.f32 %v2007, %v2013
    %v2016 = vmul.f32 %v2008, %v2014
    %v2017 = vld [vmem:[%s15] sm:$0xff]
    %v2018 = vld [vmem:[%s15 + $0x8] sm:$0xff]
    %v2019 = vld [vmem:[%s15 + $0x10] sm:$0xff]
    %v2020 = vld [vmem:[%s15 + $0x18] sm:$0xff]
    %v2021 = vld [vmem:[%s15 + $0x20] sm:$0xff]
    %v2022 = vld [vmem:[%s15 + $0x28] sm:$0xff]
    %v2023 = vld [vmem:[%s15 + $0x30] sm:$0xff]
    %v2024 = vld [vmem:[%s15 + $0x38] sm:$0xff]
    %v2025 = vld [vmem:[%s16] sm:$0x1]
    %v2027 = vlaneseq
    %v2028 = vshrl.u32 %v2027, 7
    %v2029 = vsub.s32 0, %v2028
    %v2030 = vrot.slane %v2025, %v2029
    %vm2032 = vcmask 523264
    %v2034 = vsel %vm2032, %v2015, 0
    %v2037 = vsel %vm2032, %v2016, 0
    %2039 = vmatprep.subr.mxu0 0.0
    %2040 = vmatpush1.msra.mxu0 0.0
    %2041 = vmatprep.subr.mxu0 0.0
    %2042 = vmatpush1.msra.mxu0 0.0
    %2043 = vmatprep.subr.mxu0 0.0
    %2044 = vmatpush1.msra.mxu0 0.0
    %2045 = vmatprep.subr.mxu0 0.0
    %2046 = vmatpush1.msra.mxu0 0.0
    %2047 = vmatprep.subr.mxu0 0.0
    %2048 = vmatpush1.msra.mxu0 0.0
    %2049 = vmatprep.subr.mxu0 0.0
    %2050 = vmatpush1.msra.mxu0 0.0
    %2051 = vmatprep.subr.mxu0 0.0
    %2052 = vmatpush1.msra.mxu0 0.0
    %2053 = vmatprep.subr.mxu0 0.0
    %2054 = vmatpush1.msra.mxu0 0.0
    %2055 = vmatprep.subr.mxu0 0.0
    %2056 = vmatpush1.msra.mxu0 %v2024
    %2057 = vmatprep.subr.mxu0 0.0
    %2058 = vmatpush1.msra.mxu0 %v2023
    %2059 = vmatprep.subr.mxu0 0.0
    %2060 = vmatpush1.msra.mxu0 %v2022
    %2061 = vmatprep.subr.mxu0 0.0
    %2062 = vmatpush1.msra.mxu0 %v2021
    %2063 = vmatprep.subr.mxu0 0.0
    %2064 = vmatpush1.msra.mxu0 %v2020
    %2065 = vmatprep.subr.mxu0 0.0
    %2066 = vmatpush1.msra.mxu0 %v2019
    %2067 = vmatprep.subr.mxu0 0.0
    %2068 = vmatpush1.msra.mxu0 %v2018
    %2069 = vmatprep.subr.mxu0 0.0
    %2070 = vmatpush1.msra.mxu0 %v2017
    %2071 = vmatprep.subr.mxu0 0.0
    %2072 = vmatpush2.msra.mxu0 0.0
    %2073 = vmatprep.subr.mxu0 0.0
    %2074 = vmatpush2.msra.mxu0 0.0
    %2075 = vmatprep.subr.mxu0 0.0
    %2076 = vmatpush2.msra.mxu0 0.0
    %2077 = vmatprep.subr.mxu0 0.0
    %2078 = vmatpush2.msra.mxu0 0.0
    %2079 = vmatprep.subr.mxu0 0.0
    %2080 = vmatpush2.msra.mxu0 0.0
    %2081 = vmatprep.subr.mxu0 0.0
    %2082 = vmatpush2.msra.mxu0 0.0
    %2083 = vmatprep.subr.mxu0 0.0
    %2084 = vmatpush2.msra.mxu0 0.0
    %2085 = vmatprep.subr.mxu0 0.0
    %2086 = vmatpush2.msra.mxu0 0.0
    %2087 = vmatprep.subr.mxu0 0.0
    %2088 = vmatpush2.msra.mxu0 0.0
    %2089 = vmatprep.subr.mxu0 0.0
    %2090 = vmatpush2.msra.mxu0 0.0
    %2091 = vmatprep.subr.mxu0 0.0
    %2092 = vmatpush2.msra.mxu0 0.0
    %2093 = vmatprep.subr.mxu0 0.0
    %2094 = vmatpush2.msra.mxu0 0.0
    %2095 = vmatprep.subr.mxu0 0.0
    %2096 = vmatpush2.msra.mxu0 0.0
    %2097 = vmatprep.subr.mxu0 0.0
    %2098 = vmatpush2.msra.mxu0 0.0
    %2099 = vmatprep.subr.mxu0 0.0
    %2100 = vmatpush2.msra.mxu0 0.0
    %2101 = vmatprep.subr.mxu0 0.0
    %2102 = vmatpush2.msra.mxu0 0.0
    %2103 = vmatprep.mubr.f32.mxu0 0.0
    %2104 = vmatmul.mubr.f32.gmra.mxu0 %v2034
    %v2105 = vpop.f32.mrf.mxu0
    %v2106 = vadd.f32 %v2030, %v2105
    %v2107 = vpop.f32.mrf.mxu0
    %2108 = vmatprep.mubr.f32.mxu0 0.0
    %2109 = vmatmul.mubr.f32.gmra.mxu0 %v2037
    %v2110 = vpop.f32.mrf.mxu0
    %v2111 = vadd.f32 %v2030, %v2110
    %v2112 = vpop.f32.mrf.mxu0
    %2113 = vdwg.mxu0
    %v2114 = vadd.f32 %v1869, %v2106
    %v2115 = vadd.f32 %v1870, %v2111
    %s2116 = scalar_lea.vmem [#allocation5], 1
    %v2117 = vld [vmem:[%s2116] sm:$0x1]
    %s2118 = scalar_lea.vmem %s2, 1
    %v2119 = vld [vmem:[%s2118] sm:$0x1]
    %v2120 = vsel %vm122, %v2114, 0.0
    %2121 = vadd.xlane.f32.xlu0 %v2120
    %v2122 = vpop.xlane.xlu0 %2121
    %v2123 = vsel %vm122, %v2115, 0.0
    %2124 = vadd.xlane.f32.xlu0 %v2123
    %v2125 = vpop.xlane.xlu0 %2124
    %v2126 = vmul.f32 %v2122, %v129
    %v2127 = vmul.f32 %v2125, %v129
    %v2128 = vsub.f32 %v2114, %v2126
    %v2129 = vsub.f32 %v2115, %v2127
    %v2130 = vmul.f32 %v2128, %v2128
    %v2131 = vmul.f32 %v2129, %v2129
    %v2132 = vsel %vm122, %v2130, 0.0
    %2133 = vadd.xlane.f32.xlu0 %v2132
    %v2134 = vpop.xlane.xlu0 %2133
    %v2135 = vsel %vm122, %v2131, 0.0
    %2136 = vadd.xlane.f32.xlu0 %v2135
    %v2137 = vpop.xlane.xlu0 %2136
    %v2138 = vmul.f32 %v2134, %v129
    %v2139 = vmul.f32 %v2137, %v129
    %v2140 = vadd.f32 %v2138, 1e-06
    %v2141 = vadd.f32 %v2139, 1e-06
    %v2142 = vrsqrt.pop %v2140
    %v2143 = vrsqrt.pop %v2141
    %v2144 = vmul.f32 %v2128, %v2142
    %v2145 = vmul.f32 %v2129, %v2143
    %v2147 = vlaneseq
    %v2148 = vshrl.u32 %v2147, 7
    %v2149 = vsub.s32 0, %v2148
    %v2150 = vrot.slane %v2117, %v2149
    %v2152 = vmul.f32 %v2144, %v2150
    %v2153 = vmul.f32 %v2145, %v2150
    %v2155 = vlaneseq
    %v2156 = vshrl.u32 %v2155, 7
    %v2157 = vsub.s32 0, %v2156
    %v2158 = vrot.slane %v2119, %v2157
    %v2160 = vadd.f32 %v2152, %v2158
    %v2161 = vadd.f32 %v2153, %v2158
    %s2162 = scalar_lea.vmem %s3, 32
    %v2163 = vld [vmem:[%s2162] sm:$0xff]
    %v2164 = vld [vmem:[%s2162 + $0x8] sm:$0xff]
    %v2165 = vld [vmem:[%s2162 + $0x10] sm:$0xff]
    %v2166 = vld [vmem:[%s2162 + $0x18] sm:$0xff]
    %s2167 = scalar_lea.vmem %s4, 1
    %v2168 = vld [vmem:[%s2167] sm:$0x1]
    %v2170 = vlaneseq
    %v2171 = vshrl.u32 %v2170, 7
    %v2172 = vsub.s32 0, %v2171
    %v2173 = vrot.slane %v2168, %v2172
    %v2176 = vsel %vm122, %v2160, 0
    %v2179 = vsel %vm122, %v2161, 0
    %2181 = vmatprep.subr.mxu0 0.0
    %2182 = vmatpush1.msra.mxu0 0.0
    %2183 = vmatprep.subr.mxu0 0.0
    %2184 = vmatpush1.msra.mxu0 0.0
    %2185 = vmatprep.subr.mxu0 0.0
    %2186 = vmatpush1.msra.mxu0 0.0
    %2187 = vmatprep.subr.mxu0 0.0
    %2188 = vmatpush1.msra.mxu0 0.0
    %2189 = vmatprep.subr.mxu0 0.0
    %2190 = vmatpush1.msra.mxu0 0.0
    %2191 = vmatprep.subr.mxu0 0.0
    %2192 = vmatpush1.msra.mxu0 0.0
    %2193 = vmatprep.subr.mxu0 0.0
    %2194 = vmatpush1.msra.mxu0 0.0
    %2195 = vmatprep.subr.mxu0 0.0
    %2196 = vmatpush1.msra.mxu0 0.0
    %2197 = vmatprep.subr.mxu0 0.0
    %2198 = vmatpush1.msra.mxu0 0.0
    %2199 = vmatprep.subr.mxu0 0.0
    %2200 = vmatpush1.msra.mxu0 0.0
    %2201 = vmatprep.subr.mxu0 0.0
    %2202 = vmatpush1.msra.mxu0 0.0
    %2203 = vmatprep.subr.mxu0 0.0
    %2204 = vmatpush1.msra.mxu0 0.0
    %2205 = vmatprep.subr.mxu0 0.0
    %2206 = vmatpush1.msra.mxu0 %v2166
    %2207 = vmatprep.subr.mxu0 0.0
    %2208 = vmatpush1.msra.mxu0 %v2165
    %2209 = vmatprep.subr.mxu0 0.0
    %2210 = vmatpush1.msra.mxu0 %v2164
    %2211 = vmatprep.subr.mxu0 0.0
    %2212 = vmatpush1.msra.mxu0 %v2163
    %2213 = vmatprep.subr.mxu0 0.0
    %2214 = vmatpush2.msra.mxu0 0.0
    %2215 = vmatprep.subr.mxu0 0.0
    %2216 = vmatpush2.msra.mxu0 0.0
    %2217 = vmatprep.subr.mxu0 0.0
    %2218 = vmatpush2.msra.mxu0 0.0
    %2219 = vmatprep.subr.mxu0 0.0
    %2220 = vmatpush2.msra.mxu0 0.0
    %2221 = vmatprep.subr.mxu0 0.0
    %2222 = vmatpush2.msra.mxu0 0.0
    %2223 = vmatprep.subr.mxu0 0.0
    %2224 = vmatpush2.msra.mxu0 0.0
    %2225 = vmatprep.subr.mxu0 0.0
    %2226 = vmatpush2.msra.mxu0 0.0
    %2227 = vmatprep.subr.mxu0 0.0
    %2228 = vmatpush2.msra.mxu0 0.0
    %2229 = vmatprep.subr.mxu0 0.0
    %2230 = vmatpush2.msra.mxu0 0.0
    %2231 = vmatprep.subr.mxu0 0.0
    %2232 = vmatpush2.msra.mxu0 0.0
    %2233 = vmatprep.subr.mxu0 0.0
    %2234 = vmatpush2.msra.mxu0 0.0
    %2235 = vmatprep.subr.mxu0 0.0
    %2236 = vmatpush2.msra.mxu0 0.0
    %2237 = vmatprep.subr.mxu0 0.0
    %2238 = vmatpush2.msra.mxu0 0.0
    %2239 = vmatprep.subr.mxu0 0.0
    %2240 = vmatpush2.msra.mxu0 0.0
    %2241 = vmatprep.subr.mxu0 0.0
    %2242 = vmatpush2.msra.mxu0 0.0
    %2243 = vmatprep.subr.mxu0 0.0
    %2244 = vmatpush2.msra.mxu0 0.0
    %2245 = vmatprep.mubr.f32.mxu0 0.0
    %2246 = vmatmul.mubr.f32.gmra.mxu0 %v2176
    %v2247 = vpop.f32.mrf.mxu0
    %v2248 = vadd.f32 %v2173, %v2247
    %v2249 = vpop.f32.mrf.mxu0
    %2250 = vmatprep.mubr.f32.mxu0 0.0
    %2251 = vmatmul.mubr.f32.gmra.mxu0 %v2179
    %v2252 = vpop.f32.mrf.mxu0
    %v2253 = vadd.f32 %v2173, %v2252
    %v2254 = vpop.f32.mrf.mxu0
    %2255 = vdwg.mxu0
    %s2256 = scalar_lea.vmem %s5, 32
    %v2257 = vld [vmem:[%s2256] sm:$0xff]
    %v2258 = vld [vmem:[%s2256 + $0x8] sm:$0xff]
    %v2259 = vld [vmem:[%s2256 + $0x10] sm:$0xff]
    %v2260 = vld [vmem:[%s2256 + $0x18] sm:$0xff]
    %s2261 = scalar_lea.vmem %s6, 1
    %v2262 = vld [vmem:[%s2261] sm:$0x1]
    %v2264 = vlaneseq
    %v2265 = vshrl.u32 %v2264, 7
    %v2266 = vsub.s32 0, %v2265
    %v2267 = vrot.slane %v2262, %v2266
    %2269 = vmatprep.subr.mxu0 0.0
    %2270 = vmatpush1.msra.mxu0 0.0
    %2271 = vmatprep.subr.mxu0 0.0
    %2272 = vmatpush1.msra.mxu0 0.0
    %2273 = vmatprep.subr.mxu0 0.0
    %2274 = vmatpush1.msra.mxu0 0.0
    %2275 = vmatprep.subr.mxu0 0.0
    %2276 = vmatpush1.msra.mxu0 0.0
    %2277 = vmatprep.subr.mxu0 0.0
    %2278 = vmatpush1.msra.mxu0 0.0
    %2279 = vmatprep.subr.mxu0 0.0
    %2280 = vmatpush1.msra.mxu0 0.0
    %2281 = vmatprep.subr.mxu0 0.0
    %2282 = vmatpush1.msra.mxu0 0.0
    %2283 = vmatprep.subr.mxu0 0.0
    %2284 = vmatpush1.msra.mxu0 0.0
    %2285 = vmatprep.subr.mxu0 0.0
    %2286 = vmatpush1.msra.mxu0 0.0
    %2287 = vmatprep.subr.mxu0 0.0
    %2288 = vmatpush1.msra.mxu0 0.0
    %2289 = vmatprep.subr.mxu0 0.0
    %2290 = vmatpush1.msra.mxu0 0.0
    %2291 = vmatprep.subr.mxu0 0.0
    %2292 = vmatpush1.msra.mxu0 0.0
    %2293 = vmatprep.subr.mxu0 0.0
    %2294 = vmatpush1.msra.mxu0 %v2260
    %2295 = vmatprep.subr.mxu0 0.0
    %2296 = vmatpush1.msra.mxu0 %v2259
    %2297 = vmatprep.subr.mxu0 0.0
    %2298 = vmatpush1.msra.mxu0 %v2258
    %2299 = vmatprep.subr.mxu0 0.0
    %2300 = vmatpush1.msra.mxu0 %v2257
    %2301 = vmatprep.subr.mxu0 0.0
    %2302 = vmatpush2.msra.mxu0 0.0
    %2303 = vmatprep.subr.mxu0 0.0
    %2304 = vmatpush2.msra.mxu0 0.0
    %2305 = vmatprep.subr.mxu0 0.0
    %2306 = vmatpush2.msra.mxu0 0.0
    %2307 = vmatprep.subr.mxu0 0.0
    %2308 = vmatpush2.msra.mxu0 0.0
    %2309 = vmatprep.subr.mxu0 0.0
    %2310 = vmatpush2.msra.mxu0 0.0
    %2311 = vmatprep.subr.mxu0 0.0
    %2312 = vmatpush2.msra.mxu0 0.0
    %2313 = vmatprep.subr.mxu0 0.0
    %2314 = vmatpush2.msra.mxu0 0.0
    %2315 = vmatprep.subr.mxu0 0.0
    %2316 = vmatpush2.msra.mxu0 0.0
    %2317 = vmatprep.subr.mxu0 0.0
    %2318 = vmatpush2.msra.mxu0 0.0
    %2319 = vmatprep.subr.mxu0 0.0
    %2320 = vmatpush2.msra.mxu0 0.0
    %2321 = vmatprep.subr.mxu0 0.0
    %2322 = vmatpush2.msra.mxu0 0.0
    %2323 = vmatprep.subr.mxu0 0.0
    %2324 = vmatpush2.msra.mxu0 0.0
    %2325 = vmatprep.subr.mxu0 0.0
    %2326 = vmatpush2.msra.mxu0 0.0
    %2327 = vmatprep.subr.mxu0 0.0
    %2328 = vmatpush2.msra.mxu0 0.0
    %2329 = vmatprep.subr.mxu0 0.0
    %2330 = vmatpush2.msra.mxu0 0.0
    %2331 = vmatprep.subr.mxu0 0.0
    %2332 = vmatpush2.msra.mxu0 0.0
    %2333 = vmatprep.mubr.f32.mxu0 0.0
    %2334 = vmatmul.mubr.f32.gmra.mxu0 %v2176
    %v2335 = vpop.f32.mrf.mxu0
    %v2336 = vadd.f32 %v2267, %v2335
    %v2337 = vpop.f32.mrf.mxu0
    %2338 = vmatprep.mubr.f32.mxu0 0.0
    %2339 = vmatmul.mubr.f32.gmra.mxu0 %v2179
    %v2340 = vpop.f32.mrf.mxu0
    %v2341 = vadd.f32 %v2267, %v2340
    %v2342 = vpop.f32.mrf.mxu0
    %2343 = vdwg.mxu0
    %s2344 = scalar_lea.vmem %s7, 32
    %v2345 = vld [vmem:[%s2344] sm:$0xff]
    %v2346 = vld [vmem:[%s2344 + $0x8] sm:$0xff]
    %v2347 = vld [vmem:[%s2344 + $0x10] sm:$0xff]
    %v2348 = vld [vmem:[%s2344 + $0x18] sm:$0xff]
    %s2349 = scalar_lea.vmem %s8, 1
    %v2350 = vld [vmem:[%s2349] sm:$0x1]
    %v2352 = vlaneseq
    %v2353 = vshrl.u32 %v2352, 7
    %v2354 = vsub.s32 0, %v2353
    %v2355 = vrot.slane %v2350, %v2354
    %2357 = vmatprep.subr.mxu0 0.0
    %2358 = vmatpush1.msra.mxu0 0.0
    %2359 = vmatprep.subr.mxu0 0.0
    %2360 = vmatpush1.msra.mxu0 0.0
    %2361 = vmatprep.subr.mxu0 0.0
    %2362 = vmatpush1.msra.mxu0 0.0
    %2363 = vmatprep.subr.mxu0 0.0
    %2364 = vmatpush1.msra.mxu0 0.0
    %2365 = vmatprep.subr.mxu0 0.0
    %2366 = vmatpush1.msra.mxu0 0.0
    %2367 = vmatprep.subr.mxu0 0.0
    %2368 = vmatpush1.msra.mxu0 0.0
    %2369 = vmatprep.subr.mxu0 0.0
    %2370 = vmatpush1.msra.mxu0 0.0
    %2371 = vmatprep.subr.mxu0 0.0
    %2372 = vmatpush1.msra.mxu0 0.0
    %2373 = vmatprep.subr.mxu0 0.0
    %2374 = vmatpush1.msra.mxu0 0.0
    %2375 = vmatprep.subr.mxu0 0.0
    %2376 = vmatpush1.msra.mxu0 0.0
    %2377 = vmatprep.subr.mxu0 0.0
    %2378 = vmatpush1.msra.mxu0 0.0
    %2379 = vmatprep.subr.mxu0 0.0
    %2380 = vmatpush1.msra.mxu0 0.0
    %2381 = vmatprep.subr.mxu0 0.0
    %2382 = vmatpush1.msra.mxu0 %v2348
    %2383 = vmatprep.subr.mxu0 0.0
    %2384 = vmatpush1.msra.mxu0 %v2347
    %2385 = vmatprep.subr.mxu0 0.0
    %2386 = vmatpush1.msra.mxu0 %v2346
    %2387 = vmatprep.subr.mxu0 0.0
    %2388 = vmatpush1.msra.mxu0 %v2345
    %2389 = vmatprep.subr.mxu0 0.0
    %2390 = vmatpush2.msra.mxu0 0.0
    %2391 = vmatprep.subr.mxu0 0.0
    %2392 = vmatpush2.msra.mxu0 0.0
    %2393 = vmatprep.subr.mxu0 0.0
    %2394 = vmatpush2.msra.mxu0 0.0
    %2395 = vmatprep.subr.mxu0 0.0
    %2396 = vmatpush2.msra.mxu0 0.0
    %2397 = vmatprep.subr.mxu0 0.0
    %2398 = vmatpush2.msra.mxu0 0.0
    %2399 = vmatprep.subr.mxu0 0.0
    %2400 = vmatpush2.msra.mxu0 0.0
    %2401 = vmatprep.subr.mxu0 0.0
    %2402 = vmatpush2.msra.mxu0 0.0
    %2403 = vmatprep.subr.mxu0 0.0
    %2404 = vmatpush2.msra.mxu0 0.0
    %2405 = vmatprep.subr.mxu0 0.0
    %2406 = vmatpush2.msra.mxu0 0.0
    %2407 = vmatprep.subr.mxu0 0.0
    %2408 = vmatpush2.msra.mxu0 0.0
    %2409 = vmatprep.subr.mxu0 0.0
    %2410 = vmatpush2.msra.mxu0 0.0
    %2411 = vmatprep.subr.mxu0 0.0
    %2412 = vmatpush2.msra.mxu0 0.0
    %2413 = vmatprep.subr.mxu0 0.0
    %2414 = vmatpush2.msra.mxu0 0.0
    %2415 = vmatprep.subr.mxu0 0.0
    %2416 = vmatpush2.msra.mxu0 0.0
    %2417 = vmatprep.subr.mxu0 0.0
    %2418 = vmatpush2.msra.mxu0 0.0
    %2419 = vmatprep.subr.mxu0 0.0
    %2420 = vmatpush2.msra.mxu0 0.0
    %2421 = vmatprep.mubr.f32.mxu0 0.0
    %2422 = vmatmul.mubr.f32.gmra.mxu0 %v2176
    %v2423 = vpop.f32.mrf.mxu0
    %v2424 = vadd.f32 %v2355, %v2423
    %v2425 = vpop.f32.mrf.mxu0
    %2426 = vmatprep.mubr.f32.mxu0 0.0
    %2427 = vmatmul.mubr.f32.gmra.mxu0 %v2179
    %v2428 = vpop.f32.mrf.mxu0
    %v2429 = vadd.f32 %v2355, %v2428
    %v2430 = vpop.f32.mrf.mxu0
    %2431 = vdwg.mxu0
    %v2432 = vmul.f32 %v2248, 0.35355338
    %v2433 = vmul.f32 %v2253, 0.35355338
    %v2435 = vsel %vm432, %v2432, 0
    %v2438 = vsel %vm432, %v2336, 0
    %2440 = vmatprep.subr.mxu0 0.0
    %2441 = vmatpush1.xpose.msra.mxu0 0.0
    %2442 = vmatprep.subr.mxu0 0.0
    %2443 = vmatpush1.xpose.msra.mxu0 0.0
    %2444 = vmatprep.subr.mxu0 0.0
    %2445 = vmatpush1.xpose.msra.mxu0 0.0
    %2446 = vmatprep.subr.mxu0 0.0
    %2447 = vmatpush1.xpose.msra.mxu0 0.0
    %2448 = vmatprep.subr.mxu0 0.0
    %2449 = vmatpush1.xpose.msra.mxu0 0.0
    %2450 = vmatprep.subr.mxu0 0.0
    %2451 = vmatpush1.xpose.msra.mxu0 0.0
    %2452 = vmatprep.subr.mxu0 0.0
    %2453 = vmatpush1.xpose.msra.mxu0 0.0
    %2454 = vmatprep.subr.mxu0 0.0
    %2455 = vmatpush1.xpose.msra.mxu0 0.0
    %2456 = vmatprep.subr.mxu0 0.0
    %2457 = vmatpush1.xpose.msra.mxu0 0.0
    %2458 = vmatprep.subr.mxu0 0.0
    %2459 = vmatpush1.xpose.msra.mxu0 0.0
    %2460 = vmatprep.subr.mxu0 0.0
    %2461 = vmatpush1.xpose.msra.mxu0 0.0
    %2462 = vmatprep.subr.mxu0 0.0
    %2463 = vmatpush1.xpose.msra.mxu0 0.0
    %2464 = vmatprep.subr.mxu0 0.0
    %2465 = vmatpush1.xpose.msra.mxu0 0.0
    %2466 = vmatprep.subr.mxu0 0.0
    %2467 = vmatpush1.xpose.msra.mxu0 0.0
    %2468 = vmatprep.subr.mxu0 0.0
    %2469 = vmatpush1.xpose.msra.mxu0 0.0
    %2470 = vmatprep.subr.mxu0 0.0
    %2471 = vmatpush1.xpose.msra.mxu0 %v2438
    %2472 = vmatprep.subr.mxu0 0.0
    %2473 = vmatpush2.xpose.msra.mxu0 0.0
    %2474 = vmatprep.subr.mxu0 0.0
    %2475 = vmatpush2.xpose.msra.mxu0 0.0
    %2476 = vmatprep.subr.mxu0 0.0
    %2477 = vmatpush2.xpose.msra.mxu0 0.0
    %2478 = vmatprep.subr.mxu0 0.0
    %2479 = vmatpush2.xpose.msra.mxu0 0.0
    %2480 = vmatprep.subr.mxu0 0.0
    %2481 = vmatpush2.xpose.msra.mxu0 0.0
    %2482 = vmatprep.subr.mxu0 0.0
    %2483 = vmatpush2.xpose.msra.mxu0 0.0
    %2484 = vmatprep.subr.mxu0 0.0
    %2485 = vmatpush2.xpose.msra.mxu0 0.0
    %2486 = vmatprep.subr.mxu0 0.0
    %2487 = vmatpush2.xpose.msra.mxu0 0.0
    %2488 = vmatprep.subr.mxu0 0.0
    %2489 = vmatpush2.xpose.msra.mxu0 0.0
    %2490 = vmatprep.subr.mxu0 0.0
    %2491 = vmatpush2.xpose.msra.mxu0 0.0
    %2492 = vmatprep.subr.mxu0 0.0
    %2493 = vmatpush2.xpose.msra.mxu0 0.0
    %2494 = vmatprep.subr.mxu0 0.0
    %2495 = vmatpush2.xpose.msra.mxu0 0.0
    %2496 = vmatprep.subr.mxu0 0.0
    %2497 = vmatpush2.xpose.msra.mxu0 0.0
    %2498 = vmatprep.subr.mxu0 0.0
    %2499 = vmatpush2.xpose.msra.mxu0 0.0
    %2500 = vmatprep.subr.mxu0 0.0
    %2501 = vmatpush2.xpose.msra.mxu0 0.0
    %2502 = vmatprep.subr.mxu0 0.0
    %2503 = vmatpush2.xpose.msra.mxu0 0.0
    %2504 = vmatprep.mubr.f32.mxu0 0.0
    %2505 = vmatmul.mubr.f32.gmra.mxu0 %v2435
    %v2506 = vpop.f32.mrf.mxu0
    %v2507 = vadd.f32 0.0, %v2506
    %v2508 = vpop.f32.mrf.mxu0
    %2509 = vdwg.mxu0
    %v2511 = vsel %vm432, %v2433, 0
    %v2514 = vsel %vm432, %v2341, 0
    %2516 = vmatprep.subr.mxu0 0.0
    %2517 = vmatpush1.xpose.msra.mxu0 0.0
    %2518 = vmatprep.subr.mxu0 0.0
    %2519 = vmatpush1.xpose.msra.mxu0 0.0
    %2520 = vmatprep.subr.mxu0 0.0
    %2521 = vmatpush1.xpose.msra.mxu0 0.0
    %2522 = vmatprep.subr.mxu0 0.0
    %2523 = vmatpush1.xpose.msra.mxu0 0.0
    %2524 = vmatprep.subr.mxu0 0.0
    %2525 = vmatpush1.xpose.msra.mxu0 0.0
    %2526 = vmatprep.subr.mxu0 0.0
    %2527 = vmatpush1.xpose.msra.mxu0 0.0
    %2528 = vmatprep.subr.mxu0 0.0
    %2529 = vmatpush1.xpose.msra.mxu0 0.0
    %2530 = vmatprep.subr.mxu0 0.0
    %2531 = vmatpush1.xpose.msra.mxu0 0.0
    %2532 = vmatprep.subr.mxu0 0.0
    %2533 = vmatpush1.xpose.msra.mxu0 0.0
    %2534 = vmatprep.subr.mxu0 0.0
    %2535 = vmatpush1.xpose.msra.mxu0 0.0
    %2536 = vmatprep.subr.mxu0 0.0
    %2537 = vmatpush1.xpose.msra.mxu0 0.0
    %2538 = vmatprep.subr.mxu0 0.0
    %2539 = vmatpush1.xpose.msra.mxu0 0.0
    %2540 = vmatprep.subr.mxu0 0.0
    %2541 = vmatpush1.xpose.msra.mxu0 0.0
    %2542 = vmatprep.subr.mxu0 0.0
    %2543 = vmatpush1.xpose.msra.mxu0 0.0
    %2544 = vmatprep.subr.mxu0 0.0
    %2545 = vmatpush1.xpose.msra.mxu0 0.0
    %2546 = vmatprep.subr.mxu0 0.0
    %2547 = vmatpush1.xpose.msra.mxu0 %v2514
    %2548 = vmatprep.subr.mxu0 0.0
    %2549 = vmatpush2.xpose.msra.mxu0 0.0
    %2550 = vmatprep.subr.mxu0 0.0
    %2551 = vmatpush2.xpose.msra.mxu0 0.0
    %2552 = vmatprep.subr.mxu0 0.0
    %2553 = vmatpush2.xpose.msra.mxu0 0.0
    %2554 = vmatprep.subr.mxu0 0.0
    %2555 = vmatpush2.xpose.msra.mxu0 0.0
    %2556 = vmatprep.subr.mxu0 0.0
    %2557 = vmatpush2.xpose.msra.mxu0 0.0
    %2558 = vmatprep.subr.mxu0 0.0
    %2559 = vmatpush2.xpose.msra.mxu0 0.0
    %2560 = vmatprep.subr.mxu0 0.0
    %2561 = vmatpush2.xpose.msra.mxu0 0.0
    %2562 = vmatprep.subr.mxu0 0.0
    %2563 = vmatpush2.xpose.msra.mxu0 0.0
    %2564 = vmatprep.subr.mxu0 0.0
    %2565 = vmatpush2.xpose.msra.mxu0 0.0
    %2566 = vmatprep.subr.mxu0 0.0
    %2567 = vmatpush2.xpose.msra.mxu0 0.0
    %2568 = vmatprep.subr.mxu0 0.0
    %2569 = vmatpush2.xpose.msra.mxu0 0.0
    %2570 = vmatprep.subr.mxu0 0.0
    %2571 = vmatpush2.xpose.msra.mxu0 0.0
    %2572 = vmatprep.subr.mxu0 0.0
    %2573 = vmatpush2.xpose.msra.mxu0 0.0
    %2574 = vmatprep.subr.mxu0 0.0
    %2575 = vmatpush2.xpose.msra.mxu0 0.0
    %2576 = vmatprep.subr.mxu0 0.0
    %2577 = vmatpush2.xpose.msra.mxu0 0.0
    %2578 = vmatprep.subr.mxu0 0.0
    %2579 = vmatpush2.xpose.msra.mxu0 0.0
    %2580 = vmatprep.mubr.f32.mxu0 0.0
    %2581 = vmatmul.mubr.f32.gmra.mxu0 %v2511
    %v2582 = vpop.f32.mrf.mxu0
    %v2583 = vadd.f32 0.0, %v2582
    %v2584 = vpop.f32.mrf.mxu0
    %2585 = vdwg.mxu0
    %v2586 = vsel %vm432, %v2507, -inf
    %2587 = vmax.xlane.f32.xlu0 %v2586
    %v2588 = vpop.xlane.xlu0 %2587
    %v2589 = vsel %vm432, %v2583, -inf
    %2590 = vmax.xlane.f32.xlu0 %v2589
    %v2591 = vpop.xlane.xlu0 %2590
    %v2592 = vsub.f32 %v2507, %v2588
    %v2593 = vsub.f32 %v2583, %v2591
    %v2594 = vmul.f32 %v2592, 1.442695
    %v2595 = vpow.pop %v2594
    %v2596 = vmul.f32 %v2593, 1.442695
    %v2597 = vpow.pop %v2596
    %v2598 = vsel %vm432, %v2595, 0.0
    %2599 = vadd.xlane.f32.xlu0 %v2598
    %v2600 = vpop.xlane.xlu0 %2599
    %v2601 = vsel %vm432, %v2597, 0.0
    %2602 = vadd.xlane.f32.xlu0 %v2601
    %v2603 = vpop.xlane.xlu0 %2602
    %v2604 = vrcp.pop %v2600
    %v2605 = vrcp.pop %v2603
    %v2606 = vmul.f32 %v2595, %v2604
    %v2607 = vmul.f32 %v2597, %v2605
    %v2609 = vsel %vm432, %v2606, 0
    %2611 = vmatprep.subr.mxu0 0.0
    %2612 = vmatpush1.msra.mxu0 0.0
    %2613 = vmatprep.subr.mxu0 0.0
    %2614 = vmatpush1.msra.mxu0 0.0
    %2615 = vmatprep.subr.mxu0 0.0
    %2616 = vmatpush1.msra.mxu0 0.0
    %2617 = vmatprep.subr.mxu0 0.0
    %2618 = vmatpush1.msra.mxu0 0.0
    %2619 = vmatprep.subr.mxu0 0.0
    %2620 = vmatpush1.msra.mxu0 0.0
    %2621 = vmatprep.subr.mxu0 0.0
    %2622 = vmatpush1.msra.mxu0 0.0
    %2623 = vmatprep.subr.mxu0 0.0
    %2624 = vmatpush1.msra.mxu0 0.0
    %2625 = vmatprep.subr.mxu0 0.0
    %2626 = vmatpush1.msra.mxu0 0.0
    %2627 = vmatprep.subr.mxu0 0.0
    %2628 = vmatpush1.msra.mxu0 0.0
    %2629 = vmatprep.subr.mxu0 0.0
    %2630 = vmatpush1.msra.mxu0 0.0
    %2631 = vmatprep.subr.mxu0 0.0
    %2632 = vmatpush1.msra.mxu0 0.0
    %2633 = vmatprep.subr.mxu0 0.0
    %2634 = vmatpush1.msra.mxu0 0.0
    %2635 = vmatprep.subr.mxu0 0.0
    %2636 = vmatpush1.msra.mxu0 0.0
    %2637 = vmatprep.subr.mxu0 0.0
    %2638 = vmatpush1.msra.mxu0 0.0
    %2639 = vmatprep.subr.mxu0 0.0
    %2640 = vmatpush1.msra.mxu0 0.0
    %2641 = vmatprep.subr.mxu0 0.0
    %2642 = vmatpush1.msra.mxu0 %v2424
    %2643 = vmatprep.subr.mxu0 0.0
    %2644 = vmatpush2.msra.mxu0 0.0
    %2645 = vmatprep.subr.mxu0 0.0
    %2646 = vmatpush2.msra.mxu0 0.0
    %2647 = vmatprep.subr.mxu0 0.0
    %2648 = vmatpush2.msra.mxu0 0.0
    %2649 = vmatprep.subr.mxu0 0.0
    %2650 = vmatpush2.msra.mxu0 0.0
    %2651 = vmatprep.subr.mxu0 0.0
    %2652 = vmatpush2.msra.mxu0 0.0
    %2653 = vmatprep.subr.mxu0 0.0
    %2654 = vmatpush2.msra.mxu0 0.0
    %2655 = vmatprep.subr.mxu0 0.0
    %2656 = vmatpush2.msra.mxu0 0.0
    %2657 = vmatprep.subr.mxu0 0.0
    %2658 = vmatpush2.msra.mxu0 0.0
    %2659 = vmatprep.subr.mxu0 0.0
    %2660 = vmatpush2.msra.mxu0 0.0
    %2661 = vmatprep.subr.mxu0 0.0
    %2662 = vmatpush2.msra.mxu0 0.0
    %2663 = vmatprep.subr.mxu0 0.0
    %2664 = vmatpush2.msra.mxu0 0.0
    %2665 = vmatprep.subr.mxu0 0.0
    %2666 = vmatpush2.msra.mxu0 0.0
    %2667 = vmatprep.subr.mxu0 0.0
    %2668 = vmatpush2.msra.mxu0 0.0
    %2669 = vmatprep.subr.mxu0 0.0
    %2670 = vmatpush2.msra.mxu0 0.0
    %2671 = vmatprep.subr.mxu0 0.0
    %2672 = vmatpush2.msra.mxu0 0.0
    %2673 = vmatprep.subr.mxu0 0.0
    %2674 = vmatpush2.msra.mxu0 0.0
    %2675 = vmatprep.mubr.f32.mxu0 0.0
    %2676 = vmatmul.mubr.f32.gmra.mxu0 %v2609
    %v2677 = vpop.f32.mrf.mxu0
    %v2678 = vadd.f32 0.0, %v2677
    %v2679 = vpop.f32.mrf.mxu0
    %2680 = vdwg.mxu0
    %v2682 = vsel %vm432, %v2607, 0
    %2684 = vmatprep.subr.mxu0 0.0
    %2685 = vmatpush1.msra.mxu0 0.0
    %2686 = vmatprep.subr.mxu0 0.0
    %2687 = vmatpush1.msra.mxu0 0.0
    %2688 = vmatprep.subr.mxu0 0.0
    %2689 = vmatpush1.msra.mxu0 0.0
    %2690 = vmatprep.subr.mxu0 0.0
    %2691 = vmatpush1.msra.mxu0 0.0
    %2692 = vmatprep.subr.mxu0 0.0
    %2693 = vmatpush1.msra.mxu0 0.0
    %2694 = vmatprep.subr.mxu0 0.0
    %2695 = vmatpush1.msra.mxu0 0.0
    %2696 = vmatprep.subr.mxu0 0.0
    %2697 = vmatpush1.msra.mxu0 0.0
    %2698 = vmatprep.subr.mxu0 0.0
    %2699 = vmatpush1.msra.mxu0 0.0
    %2700 = vmatprep.subr.mxu0 0.0
    %2701 = vmatpush1.msra.mxu0 0.0
    %2702 = vmatprep.subr.mxu0 0.0
    %2703 = vmatpush1.msra.mxu0 0.0
    %2704 = vmatprep.subr.mxu0 0.0
    %2705 = vmatpush1.msra.mxu0 0.0
    %2706 = vmatprep.subr.mxu0 0.0
    %2707 = vmatpush1.msra.mxu0 0.0
    %2708 = vmatprep.subr.mxu0 0.0
    %2709 = vmatpush1.msra.mxu0 0.0
    %2710 = vmatprep.subr.mxu0 0.0
    %2711 = vmatpush1.msra.mxu0 0.0
    %2712 = vmatprep.subr.mxu0 0.0
    %2713 = vmatpush1.msra.mxu0 0.0
    %2714 = vmatprep.subr.mxu0 0.0
    %2715 = vmatpush1.msra.mxu0 %v2429
    %2716 = vmatprep.subr.mxu0 0.0
    %2717 = vmatpush2.msra.mxu0 0.0
    %2718 = vmatprep.subr.mxu0 0.0
    %2719 = vmatpush2.msra.mxu0 0.0
    %2720 = vmatprep.subr.mxu0 0.0
    %2721 = vmatpush2.msra.mxu0 0.0
    %2722 = vmatprep.subr.mxu0 0.0
    %2723 = vmatpush2.msra.mxu0 0.0
    %2724 = vmatprep.subr.mxu0 0.0
    %2725 = vmatpush2.msra.mxu0 0.0
    %2726 = vmatprep.subr.mxu0 0.0
    %2727 = vmatpush2.msra.mxu0 0.0
    %2728 = vmatprep.subr.mxu0 0.0
    %2729 = vmatpush2.msra.mxu0 0.0
    %2730 = vmatprep.subr.mxu0 0.0
    %2731 = vmatpush2.msra.mxu0 0.0
    %2732 = vmatprep.subr.mxu0 0.0
    %2733 = vmatpush2.msra.mxu0 0.0
    %2734 = vmatprep.subr.mxu0 0.0
    %2735 = vmatpush2.msra.mxu0 0.0
    %2736 = vmatprep.subr.mxu0 0.0
    %2737 = vmatpush2.msra.mxu0 0.0
    %2738 = vmatprep.subr.mxu0 0.0
    %2739 = vmatpush2.msra.mxu0 0.0
    %2740 = vmatprep.subr.mxu0 0.0
    %2741 = vmatpush2.msra.mxu0 0.0
    %2742 = vmatprep.subr.mxu0 0.0
    %2743 = vmatpush2.msra.mxu0 0.0
    %2744 = vmatprep.subr.mxu0 0.0
    %2745 = vmatpush2.msra.mxu0 0.0
    %2746 = vmatprep.subr.mxu0 0.0
    %2747 = vmatpush2.msra.mxu0 0.0
    %2748 = vmatprep.mubr.f32.mxu0 0.0
    %2749 = vmatmul.mubr.f32.gmra.mxu0 %v2682
    %v2750 = vpop.f32.mrf.mxu0
    %v2751 = vadd.f32 0.0, %v2750
    %v2752 = vpop.f32.mrf.mxu0
    %2753 = vdwg.mxu0
    %2754 = vrot.lane.b32.xlu0 %v2432, 120
    %v2755 = vpop.permute.xlu0 %2754
    %2756 = vrot.lane.b32.xlu0 %v2336, 120
    %v2757 = vpop.permute.xlu0 %2756
    %v2758 = vsel %vm432, %v2755, 0
    %v2760 = vsel %vm432, %v2757, 0
    %2762 = vmatprep.subr.mxu0 0.0
    %2763 = vmatpush1.xpose.msra.mxu0 0.0
    %2764 = vmatprep.subr.mxu0 0.0
    %2765 = vmatpush1.xpose.msra.mxu0 0.0
    %2766 = vmatprep.subr.mxu0 0.0
    %2767 = vmatpush1.xpose.msra.mxu0 0.0
    %2768 = vmatprep.subr.mxu0 0.0
    %2769 = vmatpush1.xpose.msra.mxu0 0.0
    %2770 = vmatprep.subr.mxu0 0.0
    %2771 = vmatpush1.xpose.msra.mxu0 0.0
    %2772 = vmatprep.subr.mxu0 0.0
    %2773 = vmatpush1.xpose.msra.mxu0 0.0
    %2774 = vmatprep.subr.mxu0 0.0
    %2775 = vmatpush1.xpose.msra.mxu0 0.0
    %2776 = vmatprep.subr.mxu0 0.0
    %2777 = vmatpush1.xpose.msra.mxu0 0.0
    %2778 = vmatprep.subr.mxu0 0.0
    %2779 = vmatpush1.xpose.msra.mxu0 0.0
    %2780 = vmatprep.subr.mxu0 0.0
    %2781 = vmatpush1.xpose.msra.mxu0 0.0
    %2782 = vmatprep.subr.mxu0 0.0
    %2783 = vmatpush1.xpose.msra.mxu0 0.0
    %2784 = vmatprep.subr.mxu0 0.0
    %2785 = vmatpush1.xpose.msra.mxu0 0.0
    %2786 = vmatprep.subr.mxu0 0.0
    %2787 = vmatpush1.xpose.msra.mxu0 0.0
    %2788 = vmatprep.subr.mxu0 0.0
    %2789 = vmatpush1.xpose.msra.mxu0 0.0
    %2790 = vmatprep.subr.mxu0 0.0
    %2791 = vmatpush1.xpose.msra.mxu0 0.0
    %2792 = vmatprep.subr.mxu0 0.0
    %2793 = vmatpush1.xpose.msra.mxu0 %v2760
    %2794 = vmatprep.subr.mxu0 0.0
    %2795 = vmatpush2.xpose.msra.mxu0 0.0
    %2796 = vmatprep.subr.mxu0 0.0
    %2797 = vmatpush2.xpose.msra.mxu0 0.0
    %2798 = vmatprep.subr.mxu0 0.0
    %2799 = vmatpush2.xpose.msra.mxu0 0.0
    %2800 = vmatprep.subr.mxu0 0.0
    %2801 = vmatpush2.xpose.msra.mxu0 0.0
    %2802 = vmatprep.subr.mxu0 0.0
    %2803 = vmatpush2.xpose.msra.mxu0 0.0
    %2804 = vmatprep.subr.mxu0 0.0
    %2805 = vmatpush2.xpose.msra.mxu0 0.0
    %2806 = vmatprep.subr.mxu0 0.0
    %2807 = vmatpush2.xpose.msra.mxu0 0.0
    %2808 = vmatprep.subr.mxu0 0.0
    %2809 = vmatpush2.xpose.msra.mxu0 0.0
    %2810 = vmatprep.subr.mxu0 0.0
    %2811 = vmatpush2.xpose.msra.mxu0 0.0
    %2812 = vmatprep.subr.mxu0 0.0
    %2813 = vmatpush2.xpose.msra.mxu0 0.0
    %2814 = vmatprep.subr.mxu0 0.0
    %2815 = vmatpush2.xpose.msra.mxu0 0.0
    %2816 = vmatprep.subr.mxu0 0.0
    %2817 = vmatpush2.xpose.msra.mxu0 0.0
    %2818 = vmatprep.subr.mxu0 0.0
    %2819 = vmatpush2.xpose.msra.mxu0 0.0
    %2820 = vmatprep.subr.mxu0 0.0
    %2821 = vmatpush2.xpose.msra.mxu0 0.0
    %2822 = vmatprep.subr.mxu0 0.0
    %2823 = vmatpush2.xpose.msra.mxu0 0.0
    %2824 = vmatprep.subr.mxu0 0.0
    %2825 = vmatpush2.xpose.msra.mxu0 0.0
    %2826 = vmatprep.mubr.f32.mxu0 0.0
    %2827 = vmatmul.mubr.f32.gmra.mxu0 %v2758
    %v2828 = vpop.f32.mrf.mxu0
    %v2829 = vadd.f32 0.0, %v2828
    %v2830 = vpop.f32.mrf.mxu0
    %2831 = vdwg.mxu0
    %2832 = vrot.lane.b32.xlu0 %v2433, 120
    %v2833 = vpop.permute.xlu0 %2832
    %2834 = vrot.lane.b32.xlu0 %v2341, 120
    %v2835 = vpop.permute.xlu0 %2834
    %v2836 = vsel %vm432, %v2833, 0
    %v2838 = vsel %vm432, %v2835, 0
    %2840 = vmatprep.subr.mxu0 0.0
    %2841 = vmatpush1.xpose.msra.mxu0 0.0
    %2842 = vmatprep.subr.mxu0 0.0
    %2843 = vmatpush1.xpose.msra.mxu0 0.0
    %2844 = vmatprep.subr.mxu0 0.0
    %2845 = vmatpush1.xpose.msra.mxu0 0.0
    %2846 = vmatprep.subr.mxu0 0.0
    %2847 = vmatpush1.xpose.msra.mxu0 0.0
    %2848 = vmatprep.subr.mxu0 0.0
    %2849 = vmatpush1.xpose.msra.mxu0 0.0
    %2850 = vmatprep.subr.mxu0 0.0
    %2851 = vmatpush1.xpose.msra.mxu0 0.0
    %2852 = vmatprep.subr.mxu0 0.0
    %2853 = vmatpush1.xpose.msra.mxu0 0.0
    %2854 = vmatprep.subr.mxu0 0.0
    %2855 = vmatpush1.xpose.msra.mxu0 0.0
    %2856 = vmatprep.subr.mxu0 0.0
    %2857 = vmatpush1.xpose.msra.mxu0 0.0
    %2858 = vmatprep.subr.mxu0 0.0
    %2859 = vmatpush1.xpose.msra.mxu0 0.0
    %2860 = vmatprep.subr.mxu0 0.0
    %2861 = vmatpush1.xpose.msra.mxu0 0.0
    %2862 = vmatprep.subr.mxu0 0.0
    %2863 = vmatpush1.xpose.msra.mxu0 0.0
    %2864 = vmatprep.subr.mxu0 0.0
    %2865 = vmatpush1.xpose.msra.mxu0 0.0
    %2866 = vmatprep.subr.mxu0 0.0
    %2867 = vmatpush1.xpose.msra.mxu0 0.0
    %2868 = vmatprep.subr.mxu0 0.0
    %2869 = vmatpush1.xpose.msra.mxu0 0.0
    %2870 = vmatprep.subr.mxu0 0.0
    %2871 = vmatpush1.xpose.msra.mxu0 %v2838
    %2872 = vmatprep.subr.mxu0 0.0
    %2873 = vmatpush2.xpose.msra.mxu0 0.0
    %2874 = vmatprep.subr.mxu0 0.0
    %2875 = vmatpush2.xpose.msra.mxu0 0.0
    %2876 = vmatprep.subr.mxu0 0.0
    %2877 = vmatpush2.xpose.msra.mxu0 0.0
    %2878 = vmatprep.subr.mxu0 0.0
    %2879 = vmatpush2.xpose.msra.mxu0 0.0
    %2880 = vmatprep.subr.mxu0 0.0
    %2881 = vmatpush2.xpose.msra.mxu0 0.0
    %2882 = vmatprep.subr.mxu0 0.0
    %2883 = vmatpush2.xpose.msra.mxu0 0.0
    %2884 = vmatprep.subr.mxu0 0.0
    %2885 = vmatpush2.xpose.msra.mxu0 0.0
    %2886 = vmatprep.subr.mxu0 0.0
    %2887 = vmatpush2.xpose.msra.mxu0 0.0
    %2888 = vmatprep.subr.mxu0 0.0
    %2889 = vmatpush2.xpose.msra.mxu0 0.0
    %2890 = vmatprep.subr.mxu0 0.0
    %2891 = vmatpush2.xpose.msra.mxu0 0.0
    %2892 = vmatprep.subr.mxu0 0.0
    %2893 = vmatpush2.xpose.msra.mxu0 0.0
    %2894 = vmatprep.subr.mxu0 0.0
    %2895 = vmatpush2.xpose.msra.mxu0 0.0
    %2896 = vmatprep.subr.mxu0 0.0
    %2897 = vmatpush2.xpose.msra.mxu0 0.0
    %2898 = vmatprep.subr.mxu0 0.0
    %2899 = vmatpush2.xpose.msra.mxu0 0.0
    %2900 = vmatprep.subr.mxu0 0.0
    %2901 = vmatpush2.xpose.msra.mxu0 0.0
    %2902 = vmatprep.subr.mxu0 0.0
    %2903 = vmatpush2.xpose.msra.mxu0 0.0
    %2904 = vmatprep.mubr.f32.mxu0 0.0
    %2905 = vmatmul.mubr.f32.gmra.mxu0 %v2836
    %v2906 = vpop.f32.mrf.mxu0
    %v2907 = vadd.f32 0.0, %v2906
    %v2908 = vpop.f32.mrf.mxu0
    %2909 = vdwg.mxu0
    %v2910 = vsel %vm432, %v2829, -inf
    %2911 = vmax.xlane.f32.xlu0 %v2910
    %v2912 = vpop.xlane.xlu0 %2911
    %v2913 = vsel %vm432, %v2907, -inf
    %2914 = vmax.xlane.f32.xlu0 %v2913
    %v2915 = vpop.xlane.xlu0 %2914
    %v2916 = vsub.f32 %v2829, %v2912
    %v2917 = vsub.f32 %v2907, %v2915
    %v2918 = vmul.f32 %v2916, 1.442695
    %v2919 = vpow.pop %v2918
    %v2920 = vmul.f32 %v2917, 1.442695
    %v2921 = vpow.pop %v2920
    %v2922 = vsel %vm432, %v2919, 0.0
    %2923 = vadd.xlane.f32.xlu0 %v2922
    %v2924 = vpop.xlane.xlu0 %2923
    %v2925 = vsel %vm432, %v2921, 0.0
    %2926 = vadd.xlane.f32.xlu0 %v2925
    %v2927 = vpop.xlane.xlu0 %2926
    %v2928 = vrcp.pop %v2924
    %v2929 = vrcp.pop %v2927
    %v2930 = vmul.f32 %v2919, %v2928
    %v2931 = vmul.f32 %v2921, %v2929
    %2933 = vrot.lane.b32.xlu0 %v2424, 120
    %v2934 = vpop.permute.xlu0 %2933
    %v2937 = vsel %vm432, %v2930, 0
    %2939 = vmatprep.subr.mxu0 0.0
    %2940 = vmatpush1.msra.mxu0 0.0
    %2941 = vmatprep.subr.mxu0 0.0
    %2942 = vmatpush1.msra.mxu0 0.0
    %2943 = vmatprep.subr.mxu0 0.0
    %2944 = vmatpush1.msra.mxu0 0.0
    %2945 = vmatprep.subr.mxu0 0.0
    %2946 = vmatpush1.msra.mxu0 0.0
    %2947 = vmatprep.subr.mxu0 0.0
    %2948 = vmatpush1.msra.mxu0 0.0
    %2949 = vmatprep.subr.mxu0 0.0
    %2950 = vmatpush1.msra.mxu0 0.0
    %2951 = vmatprep.subr.mxu0 0.0
    %2952 = vmatpush1.msra.mxu0 0.0
    %2953 = vmatprep.subr.mxu0 0.0
    %2954 = vmatpush1.msra.mxu0 0.0
    %2955 = vmatprep.subr.mxu0 0.0
    %2956 = vmatpush1.msra.mxu0 0.0
    %2957 = vmatprep.subr.mxu0 0.0
    %2958 = vmatpush1.msra.mxu0 0.0
    %2959 = vmatprep.subr.mxu0 0.0
    %2960 = vmatpush1.msra.mxu0 0.0
    %2961 = vmatprep.subr.mxu0 0.0
    %2962 = vmatpush1.msra.mxu0 0.0
    %2963 = vmatprep.subr.mxu0 0.0
    %2964 = vmatpush1.msra.mxu0 0.0
    %2965 = vmatprep.subr.mxu0 0.0
    %2966 = vmatpush1.msra.mxu0 0.0
    %2967 = vmatprep.subr.mxu0 0.0
    %2968 = vmatpush1.msra.mxu0 0.0
    %2969 = vmatprep.subr.mxu0 0.0
    %2970 = vmatpush1.msra.mxu0 %v2934
    %2971 = vmatprep.subr.mxu0 0.0
    %2972 = vmatpush2.msra.mxu0 0.0
    %2973 = vmatprep.subr.mxu0 0.0
    %2974 = vmatpush2.msra.mxu0 0.0
    %2975 = vmatprep.subr.mxu0 0.0
    %2976 = vmatpush2.msra.mxu0 0.0
    %2977 = vmatprep.subr.mxu0 0.0
    %2978 = vmatpush2.msra.mxu0 0.0
    %2979 = vmatprep.subr.mxu0 0.0
    %2980 = vmatpush2.msra.mxu0 0.0
    %2981 = vmatprep.subr.mxu0 0.0
    %2982 = vmatpush2.msra.mxu0 0.0
    %2983 = vmatprep.subr.mxu0 0.0
    %2984 = vmatpush2.msra.mxu0 0.0
    %2985 = vmatprep.subr.mxu0 0.0
    %2986 = vmatpush2.msra.mxu0 0.0
    %2987 = vmatprep.subr.mxu0 0.0
    %2988 = vmatpush2.msra.mxu0 0.0
    %2989 = vmatprep.subr.mxu0 0.0
    %2990 = vmatpush2.msra.mxu0 0.0
    %2991 = vmatprep.subr.mxu0 0.0
    %2992 = vmatpush2.msra.mxu0 0.0
    %2993 = vmatprep.subr.mxu0 0.0
    %2994 = vmatpush2.msra.mxu0 0.0
    %2995 = vmatprep.subr.mxu0 0.0
    %2996 = vmatpush2.msra.mxu0 0.0
    %2997 = vmatprep.subr.mxu0 0.0
    %2998 = vmatpush2.msra.mxu0 0.0
    %2999 = vmatprep.subr.mxu0 0.0
    %3000 = vmatpush2.msra.mxu0 0.0
    %3001 = vmatprep.subr.mxu0 0.0
    %3002 = vmatpush2.msra.mxu0 0.0
    %3003 = vmatprep.mubr.f32.mxu0 0.0
    %3004 = vmatmul.mubr.f32.gmra.mxu0 %v2937
    %v3005 = vpop.f32.mrf.mxu0
    %v3006 = vadd.f32 0.0, %v3005
    %v3007 = vpop.f32.mrf.mxu0
    %3008 = vdwg.mxu0
    %3010 = vrot.lane.b32.xlu0 %v2429, 120
    %v3011 = vpop.permute.xlu0 %3010
    %v3014 = vsel %vm432, %v2931, 0
    %3016 = vmatprep.subr.mxu0 0.0
    %3017 = vmatpush1.msra.mxu0 0.0
    %3018 = vmatprep.subr.mxu0 0.0
    %3019 = vmatpush1.msra.mxu0 0.0
    %3020 = vmatprep.subr.mxu0 0.0
    %3021 = vmatpush1.msra.mxu0 0.0
    %3022 = vmatprep.subr.mxu0 0.0
    %3023 = vmatpush1.msra.mxu0 0.0
    %3024 = vmatprep.subr.mxu0 0.0
    %3025 = vmatpush1.msra.mxu0 0.0
    %3026 = vmatprep.subr.mxu0 0.0
    %3027 = vmatpush1.msra.mxu0 0.0
    %3028 = vmatprep.subr.mxu0 0.0
    %3029 = vmatpush1.msra.mxu0 0.0
    %3030 = vmatprep.subr.mxu0 0.0
    %3031 = vmatpush1.msra.mxu0 0.0
    %3032 = vmatprep.subr.mxu0 0.0
    %3033 = vmatpush1.msra.mxu0 0.0
    %3034 = vmatprep.subr.mxu0 0.0
    %3035 = vmatpush1.msra.mxu0 0.0
    %3036 = vmatprep.subr.mxu0 0.0
    %3037 = vmatpush1.msra.mxu0 0.0
    %3038 = vmatprep.subr.mxu0 0.0
    %3039 = vmatpush1.msra.mxu0 0.0
    %3040 = vmatprep.subr.mxu0 0.0
    %3041 = vmatpush1.msra.mxu0 0.0
    %3042 = vmatprep.subr.mxu0 0.0
    %3043 = vmatpush1.msra.mxu0 0.0
    %3044 = vmatprep.subr.mxu0 0.0
    %3045 = vmatpush1.msra.mxu0 0.0
    %3046 = vmatprep.subr.mxu0 0.0
    %3047 = vmatpush1.msra.mxu0 %v3011
    %3048 = vmatprep.subr.mxu0 0.0
    %3049 = vmatpush2.msra.mxu0 0.0
    %3050 = vmatprep.subr.mxu0 0.0
    %3051 = vmatpush2.msra.mxu0 0.0
    %3052 = vmatprep.subr.mxu0 0.0
    %3053 = vmatpush2.msra.mxu0 0.0
    %3054 = vmatprep.subr.mxu0 0.0
    %3055 = vmatpush2.msra.mxu0 0.0
    %3056 = vmatprep.subr.mxu0 0.0
    %3057 = vmatpush2.msra.mxu0 0.0
    %3058 = vmatprep.subr.mxu0 0.0
    %3059 = vmatpush2.msra.mxu0 0.0
    %3060 = vmatprep.subr.mxu0 0.0
    %3061 = vmatpush2.msra.mxu0 0.0
    %3062 = vmatprep.subr.mxu0 0.0
    %3063 = vmatpush2.msra.mxu0 0.0
    %3064 = vmatprep.subr.mxu0 0.0
    %3065 = vmatpush2.msra.mxu0 0.0
    %3066 = vmatprep.subr.mxu0 0.0
    %3067 = vmatpush2.msra.mxu0 0.0
    %3068 = vmatprep.subr.mxu0 0.0
    %3069 = vmatpush2.msra.mxu0 0.0
    %3070 = vmatprep.subr.mxu0 0.0
    %3071 = vmatpush2.msra.mxu0 0.0
    %3072 = vmatprep.subr.mxu0 0.0
    %3073 = vmatpush2.msra.mxu0 0.0
    %3074 = vmatprep.subr.mxu0 0.0
    %3075 = vmatpush2.msra.mxu0 0.0
    %3076 = vmatprep.subr.mxu0 0.0
    %3077 = vmatpush2.msra.mxu0 0.0
    %3078 = vmatprep.subr.mxu0 0.0
    %3079 = vmatpush2.msra.mxu0 0.0
    %3080 = vmatprep.mubr.f32.mxu0 0.0
    %3081 = vmatmul.mubr.f32.gmra.mxu0 %v3014
    %v3082 = vpop.f32.mrf.mxu0
    %v3083 = vadd.f32 0.0, %v3082
    %v3084 = vpop.f32.mrf.mxu0
    %3085 = vdwg.mxu0
    %3086 = vrot.lane.b32.xlu0 %v2432, 112
    %v3087 = vpop.permute.xlu0 %3086
    %3088 = vrot.lane.b32.xlu0 %v2336, 112
    %v3089 = vpop.permute.xlu0 %3088
    %v3090 = vsel %vm432, %v3087, 0
    %v3092 = vsel %vm432, %v3089, 0
    %3094 = vmatprep.subr.mxu0 0.0
    %3095 = vmatpush1.xpose.msra.mxu0 0.0
    %3096 = vmatprep.subr.mxu0 0.0
    %3097 = vmatpush1.xpose.msra.mxu0 0.0
    %3098 = vmatprep.subr.mxu0 0.0
    %3099 = vmatpush1.xpose.msra.mxu0 0.0
    %3100 = vmatprep.subr.mxu0 0.0
    %3101 = vmatpush1.xpose.msra.mxu0 0.0
    %3102 = vmatprep.subr.mxu0 0.0
    %3103 = vmatpush1.xpose.msra.mxu0 0.0
    %3104 = vmatprep.subr.mxu0 0.0
    %3105 = vmatpush1.xpose.msra.mxu0 0.0
    %3106 = vmatprep.subr.mxu0 0.0
    %3107 = vmatpush1.xpose.msra.mxu0 0.0
    %3108 = vmatprep.subr.mxu0 0.0
    %3109 = vmatpush1.xpose.msra.mxu0 0.0
    %3110 = vmatprep.subr.mxu0 0.0
    %3111 = vmatpush1.xpose.msra.mxu0 0.0
    %3112 = vmatprep.subr.mxu0 0.0
    %3113 = vmatpush1.xpose.msra.mxu0 0.0
    %3114 = vmatprep.subr.mxu0 0.0
    %3115 = vmatpush1.xpose.msra.mxu0 0.0
    %3116 = vmatprep.subr.mxu0 0.0
    %3117 = vmatpush1.xpose.msra.mxu0 0.0
    %3118 = vmatprep.subr.mxu0 0.0
    %3119 = vmatpush1.xpose.msra.mxu0 0.0
    %3120 = vmatprep.subr.mxu0 0.0
    %3121 = vmatpush1.xpose.msra.mxu0 0.0
    %3122 = vmatprep.subr.mxu0 0.0
    %3123 = vmatpush1.xpose.msra.mxu0 0.0
    %3124 = vmatprep.subr.mxu0 0.0
    %3125 = vmatpush1.xpose.msra.mxu0 %v3092
    %3126 = vmatprep.subr.mxu0 0.0
    %3127 = vmatpush2.xpose.msra.mxu0 0.0
    %3128 = vmatprep.subr.mxu0 0.0
    %3129 = vmatpush2.xpose.msra.mxu0 0.0
    %3130 = vmatprep.subr.mxu0 0.0
    %3131 = vmatpush2.xpose.msra.mxu0 0.0
    %3132 = vmatprep.subr.mxu0 0.0
    %3133 = vmatpush2.xpose.msra.mxu0 0.0
    %3134 = vmatprep.subr.mxu0 0.0
    %3135 = vmatpush2.xpose.msra.mxu0 0.0
    %3136 = vmatprep.subr.mxu0 0.0
    %3137 = vmatpush2.xpose.msra.mxu0 0.0
    %3138 = vmatprep.subr.mxu0 0.0
    %3139 = vmatpush2.xpose.msra.mxu0 0.0
    %3140 = vmatprep.subr.mxu0 0.0
    %3141 = vmatpush2.xpose.msra.mxu0 0.0
    %3142 = vmatprep.subr.mxu0 0.0
    %3143 = vmatpush2.xpose.msra.mxu0 0.0
    %3144 = vmatprep.subr.mxu0 0.0
    %3145 = vmatpush2.xpose.msra.mxu0 0.0
    %3146 = vmatprep.subr.mxu0 0.0
    %3147 = vmatpush2.xpose.msra.mxu0 0.0
    %3148 = vmatprep.subr.mxu0 0.0
    %3149 = vmatpush2.xpose.msra.mxu0 0.0
    %3150 = vmatprep.subr.mxu0 0.0
    %3151 = vmatpush2.xpose.msra.mxu0 0.0
    %3152 = vmatprep.subr.mxu0 0.0
    %3153 = vmatpush2.xpose.msra.mxu0 0.0
    %3154 = vmatprep.subr.mxu0 0.0
    %3155 = vmatpush2.xpose.msra.mxu0 0.0
    %3156 = vmatprep.subr.mxu0 0.0
    %3157 = vmatpush2.xpose.msra.mxu0 0.0
    %3158 = vmatprep.mubr.f32.mxu0 0.0
    %3159 = vmatmul.mubr.f32.gmra.mxu0 %v3090
    %v3160 = vpop.f32.mrf.mxu0
    %v3161 = vadd.f32 0.0, %v3160
    %v3162 = vpop.f32.mrf.mxu0
    %3163 = vdwg.mxu0
    %3164 = vrot.lane.b32.xlu0 %v2433, 112
    %v3165 = vpop.permute.xlu0 %3164
    %3166 = vrot.lane.b32.xlu0 %v2341, 112
    %v3167 = vpop.permute.xlu0 %3166
    %v3168 = vsel %vm432, %v3165, 0
    %v3170 = vsel %vm432, %v3167, 0
    %3172 = vmatprep.subr.mxu0 0.0
    %3173 = vmatpush1.xpose.msra.mxu0 0.0
    %3174 = vmatprep.subr.mxu0 0.0
    %3175 = vmatpush1.xpose.msra.mxu0 0.0
    %3176 = vmatprep.subr.mxu0 0.0
    %3177 = vmatpush1.xpose.msra.mxu0 0.0
    %3178 = vmatprep.subr.mxu0 0.0
    %3179 = vmatpush1.xpose.msra.mxu0 0.0
    %3180 = vmatprep.subr.mxu0 0.0
    %3181 = vmatpush1.xpose.msra.mxu0 0.0
    %3182 = vmatprep.subr.mxu0 0.0
    %3183 = vmatpush1.xpose.msra.mxu0 0.0
    %3184 = vmatprep.subr.mxu0 0.0
    %3185 = vmatpush1.xpose.msra.mxu0 0.0
    %3186 = vmatprep.subr.mxu0 0.0
    %3187 = vmatpush1.xpose.msra.mxu0 0.0
    %3188 = vmatprep.subr.mxu0 0.0
    %3189 = vmatpush1.xpose.msra.mxu0 0.0
    %3190 = vmatprep.subr.mxu0 0.0
    %3191 = vmatpush1.xpose.msra.mxu0 0.0
    %3192 = vmatprep.subr.mxu0 0.0
    %3193 = vmatpush1.xpose.msra.mxu0 0.0
    %3194 = vmatprep.subr.mxu0 0.0
    %3195 = vmatpush1.xpose.msra.mxu0 0.0
    %3196 = vmatprep.subr.mxu0 0.0
    %3197 = vmatpush1.xpose.msra.mxu0 0.0
    %3198 = vmatprep.subr.mxu0 0.0
    %3199 = vmatpush1.xpose.msra.mxu0 0.0
    %3200 = vmatprep.subr.mxu0 0.0
    %3201 = vmatpush1.xpose.msra.mxu0 0.0
    %3202 = vmatprep.subr.mxu0 0.0
    %3203 = vmatpush1.xpose.msra.mxu0 %v3170
    %3204 = vmatprep.subr.mxu0 0.0
    %3205 = vmatpush2.xpose.msra.mxu0 0.0
    %3206 = vmatprep.subr.mxu0 0.0
    %3207 = vmatpush2.xpose.msra.mxu0 0.0
    %3208 = vmatprep.subr.mxu0 0.0
    %3209 = vmatpush2.xpose.msra.mxu0 0.0
    %3210 = vmatprep.subr.mxu0 0.0
    %3211 = vmatpush2.xpose.msra.mxu0 0.0
    %3212 = vmatprep.subr.mxu0 0.0
    %3213 = vmatpush2.xpose.msra.mxu0 0.0
    %3214 = vmatprep.subr.mxu0 0.0
    %3215 = vmatpush2.xpose.msra.mxu0 0.0
    %3216 = vmatprep.subr.mxu0 0.0
    %3217 = vmatpush2.xpose.msra.mxu0 0.0
    %3218 = vmatprep.subr.mxu0 0.0
    %3219 = vmatpush2.xpose.msra.mxu0 0.0
    %3220 = vmatprep.subr.mxu0 0.0
    %3221 = vmatpush2.xpose.msra.mxu0 0.0
    %3222 = vmatprep.subr.mxu0 0.0
    %3223 = vmatpush2.xpose.msra.mxu0 0.0
    %3224 = vmatprep.subr.mxu0 0.0
    %3225 = vmatpush2.xpose.msra.mxu0 0.0
    %3226 = vmatprep.subr.mxu0 0.0
    %3227 = vmatpush2.xpose.msra.mxu0 0.0
    %3228 = vmatprep.subr.mxu0 0.0
    %3229 = vmatpush2.xpose.msra.mxu0 0.0
    %3230 = vmatprep.subr.mxu0 0.0
    %3231 = vmatpush2.xpose.msra.mxu0 0.0
    %3232 = vmatprep.subr.mxu0 0.0
    %3233 = vmatpush2.xpose.msra.mxu0 0.0
    %3234 = vmatprep.subr.mxu0 0.0
    %3235 = vmatpush2.xpose.msra.mxu0 0.0
    %3236 = vmatprep.mubr.f32.mxu0 0.0
    %3237 = vmatmul.mubr.f32.gmra.mxu0 %v3168
    %v3238 = vpop.f32.mrf.mxu0
    %v3239 = vadd.f32 0.0, %v3238
    %v3240 = vpop.f32.mrf.mxu0
    %3241 = vdwg.mxu0
    %v3242 = vsel %vm432, %v3161, -inf
    %3243 = vmax.xlane.f32.xlu0 %v3242
    %v3244 = vpop.xlane.xlu0 %3243
    %v3245 = vsel %vm432, %v3239, -inf
    %3246 = vmax.xlane.f32.xlu0 %v3245
    %v3247 = vpop.xlane.xlu0 %3246
    %v3248 = vsub.f32 %v3161, %v3244
    %v3249 = vsub.f32 %v3239, %v3247
    %v3250 = vmul.f32 %v3248, 1.442695
    %v3251 = vpow.pop %v3250
    %v3252 = vmul.f32 %v3249, 1.442695
    %v3253 = vpow.pop %v3252
    %v3254 = vsel %vm432, %v3251, 0.0
    %3255 = vadd.xlane.f32.xlu0 %v3254
    %v3256 = vpop.xlane.xlu0 %3255
    %v3257 = vsel %vm432, %v3253, 0.0
    %3258 = vadd.xlane.f32.xlu0 %v3257
    %v3259 = vpop.xlane.xlu0 %3258
    %v3260 = vrcp.pop %v3256
    %v3261 = vrcp.pop %v3259
    %v3262 = vmul.f32 %v3251, %v3260
    %v3263 = vmul.f32 %v3253, %v3261
    %3264 = vrot.lane.b32.xlu0 %v2424, 112
    %v3265 = vpop.permute.xlu0 %3264
    %v3268 = vsel %vm432, %v3262, 0
    %3270 = vmatprep.subr.mxu0 0.0
    %3271 = vmatpush1.msra.mxu0 0.0
    %3272 = vmatprep.subr.mxu0 0.0
    %3273 = vmatpush1.msra.mxu0 0.0
    %3274 = vmatprep.subr.mxu0 0.0
    %3275 = vmatpush1.msra.mxu0 0.0
    %3276 = vmatprep.subr.mxu0 0.0
    %3277 = vmatpush1.msra.mxu0 0.0
    %3278 = vmatprep.subr.mxu0 0.0
    %3279 = vmatpush1.msra.mxu0 0.0
    %3280 = vmatprep.subr.mxu0 0.0
    %3281 = vmatpush1.msra.mxu0 0.0
    %3282 = vmatprep.subr.mxu0 0.0
    %3283 = vmatpush1.msra.mxu0 0.0
    %3284 = vmatprep.subr.mxu0 0.0
    %3285 = vmatpush1.msra.mxu0 0.0
    %3286 = vmatprep.subr.mxu0 0.0
    %3287 = vmatpush1.msra.mxu0 0.0
    %3288 = vmatprep.subr.mxu0 0.0
    %3289 = vmatpush1.msra.mxu0 0.0
    %3290 = vmatprep.subr.mxu0 0.0
    %3291 = vmatpush1.msra.mxu0 0.0
    %3292 = vmatprep.subr.mxu0 0.0
    %3293 = vmatpush1.msra.mxu0 0.0
    %3294 = vmatprep.subr.mxu0 0.0
    %3295 = vmatpush1.msra.mxu0 0.0
    %3296 = vmatprep.subr.mxu0 0.0
    %3297 = vmatpush1.msra.mxu0 0.0
    %3298 = vmatprep.subr.mxu0 0.0
    %3299 = vmatpush1.msra.mxu0 0.0
    %3300 = vmatprep.subr.mxu0 0.0
    %3301 = vmatpush1.msra.mxu0 %v3265
    %3302 = vmatprep.subr.mxu0 0.0
    %3303 = vmatpush2.msra.mxu0 0.0
    %3304 = vmatprep.subr.mxu0 0.0
    %3305 = vmatpush2.msra.mxu0 0.0
    %3306 = vmatprep.subr.mxu0 0.0
    %3307 = vmatpush2.msra.mxu0 0.0
    %3308 = vmatprep.subr.mxu0 0.0
    %3309 = vmatpush2.msra.mxu0 0.0
    %3310 = vmatprep.subr.mxu0 0.0
    %3311 = vmatpush2.msra.mxu0 0.0
    %3312 = vmatprep.subr.mxu0 0.0
    %3313 = vmatpush2.msra.mxu0 0.0
    %3314 = vmatprep.subr.mxu0 0.0
    %3315 = vmatpush2.msra.mxu0 0.0
    %3316 = vmatprep.subr.mxu0 0.0
    %3317 = vmatpush2.msra.mxu0 0.0
    %3318 = vmatprep.subr.mxu0 0.0
    %3319 = vmatpush2.msra.mxu0 0.0
    %3320 = vmatprep.subr.mxu0 0.0
    %3321 = vmatpush2.msra.mxu0 0.0
    %3322 = vmatprep.subr.mxu0 0.0
    %3323 = vmatpush2.msra.mxu0 0.0
    %3324 = vmatprep.subr.mxu0 0.0
    %3325 = vmatpush2.msra.mxu0 0.0
    %3326 = vmatprep.subr.mxu0 0.0
    %3327 = vmatpush2.msra.mxu0 0.0
    %3328 = vmatprep.subr.mxu0 0.0
    %3329 = vmatpush2.msra.mxu0 0.0
    %3330 = vmatprep.subr.mxu0 0.0
    %3331 = vmatpush2.msra.mxu0 0.0
    %3332 = vmatprep.subr.mxu0 0.0
    %3333 = vmatpush2.msra.mxu0 0.0
    %3334 = vmatprep.mubr.f32.mxu0 0.0
    %3335 = vmatmul.mubr.f32.gmra.mxu0 %v3268
    %v3336 = vpop.f32.mrf.mxu0
    %v3337 = vadd.f32 0.0, %v3336
    %v3338 = vpop.f32.mrf.mxu0
    %3339 = vdwg.mxu0
    %3340 = vrot.lane.b32.xlu0 %v2429, 112
    %v3341 = vpop.permute.xlu0 %3340
    %v3344 = vsel %vm432, %v3263, 0
    %3346 = vmatprep.subr.mxu0 0.0
    %3347 = vmatpush1.msra.mxu0 0.0
    %3348 = vmatprep.subr.mxu0 0.0
    %3349 = vmatpush1.msra.mxu0 0.0
    %3350 = vmatprep.subr.mxu0 0.0
    %3351 = vmatpush1.msra.mxu0 0.0
    %3352 = vmatprep.subr.mxu0 0.0
    %3353 = vmatpush1.msra.mxu0 0.0
    %3354 = vmatprep.subr.mxu0 0.0
    %3355 = vmatpush1.msra.mxu0 0.0
    %3356 = vmatprep.subr.mxu0 0.0
    %3357 = vmatpush1.msra.mxu0 0.0
    %3358 = vmatprep.subr.mxu0 0.0
    %3359 = vmatpush1.msra.mxu0 0.0
    %3360 = vmatprep.subr.mxu0 0.0
    %3361 = vmatpush1.msra.mxu0 0.0
    %3362 = vmatprep.subr.mxu0 0.0
    %3363 = vmatpush1.msra.mxu0 0.0
    %3364 = vmatprep.subr.mxu0 0.0
    %3365 = vmatpush1.msra.mxu0 0.0
    %3366 = vmatprep.subr.mxu0 0.0
    %3367 = vmatpush1.msra.mxu0 0.0
    %3368 = vmatprep.subr.mxu0 0.0
    %3369 = vmatpush1.msra.mxu0 0.0
    %3370 = vmatprep.subr.mxu0 0.0
    %3371 = vmatpush1.msra.mxu0 0.0
    %3372 = vmatprep.subr.mxu0 0.0
    %3373 = vmatpush1.msra.mxu0 0.0
    %3374 = vmatprep.subr.mxu0 0.0
    %3375 = vmatpush1.msra.mxu0 0.0
    %3376 = vmatprep.subr.mxu0 0.0
    %3377 = vmatpush1.msra.mxu0 %v3341
    %3378 = vmatprep.subr.mxu0 0.0
    %3379 = vmatpush2.msra.mxu0 0.0
    %3380 = vmatprep.subr.mxu0 0.0
    %3381 = vmatpush2.msra.mxu0 0.0
    %3382 = vmatprep.subr.mxu0 0.0
    %3383 = vmatpush2.msra.mxu0 0.0
    %3384 = vmatprep.subr.mxu0 0.0
    %3385 = vmatpush2.msra.mxu0 0.0
    %3386 = vmatprep.subr.mxu0 0.0
    %3387 = vmatpush2.msra.mxu0 0.0
    %3388 = vmatprep.subr.mxu0 0.0
    %3389 = vmatpush2.msra.mxu0 0.0
    %3390 = vmatprep.subr.mxu0 0.0
    %3391 = vmatpush2.msra.mxu0 0.0
    %3392 = vmatprep.subr.mxu0 0.0
    %3393 = vmatpush2.msra.mxu0 0.0
    %3394 = vmatprep.subr.mxu0 0.0
    %3395 = vmatpush2.msra.mxu0 0.0
    %3396 = vmatprep.subr.mxu0 0.0
    %3397 = vmatpush2.msra.mxu0 0.0
    %3398 = vmatprep.subr.mxu0 0.0
    %3399 = vmatpush2.msra.mxu0 0.0
    %3400 = vmatprep.subr.mxu0 0.0
    %3401 = vmatpush2.msra.mxu0 0.0
    %3402 = vmatprep.subr.mxu0 0.0
    %3403 = vmatpush2.msra.mxu0 0.0
    %3404 = vmatprep.subr.mxu0 0.0
    %3405 = vmatpush2.msra.mxu0 0.0
    %3406 = vmatprep.subr.mxu0 0.0
    %3407 = vmatpush2.msra.mxu0 0.0
    %3408 = vmatprep.subr.mxu0 0.0
    %3409 = vmatpush2.msra.mxu0 0.0
    %3410 = vmatprep.mubr.f32.mxu0 0.0
    %3411 = vmatmul.mubr.f32.gmra.mxu0 %v3344
    %v3412 = vpop.f32.mrf.mxu0
    %v3413 = vadd.f32 0.0, %v3412
    %v3414 = vpop.f32.mrf.mxu0
    %3415 = vdwg.mxu0
    %3416 = vrot.lane.b32.xlu0 %v2432, 104
    %v3417 = vpop.permute.xlu0 %3416
    %3418 = vrot.lane.b32.xlu0 %v2336, 104
    %v3419 = vpop.permute.xlu0 %3418
    %v3420 = vsel %vm432, %v3417, 0
    %v3422 = vsel %vm432, %v3419, 0
    %3424 = vmatprep.subr.mxu0 0.0
    %3425 = vmatpush1.xpose.msra.mxu0 0.0
    %3426 = vmatprep.subr.mxu0 0.0
    %3427 = vmatpush1.xpose.msra.mxu0 0.0
    %3428 = vmatprep.subr.mxu0 0.0
    %3429 = vmatpush1.xpose.msra.mxu0 0.0
    %3430 = vmatprep.subr.mxu0 0.0
    %3431 = vmatpush1.xpose.msra.mxu0 0.0
    %3432 = vmatprep.subr.mxu0 0.0
    %3433 = vmatpush1.xpose.msra.mxu0 0.0
    %3434 = vmatprep.subr.mxu0 0.0
    %3435 = vmatpush1.xpose.msra.mxu0 0.0
    %3436 = vmatprep.subr.mxu0 0.0
    %3437 = vmatpush1.xpose.msra.mxu0 0.0
    %3438 = vmatprep.subr.mxu0 0.0
    %3439 = vmatpush1.xpose.msra.mxu0 0.0
    %3440 = vmatprep.subr.mxu0 0.0
    %3441 = vmatpush1.xpose.msra.mxu0 0.0
    %3442 = vmatprep.subr.mxu0 0.0
    %3443 = vmatpush1.xpose.msra.mxu0 0.0
    %3444 = vmatprep.subr.mxu0 0.0
    %3445 = vmatpush1.xpose.msra.mxu0 0.0
    %3446 = vmatprep.subr.mxu0 0.0
    %3447 = vmatpush1.xpose.msra.mxu0 0.0
    %3448 = vmatprep.subr.mxu0 0.0
    %3449 = vmatpush1.xpose.msra.mxu0 0.0
    %3450 = vmatprep.subr.mxu0 0.0
    %3451 = vmatpush1.xpose.msra.mxu0 0.0
    %3452 = vmatprep.subr.mxu0 0.0
    %3453 = vmatpush1.xpose.msra.mxu0 0.0
    %3454 = vmatprep.subr.mxu0 0.0
    %3455 = vmatpush1.xpose.msra.mxu0 %v3422
    %3456 = vmatprep.subr.mxu0 0.0
    %3457 = vmatpush2.xpose.msra.mxu0 0.0
    %3458 = vmatprep.subr.mxu0 0.0
    %3459 = vmatpush2.xpose.msra.mxu0 0.0
    %3460 = vmatprep.subr.mxu0 0.0
    %3461 = vmatpush2.xpose.msra.mxu0 0.0
    %3462 = vmatprep.subr.mxu0 0.0
    %3463 = vmatpush2.xpose.msra.mxu0 0.0
    %3464 = vmatprep.subr.mxu0 0.0
    %3465 = vmatpush2.xpose.msra.mxu0 0.0
    %3466 = vmatprep.subr.mxu0 0.0
    %3467 = vmatpush2.xpose.msra.mxu0 0.0
    %3468 = vmatprep.subr.mxu0 0.0
    %3469 = vmatpush2.xpose.msra.mxu0 0.0
    %3470 = vmatprep.subr.mxu0 0.0
    %3471 = vmatpush2.xpose.msra.mxu0 0.0
    %3472 = vmatprep.subr.mxu0 0.0
    %3473 = vmatpush2.xpose.msra.mxu0 0.0
    %3474 = vmatprep.subr.mxu0 0.0
    %3475 = vmatpush2.xpose.msra.mxu0 0.0
    %3476 = vmatprep.subr.mxu0 0.0
    %3477 = vmatpush2.xpose.msra.mxu0 0.0
    %3478 = vmatprep.subr.mxu0 0.0
    %3479 = vmatpush2.xpose.msra.mxu0 0.0
    %3480 = vmatprep.subr.mxu0 0.0
    %3481 = vmatpush2.xpose.msra.mxu0 0.0
    %3482 = vmatprep.subr.mxu0 0.0
    %3483 = vmatpush2.xpose.msra.mxu0 0.0
    %3484 = vmatprep.subr.mxu0 0.0
    %3485 = vmatpush2.xpose.msra.mxu0 0.0
    %3486 = vmatprep.subr.mxu0 0.0
    %3487 = vmatpush2.xpose.msra.mxu0 0.0
    %3488 = vmatprep.mubr.f32.mxu0 0.0
    %3489 = vmatmul.mubr.f32.gmra.mxu0 %v3420
    %v3490 = vpop.f32.mrf.mxu0
    %v3491 = vadd.f32 0.0, %v3490
    %v3492 = vpop.f32.mrf.mxu0
    %3493 = vdwg.mxu0
    %3494 = vrot.lane.b32.xlu0 %v2433, 104
    %v3495 = vpop.permute.xlu0 %3494
    %3496 = vrot.lane.b32.xlu0 %v2341, 104
    %v3497 = vpop.permute.xlu0 %3496
    %v3498 = vsel %vm432, %v3495, 0
    %v3500 = vsel %vm432, %v3497, 0
    %3502 = vmatprep.subr.mxu0 0.0
    %3503 = vmatpush1.xpose.msra.mxu0 0.0
    %3504 = vmatprep.subr.mxu0 0.0
    %3505 = vmatpush1.xpose.msra.mxu0 0.0
    %3506 = vmatprep.subr.mxu0 0.0
    %3507 = vmatpush1.xpose.msra.mxu0 0.0
    %3508 = vmatprep.subr.mxu0 0.0
    %3509 = vmatpush1.xpose.msra.mxu0 0.0
    %3510 = vmatprep.subr.mxu0 0.0
    %3511 = vmatpush1.xpose.msra.mxu0 0.0
    %3512 = vmatprep.subr.mxu0 0.0
    %3513 = vmatpush1.xpose.msra.mxu0 0.0
    %3514 = vmatprep.subr.mxu0 0.0
    %3515 = vmatpush1.xpose.msra.mxu0 0.0
    %3516 = vmatprep.subr.mxu0 0.0
    %3517 = vmatpush1.xpose.msra.mxu0 0.0
    %3518 = vmatprep.subr.mxu0 0.0
    %3519 = vmatpush1.xpose.msra.mxu0 0.0
    %3520 = vmatprep.subr.mxu0 0.0
    %3521 = vmatpush1.xpose.msra.mxu0 0.0
    %3522 = vmatprep.subr.mxu0 0.0
    %3523 = vmatpush1.xpose.msra.mxu0 0.0
    %3524 = vmatprep.subr.mxu0 0.0
    %3525 = vmatpush1.xpose.msra.mxu0 0.0
    %3526 = vmatprep.subr.mxu0 0.0
    %3527 = vmatpush1.xpose.msra.mxu0 0.0
    %3528 = vmatprep.subr.mxu0 0.0
    %3529 = vmatpush1.xpose.msra.mxu0 0.0
    %3530 = vmatprep.subr.mxu0 0.0
    %3531 = vmatpush1.xpose.msra.mxu0 0.0
    %3532 = vmatprep.subr.mxu0 0.0
    %3533 = vmatpush1.xpose.msra.mxu0 %v3500
    %3534 = vmatprep.subr.mxu0 0.0
    %3535 = vmatpush2.xpose.msra.mxu0 0.0
    %3536 = vmatprep.subr.mxu0 0.0
    %3537 = vmatpush2.xpose.msra.mxu0 0.0
    %3538 = vmatprep.subr.mxu0 0.0
    %3539 = vmatpush2.xpose.msra.mxu0 0.0
    %3540 = vmatprep.subr.mxu0 0.0
    %3541 = vmatpush2.xpose.msra.mxu0 0.0
    %3542 = vmatprep.subr.mxu0 0.0
    %3543 = vmatpush2.xpose.msra.mxu0 0.0
    %3544 = vmatprep.subr.mxu0 0.0
    %3545 = vmatpush2.xpose.msra.mxu0 0.0
    %3546 = vmatprep.subr.mxu0 0.0
    %3547 = vmatpush2.xpose.msra.mxu0 0.0
    %3548 = vmatprep.subr.mxu0 0.0
    %3549 = vmatpush2.xpose.msra.mxu0 0.0
    %3550 = vmatprep.subr.mxu0 0.0
    %3551 = vmatpush2.xpose.msra.mxu0 0.0
    %3552 = vmatprep.subr.mxu0 0.0
    %3553 = vmatpush2.xpose.msra.mxu0 0.0
    %3554 = vmatprep.subr.mxu0 0.0
    %3555 = vmatpush2.xpose.msra.mxu0 0.0
    %3556 = vmatprep.subr.mxu0 0.0
    %3557 = vmatpush2.xpose.msra.mxu0 0.0
    %3558 = vmatprep.subr.mxu0 0.0
    %3559 = vmatpush2.xpose.msra.mxu0 0.0
    %3560 = vmatprep.subr.mxu0 0.0
    %3561 = vmatpush2.xpose.msra.mxu0 0.0
    %3562 = vmatprep.subr.mxu0 0.0
    %3563 = vmatpush2.xpose.msra.mxu0 0.0
    %3564 = vmatprep.subr.mxu0 0.0
    %3565 = vmatpush2.xpose.msra.mxu0 0.0
    %3566 = vmatprep.mubr.f32.mxu0 0.0
    %3567 = vmatmul.mubr.f32.gmra.mxu0 %v3498
    %v3568 = vpop.f32.mrf.mxu0
    %v3569 = vadd.f32 0.0, %v3568
    %v3570 = vpop.f32.mrf.mxu0
    %3571 = vdwg.mxu0
    %v3572 = vsel %vm432, %v3491, -inf
    %3573 = vmax.xlane.f32.xlu0 %v3572
    %v3574 = vpop.xlane.xlu0 %3573
    %v3575 = vsel %vm432, %v3569, -inf
    %3576 = vmax.xlane.f32.xlu0 %v3575
    %v3577 = vpop.xlane.xlu0 %3576
    %v3578 = vsub.f32 %v3491, %v3574
    %v3579 = vsub.f32 %v3569, %v3577
    %v3580 = vmul.f32 %v3578, 1.442695
    %v3581 = vpow.pop %v3580
    %v3582 = vmul.f32 %v3579, 1.442695
    %v3583 = vpow.pop %v3582
    %v3584 = vsel %vm432, %v3581, 0.0
    %3585 = vadd.xlane.f32.xlu0 %v3584
    %v3586 = vpop.xlane.xlu0 %3585
    %v3587 = vsel %vm432, %v3583, 0.0
    %3588 = vadd.xlane.f32.xlu0 %v3587
    %v3589 = vpop.xlane.xlu0 %3588
    %v3590 = vrcp.pop %v3586
    %v3591 = vrcp.pop %v3589
    %v3592 = vmul.f32 %v3581, %v3590
    %v3593 = vmul.f32 %v3583, %v3591
    %3594 = vrot.lane.b32.xlu0 %v2424, 104
    %v3595 = vpop.permute.xlu0 %3594
    %v3598 = vsel %vm432, %v3592, 0
    %3600 = vmatprep.subr.mxu0 0.0
    %3601 = vmatpush1.msra.mxu0 0.0
    %3602 = vmatprep.subr.mxu0 0.0
    %3603 = vmatpush1.msra.mxu0 0.0
    %3604 = vmatprep.subr.mxu0 0.0
    %3605 = vmatpush1.msra.mxu0 0.0
    %3606 = vmatprep.subr.mxu0 0.0
    %3607 = vmatpush1.msra.mxu0 0.0
    %3608 = vmatprep.subr.mxu0 0.0
    %3609 = vmatpush1.msra.mxu0 0.0
    %3610 = vmatprep.subr.mxu0 0.0
    %3611 = vmatpush1.msra.mxu0 0.0
    %3612 = vmatprep.subr.mxu0 0.0
    %3613 = vmatpush1.msra.mxu0 0.0
    %3614 = vmatprep.subr.mxu0 0.0
    %3615 = vmatpush1.msra.mxu0 0.0
    %3616 = vmatprep.subr.mxu0 0.0
    %3617 = vmatpush1.msra.mxu0 0.0
    %3618 = vmatprep.subr.mxu0 0.0
    %3619 = vmatpush1.msra.mxu0 0.0
    %3620 = vmatprep.subr.mxu0 0.0
    %3621 = vmatpush1.msra.mxu0 0.0
    %3622 = vmatprep.subr.mxu0 0.0
    %3623 = vmatpush1.msra.mxu0 0.0
    %3624 = vmatprep.subr.mxu0 0.0
    %3625 = vmatpush1.msra.mxu0 0.0
    %3626 = vmatprep.subr.mxu0 0.0
    %3627 = vmatpush1.msra.mxu0 0.0
    %3628 = vmatprep.subr.mxu0 0.0
    %3629 = vmatpush1.msra.mxu0 0.0
    %3630 = vmatprep.subr.mxu0 0.0
    %3631 = vmatpush1.msra.mxu0 %v3595
    %3632 = vmatprep.subr.mxu0 0.0
    %3633 = vmatpush2.msra.mxu0 0.0
    %3634 = vmatprep.subr.mxu0 0.0
    %3635 = vmatpush2.msra.mxu0 0.0
    %3636 = vmatprep.subr.mxu0 0.0
    %3637 = vmatpush2.msra.mxu0 0.0
    %3638 = vmatprep.subr.mxu0 0.0
    %3639 = vmatpush2.msra.mxu0 0.0
    %3640 = vmatprep.subr.mxu0 0.0
    %3641 = vmatpush2.msra.mxu0 0.0
    %3642 = vmatprep.subr.mxu0 0.0
    %3643 = vmatpush2.msra.mxu0 0.0
    %3644 = vmatprep.subr.mxu0 0.0
    %3645 = vmatpush2.msra.mxu0 0.0
    %3646 = vmatprep.subr.mxu0 0.0
    %3647 = vmatpush2.msra.mxu0 0.0
    %3648 = vmatprep.subr.mxu0 0.0
    %3649 = vmatpush2.msra.mxu0 0.0
    %3650 = vmatprep.subr.mxu0 0.0
    %3651 = vmatpush2.msra.mxu0 0.0
    %3652 = vmatprep.subr.mxu0 0.0
    %3653 = vmatpush2.msra.mxu0 0.0
    %3654 = vmatprep.subr.mxu0 0.0
    %3655 = vmatpush2.msra.mxu0 0.0
    %3656 = vmatprep.subr.mxu0 0.0
    %3657 = vmatpush2.msra.mxu0 0.0
    %3658 = vmatprep.subr.mxu0 0.0
    %3659 = vmatpush2.msra.mxu0 0.0
    %3660 = vmatprep.subr.mxu0 0.0
    %3661 = vmatpush2.msra.mxu0 0.0
    %3662 = vmatprep.subr.mxu0 0.0
    %3663 = vmatpush2.msra.mxu0 0.0
    %3664 = vmatprep.mubr.f32.mxu0 0.0
    %3665 = vmatmul.mubr.f32.gmra.mxu0 %v3598
    %v3666 = vpop.f32.mrf.mxu0
    %v3667 = vadd.f32 0.0, %v3666
    %v3668 = vpop.f32.mrf.mxu0
    %3669 = vdwg.mxu0
    %3670 = vrot.lane.b32.xlu0 %v2429, 104
    %v3671 = vpop.permute.xlu0 %3670
    %v3674 = vsel %vm432, %v3593, 0
    %3676 = vmatprep.subr.mxu0 0.0
    %3677 = vmatpush1.msra.mxu0 0.0
    %3678 = vmatprep.subr.mxu0 0.0
    %3679 = vmatpush1.msra.mxu0 0.0
    %3680 = vmatprep.subr.mxu0 0.0
    %3681 = vmatpush1.msra.mxu0 0.0
    %3682 = vmatprep.subr.mxu0 0.0
    %3683 = vmatpush1.msra.mxu0 0.0
    %3684 = vmatprep.subr.mxu0 0.0
    %3685 = vmatpush1.msra.mxu0 0.0
    %3686 = vmatprep.subr.mxu0 0.0
    %3687 = vmatpush1.msra.mxu0 0.0
    %3688 = vmatprep.subr.mxu0 0.0
    %3689 = vmatpush1.msra.mxu0 0.0
    %3690 = vmatprep.subr.mxu0 0.0
    %3691 = vmatpush1.msra.mxu0 0.0
    %3692 = vmatprep.subr.mxu0 0.0
    %3693 = vmatpush1.msra.mxu0 0.0
    %3694 = vmatprep.subr.mxu0 0.0
    %3695 = vmatpush1.msra.mxu0 0.0
    %3696 = vmatprep.subr.mxu0 0.0
    %3697 = vmatpush1.msra.mxu0 0.0
    %3698 = vmatprep.subr.mxu0 0.0
    %3699 = vmatpush1.msra.mxu0 0.0
    %3700 = vmatprep.subr.mxu0 0.0
    %3701 = vmatpush1.msra.mxu0 0.0
    %3702 = vmatprep.subr.mxu0 0.0
    %3703 = vmatpush1.msra.mxu0 0.0
    %3704 = vmatprep.subr.mxu0 0.0
    %3705 = vmatpush1.msra.mxu0 0.0
    %3706 = vmatprep.subr.mxu0 0.0
    %3707 = vmatpush1.msra.mxu0 %v3671
    %3708 = vmatprep.subr.mxu0 0.0
    %3709 = vmatpush2.msra.mxu0 0.0
    %3710 = vmatprep.subr.mxu0 0.0
    %3711 = vmatpush2.msra.mxu0 0.0
    %3712 = vmatprep.subr.mxu0 0.0
    %3713 = vmatpush2.msra.mxu0 0.0
    %3714 = vmatprep.subr.mxu0 0.0
    %3715 = vmatpush2.msra.mxu0 0.0
    %3716 = vmatprep.subr.mxu0 0.0
    %3717 = vmatpush2.msra.mxu0 0.0
    %3718 = vmatprep.subr.mxu0 0.0
    %3719 = vmatpush2.msra.mxu0 0.0
    %3720 = vmatprep.subr.mxu0 0.0
    %3721 = vmatpush2.msra.mxu0 0.0
    %3722 = vmatprep.subr.mxu0 0.0
    %3723 = vmatpush2.msra.mxu0 0.0
    %3724 = vmatprep.subr.mxu0 0.0
    %3725 = vmatpush2.msra.mxu0 0.0
    %3726 = vmatprep.subr.mxu0 0.0
    %3727 = vmatpush2.msra.mxu0 0.0
    %3728 = vmatprep.subr.mxu0 0.0
    %3729 = vmatpush2.msra.mxu0 0.0
    %3730 = vmatprep.subr.mxu0 0.0
    %3731 = vmatpush2.msra.mxu0 0.0
    %3732 = vmatprep.subr.mxu0 0.0
    %3733 = vmatpush2.msra.mxu0 0.0
    %3734 = vmatprep.subr.mxu0 0.0
    %3735 = vmatpush2.msra.mxu0 0.0
    %3736 = vmatprep.subr.mxu0 0.0
    %3737 = vmatpush2.msra.mxu0 0.0
    %3738 = vmatprep.subr.mxu0 0.0
    %3739 = vmatpush2.msra.mxu0 0.0
    %3740 = vmatprep.mubr.f32.mxu0 0.0
    %3741 = vmatmul.mubr.f32.gmra.mxu0 %v3674
    %v3742 = vpop.f32.mrf.mxu0
    %v3743 = vadd.f32 0.0, %v3742
    %v3744 = vpop.f32.mrf.mxu0
    %3745 = vdwg.mxu0
    %3748 = vrot.lane.b32.xlu0 %v3006, 8
    %v3749 = vpop.permute.xlu0 %3748
    %3750 = vrot.lane.b32.xlu0 %v3083, 8
    %v3751 = vpop.permute.xlu0 %3750
    %3756 = vrot.lane.b32.xlu0 %v3337, 16
    %v3757 = vpop.permute.xlu0 %3756
    %3758 = vrot.lane.b32.xlu0 %v3413, 16
    %v3759 = vpop.permute.xlu0 %3758
    %3764 = vrot.lane.b32.xlu0 %v3667, 24
    %v3765 = vpop.permute.xlu0 %3764
    %3766 = vrot.lane.b32.xlu0 %v3743, 24
    %v3767 = vpop.permute.xlu0 %3766
    %v3770 = vsel %vm432, %v2678, %v3749
    %v3771 = vsel %vm432, %v2751, %v3751
    %v3772 = vsel %vm1771, %v3770, %v3757
    %v3773 = vsel %vm1771, %v3771, %v3759
    %v3774 = vsel %vm1774, %v3772, %v3765
    %v3775 = vsel %vm1774, %v3773, %v3767
    %s3776 = scalar_lea.vmem [#allocation7], 32
    %v3777 = vld [vmem:[%s3776] sm:$0xff]
    %v3778 = vld [vmem:[%s3776 + $0x8] sm:$0xff]
    %v3779 = vld [vmem:[%s3776 + $0x10] sm:$0xff]
    %v3780 = vld [vmem:[%s3776 + $0x18] sm:$0xff]
    %s3781 = scalar_lea.vmem %s10, 1
    %v3782 = vld [vmem:[%s3781] sm:$0x1]
    %v3784 = vlaneseq
    %v3785 = vshrl.u32 %v3784, 7
    %v3786 = vsub.s32 0, %v3785
    %v3787 = vrot.slane %v3782, %v3786
    %v3790 = vsel %vm122, %v3774, 0
    %v3793 = vsel %vm122, %v3775, 0
    %3795 = vmatprep.subr.mxu0 0.0
    %3796 = vmatpush1.msra.mxu0 0.0
    %3797 = vmatprep.subr.mxu0 0.0
    %3798 = vmatpush1.msra.mxu0 0.0
    %3799 = vmatprep.subr.mxu0 0.0
    %3800 = vmatpush1.msra.mxu0 0.0
    %3801 = vmatprep.subr.mxu0 0.0
    %3802 = vmatpush1.msra.mxu0 0.0
    %3803 = vmatprep.subr.mxu0 0.0
    %3804 = vmatpush1.msra.mxu0 0.0
    %3805 = vmatprep.subr.mxu0 0.0
    %3806 = vmatpush1.msra.mxu0 0.0
    %3807 = vmatprep.subr.mxu0 0.0
    %3808 = vmatpush1.msra.mxu0 0.0
    %3809 = vmatprep.subr.mxu0 0.0
    %3810 = vmatpush1.msra.mxu0 0.0
    %3811 = vmatprep.subr.mxu0 0.0
    %3812 = vmatpush1.msra.mxu0 0.0
    %3813 = vmatprep.subr.mxu0 0.0
    %3814 = vmatpush1.msra.mxu0 0.0
    %3815 = vmatprep.subr.mxu0 0.0
    %3816 = vmatpush1.msra.mxu0 0.0
    %3817 = vmatprep.subr.mxu0 0.0
    %3818 = vmatpush1.msra.mxu0 0.0
    %3819 = vmatprep.subr.mxu0 0.0
    %3820 = vmatpush1.msra.mxu0 %v3780
    %3821 = vmatprep.subr.mxu0 0.0
    %3822 = vmatpush1.msra.mxu0 %v3779
    %3823 = vmatprep.subr.mxu0 0.0
    %3824 = vmatpush1.msra.mxu0 %v3778
    %3825 = vmatprep.subr.mxu0 0.0
    %3826 = vmatpush1.msra.mxu0 %v3777
    %3827 = vmatprep.subr.mxu0 0.0
    %3828 = vmatpush2.msra.mxu0 0.0
    %3829 = vmatprep.subr.mxu0 0.0
    %3830 = vmatpush2.msra.mxu0 0.0
    %3831 = vmatprep.subr.mxu0 0.0
    %3832 = vmatpush2.msra.mxu0 0.0
    %3833 = vmatprep.subr.mxu0 0.0
    %3834 = vmatpush2.msra.mxu0 0.0
    %3835 = vmatprep.subr.mxu0 0.0
    %3836 = vmatpush2.msra.mxu0 0.0
    %3837 = vmatprep.subr.mxu0 0.0
    %3838 = vmatpush2.msra.mxu0 0.0
    %3839 = vmatprep.subr.mxu0 0.0
    %3840 = vmatpush2.msra.mxu0 0.0
    %3841 = vmatprep.subr.mxu0 0.0
    %3842 = vmatpush2.msra.mxu0 0.0
    %3843 = vmatprep.subr.mxu0 0.0
    %3844 = vmatpush2.msra.mxu0 0.0
    %3845 = vmatprep.subr.mxu0 0.0
    %3846 = vmatpush2.msra.mxu0 0.0
    %3847 = vmatprep.subr.mxu0 0.0
    %3848 = vmatpush2.msra.mxu0 0.0
    %3849 = vmatprep.subr.mxu0 0.0
    %3850 = vmatpush2.msra.mxu0 0.0
    %3851 = vmatprep.subr.mxu0 0.0
    %3852 = vmatpush2.msra.mxu0 0.0
    %3853 = vmatprep.subr.mxu0 0.0
    %3854 = vmatpush2.msra.mxu0 0.0
    %3855 = vmatprep.subr.mxu0 0.0
    %3856 = vmatpush2.msra.mxu0 0.0
    %3857 = vmatprep.subr.mxu0 0.0
    %3858 = vmatpush2.msra.mxu0 0.0
    %3859 = vmatprep.mubr.f32.mxu0 0.0
    %3860 = vmatmul.mubr.f32.gmra.mxu0 %v3790
    %v3861 = vpop.f32.mrf.mxu0
    %v3862 = vadd.f32 %v3787, %v3861
    %v3863 = vpop.f32.mrf.mxu0
    %3864 = vmatprep.mubr.f32.mxu0 0.0
    %3865 = vmatmul.mubr.f32.gmra.mxu0 %v3793
    %v3866 = vpop.f32.mrf.mxu0
    %v3867 = vadd.f32 %v3787, %v3866
    %v3868 = vpop.f32.mrf.mxu0
    %3869 = vdwg.mxu0
    %v3870 = vadd.f32 %v2114, %v3862
    %v3871 = vadd.f32 %v2115, %v3867
    %s3872 = scalar_lea.vmem %s11, 1
    %v3873 = vld [vmem:[%s3872] sm:$0x1]
    %s3874 = scalar_lea.vmem %s12, 1
    %v3875 = vld [vmem:[%s3874] sm:$0x1]
    %v3876 = vsel %vm122, %v3870, 0.0
    %3877 = vadd.xlane.f32.xlu0 %v3876
    %v3878 = vpop.xlane.xlu0 %3877
    %v3879 = vsel %vm122, %v3871, 0.0
    %3880 = vadd.xlane.f32.xlu0 %v3879
    %v3881 = vpop.xlane.xlu0 %3880
    %v3882 = vmul.f32 %v3878, %v129
    %v3883 = vmul.f32 %v3881, %v129
    %v3884 = vsub.f32 %v3870, %v3882
    %v3885 = vsub.f32 %v3871, %v3883
    %v3886 = vmul.f32 %v3884, %v3884
    %v3887 = vmul.f32 %v3885, %v3885
    %v3888 = vsel %vm122, %v3886, 0.0
    %3889 = vadd.xlane.f32.xlu0 %v3888
    %v3890 = vpop.xlane.xlu0 %3889
    %v3891 = vsel %vm122, %v3887, 0.0
    %3892 = vadd.xlane.f32.xlu0 %v3891
    %v3893 = vpop.xlane.xlu0 %3892
    %v3894 = vmul.f32 %v3890, %v129
    %v3895 = vmul.f32 %v3893, %v129
    %v3896 = vadd.f32 %v3894, 1e-06
    %v3897 = vadd.f32 %v3895, 1e-06
    %v3898 = vrsqrt.pop %v3896
    %v3899 = vrsqrt.pop %v3897
    %v3900 = vmul.f32 %v3884, %v3898
    %v3901 = vmul.f32 %v3885, %v3899
    %v3903 = vlaneseq
    %v3904 = vshrl.u32 %v3903, 7
    %v3905 = vsub.s32 0, %v3904
    %v3906 = vrot.slane %v3873, %v3905
    %v3908 = vmul.f32 %v3900, %v3906
    %v3909 = vmul.f32 %v3901, %v3906
    %v3911 = vlaneseq
    %v3912 = vshrl.u32 %v3911, 7
    %v3913 = vsub.s32 0, %v3912
    %v3914 = vrot.slane %v3875, %v3913
    %v3916 = vadd.f32 %v3908, %v3914
    %v3917 = vadd.f32 %v3909, %v3914
    %s3918 = scalar_lea.vmem [#allocation8], 32
    %v3919 = vld [vmem:[%s3918] sm:$0xff]
    %v3920 = vld [vmem:[%s3918 + $0x8] sm:$0xff]
    %v3921 = vld [vmem:[%s3918 + $0x10] sm:$0xff]
    %v3922 = vld [vmem:[%s3918 + $0x18] sm:$0xff]
    %s3923 = scalar_lea.vmem %s14, 1
    %v3924 = vld [vmem:[%s3923] sm:$0x1]
    %v3926 = vlaneseq
    %v3927 = vshrl.u32 %v3926, 7
    %v3928 = vsub.s32 0, %v3927
    %v3929 = vrot.slane %v3924, %v3928
    %v3932 = vsel %vm122, %v3916, 0
    %v3935 = vsel %vm122, %v3917, 0
    %3937 = vmatprep.subr.mxu0 0.0
    %3938 = vmatpush1.msra.mxu0 0.0
    %3939 = vmatprep.subr.mxu0 0.0
    %3940 = vmatpush1.msra.mxu0 0.0
    %3941 = vmatprep.subr.mxu0 0.0
    %3942 = vmatpush1.msra.mxu0 0.0
    %3943 = vmatprep.subr.mxu0 0.0
    %3944 = vmatpush1.msra.mxu0 0.0
    %3945 = vmatprep.subr.mxu0 0.0
    %3946 = vmatpush1.msra.mxu0 0.0
    %3947 = vmatprep.subr.mxu0 0.0
    %3948 = vmatpush1.msra.mxu0 0.0
    %3949 = vmatprep.subr.mxu0 0.0
    %3950 = vmatpush1.msra.mxu0 0.0
    %3951 = vmatprep.subr.mxu0 0.0
    %3952 = vmatpush1.msra.mxu0 0.0
    %3953 = vmatprep.subr.mxu0 0.0
    %3954 = vmatpush1.msra.mxu0 0.0
    %3955 = vmatprep.subr.mxu0 0.0
    %3956 = vmatpush1.msra.mxu0 0.0
    %3957 = vmatprep.subr.mxu0 0.0
    %3958 = vmatpush1.msra.mxu0 0.0
    %3959 = vmatprep.subr.mxu0 0.0
    %3960 = vmatpush1.msra.mxu0 0.0
    %3961 = vmatprep.subr.mxu0 0.0
    %3962 = vmatpush1.msra.mxu0 %v3922
    %3963 = vmatprep.subr.mxu0 0.0
    %3964 = vmatpush1.msra.mxu0 %v3921
    %3965 = vmatprep.subr.mxu0 0.0
    %3966 = vmatpush1.msra.mxu0 %v3920
    %3967 = vmatprep.subr.mxu0 0.0
    %3968 = vmatpush1.msra.mxu0 %v3919
    %3969 = vmatprep.subr.mxu0 0.0
    %3970 = vmatpush2.msra.mxu0 0.0
    %3971 = vmatprep.subr.mxu0 0.0
    %3972 = vmatpush2.msra.mxu0 0.0
    %3973 = vmatprep.subr.mxu0 0.0
    %3974 = vmatpush2.msra.mxu0 0.0
    %3975 = vmatprep.subr.mxu0 0.0
    %3976 = vmatpush2.msra.mxu0 0.0
    %3977 = vmatprep.subr.mxu0 0.0
    %3978 = vmatpush2.msra.mxu0 0.0
    %3979 = vmatprep.subr.mxu0 0.0
    %3980 = vmatpush2.msra.mxu0 0.0
    %3981 = vmatprep.subr.mxu0 0.0
    %3982 = vmatpush2.msra.mxu0 0.0
    %3983 = vmatprep.subr.mxu0 0.0
    %3984 = vmatpush2.msra.mxu0 0.0
    %3985 = vmatprep.subr.mxu0 0.0
    %3986 = vmatpush2.msra.mxu0 0.0
    %3987 = vmatprep.subr.mxu0 0.0
    %3988 = vmatpush2.msra.mxu0 0.0
    %3989 = vmatprep.subr.mxu0 0.0
    %3990 = vmatpush2.msra.mxu0 0.0
    %3991 = vmatprep.subr.mxu0 0.0
    %3992 = vmatpush2.msra.mxu0 0.0
    %3993 = vmatprep.subr.mxu0 0.0
    %3994 = vmatpush2.msra.mxu0 0.0
    %3995 = vmatprep.subr.mxu0 0.0
    %3996 = vmatpush2.msra.mxu0 0.0
    %3997 = vmatprep.subr.mxu0 0.0
    %3998 = vmatpush2.msra.mxu0 0.0
    %3999 = vmatprep.subr.mxu0 0.0
    %4000 = vmatpush2.msra.mxu0 0.0
    %4001 = vmatprep.mubr.f32.mxu0 0.0
    %4002 = vmatmul.mubr.f32.gmra.mxu0 %v3932
    %v4003 = vpop.f32.mrf.mxu0
    %v4004 = vadd.f32 %v3929, %v4003
    %v4005 = vpop.f32.mrf.mxu0
    %4006 = vmatprep.mubr.f32.mxu0 0.0
    %4007 = vmatmul.mubr.f32.gmra.mxu0 %v3935
    %v4008 = vpop.f32.mrf.mxu0
    %v4009 = vadd.f32 %v3929, %v4008
    %v4010 = vpop.f32.mrf.mxu0
    %4011 = vdwg.mxu0
    %v4012 = vmul.f32 %v4004, 0.5
    %v4013 = vmul.f32 %v4009, 0.5
    %v4014 = vmul.f32 %v4004, 0.70710677
    %v4015 = vmul.f32 %v4009, 0.70710677
    %v4016 = verf.f32.pop %v4014
    %v4017 = verf.f32.pop %v4015
    %v4018 = vadd.f32 %v4016, 1.0
    %v4019 = vadd.f32 %v4017, 1.0
    %v4020 = vmul.f32 %v4012, %v4018
    %v4021 = vmul.f32 %v4013, %v4019
    %s4022 = scalar_lea.vmem %s15, 64
    %v4023 = vld [vmem:[%s4022] sm:$0xff]
    %v4024 = vld [vmem:[%s4022 + $0x8] sm:$0xff]
    %v4025 = vld [vmem:[%s4022 + $0x10] sm:$0xff]
    %v4026 = vld [vmem:[%s4022 + $0x18] sm:$0xff]
    %v4027 = vld [vmem:[%s4022 + $0x20] sm:$0xff]
    %v4028 = vld [vmem:[%s4022 + $0x28] sm:$0xff]
    %v4029 = vld [vmem:[%s4022 + $0x30] sm:$0xff]
    %v4030 = vld [vmem:[%s4022 + $0x38] sm:$0xff]
    %s4031 = scalar_lea.vmem %s16, 1
    %v4032 = vld [vmem:[%s4031] sm:$0x1]
    %v4034 = vlaneseq
    %v4035 = vshrl.u32 %v4034, 7
    %v4036 = vsub.s32 0, %v4035
    %v4037 = vrot.slane %v4032, %v4036
    %v4040 = vsel %vm2032, %v4020, 0
    %v4043 = vsel %vm2032, %v4021, 0
    %4045 = vmatprep.subr.mxu0 0.0
    %4046 = vmatpush1.msra.mxu0 0.0
    %4047 = vmatprep.subr.mxu0 0.0
    %4048 = vmatpush1.msra.mxu0 0.0
    %4049 = vmatprep.subr.mxu0 0.0
    %4050 = vmatpush1.msra.mxu0 0.0
    %4051 = vmatprep.subr.mxu0 0.0
    %4052 = vmatpush1.msra.mxu0 0.0
    %4053 = vmatprep.subr.mxu0 0.0
    %4054 = vmatpush1.msra.mxu0 0.0
    %4055 = vmatprep.subr.mxu0 0.0
    %4056 = vmatpush1.msra.mxu0 0.0
    %4057 = vmatprep.subr.mxu0 0.0
    %4058 = vmatpush1.msra.mxu0 0.0
    %4059 = vmatprep.subr.mxu0 0.0
    %4060 = vmatpush1.msra.mxu0 0.0
    %4061 = vmatprep.subr.mxu0 0.0
    %4062 = vmatpush1.msra.mxu0 %v4030
    %4063 = vmatprep.subr.mxu0 0.0
    %4064 = vmatpush1.msra.mxu0 %v4029
    %4065 = vmatprep.subr.mxu0 0.0
    %4066 = vmatpush1.msra.mxu0 %v4028
    %4067 = vmatprep.subr.mxu0 0.0
    %4068 = vmatpush1.msra.mxu0 %v4027
    %4069 = vmatprep.subr.mxu0 0.0
    %4070 = vmatpush1.msra.mxu0 %v4026
    %4071 = vmatprep.subr.mxu0 0.0
    %4072 = vmatpush1.msra.mxu0 %v4025
    %4073 = vmatprep.subr.mxu0 0.0
    %4074 = vmatpush1.msra.mxu0 %v4024
    %4075 = vmatprep.subr.mxu0 0.0
    %4076 = vmatpush1.msra.mxu0 %v4023
    %4077 = vmatprep.subr.mxu0 0.0
    %4078 = vmatpush2.msra.mxu0 0.0
    %4079 = vmatprep.subr.mxu0 0.0
    %4080 = vmatpush2.msra.mxu0 0.0
    %4081 = vmatprep.subr.mxu0 0.0
    %4082 = vmatpush2.msra.mxu0 0.0
    %4083 = vmatprep.subr.mxu0 0.0
    %4084 = vmatpush2.msra.mxu0 0.0
    %4085 = vmatprep.subr.mxu0 0.0
    %4086 = vmatpush2.msra.mxu0 0.0
    %4087 = vmatprep.subr.mxu0 0.0
    %4088 = vmatpush2.msra.mxu0 0.0
    %4089 = vmatprep.subr.mxu0 0.0
    %4090 = vmatpush2.msra.mxu0 0.0
    %4091 = vmatprep.subr.mxu0 0.0
    %4092 = vmatpush2.msra.mxu0 0.0
    %4093 = vmatprep.subr.mxu0 0.0
    %4094 = vmatpush2.msra.mxu0 0.0
    %4095 = vmatprep.subr.mxu0 0.0
    %4096 = vmatpush2.msra.mxu0 0.0
    %4097 = vmatprep.subr.mxu0 0.0
    %4098 = vmatpush2.msra.mxu0 0.0
    %4099 = vmatprep.subr.mxu0 0.0
    %4100 = vmatpush2.msra.mxu0 0.0
    %4101 = vmatprep.subr.mxu0 0.0
    %4102 = vmatpush2.msra.mxu0 0.0
    %4103 = vmatprep.subr.mxu0 0.0
    %4104 = vmatpush2.msra.mxu0 0.0
    %4105 = vmatprep.subr.mxu0 0.0
    %4106 = vmatpush2.msra.mxu0 0.0
    %4107 = vmatprep.subr.mxu0 0.0
    %4108 = vmatpush2.msra.mxu0 0.0
    %4109 = vmatprep.mubr.f32.mxu0 0.0
    %4110 = vmatmul.mubr.f32.gmra.mxu0 %v4040
    %v4111 = vpop.f32.mrf.mxu0
    %v4112 = vadd.f32 %v4037, %v4111
    %v4113 = vpop.f32.mrf.mxu0
    %4114 = vmatprep.mubr.f32.mxu0 0.0
    %4115 = vmatmul.mubr.f32.gmra.mxu0 %v4043
    %v4116 = vpop.f32.mrf.mxu0
    %v4117 = vadd.f32 %v4037, %v4116
    %v4118 = vpop.f32.mrf.mxu0
    %4119 = vdwg.mxu0
    %v4120 = vadd.f32 %v3870, %v4112
    %v4121 = vadd.f32 %v3871, %v4117
    %v4122 = vld [vmem:[%s17] sm:$0x1]
    %v4123 = vld [vmem:[%s18] sm:$0x1]
    %v4124 = vsel %vm122, %v4120, 0.0
    %4125 = vadd.xlane.f32.xlu0 %v4124
    %v4126 = vpop.xlane.xlu0 %4125
    %v4127 = vsel %vm122, %v4121, 0.0
    %4128 = vadd.xlane.f32.xlu0 %v4127
    %v4129 = vpop.xlane.xlu0 %4128
    %v4130 = vmul.f32 %v4126, %v129
    %v4131 = vmul.f32 %v4129, %v129
    %v4132 = vsub.f32 %v4120, %v4130
    %v4133 = vsub.f32 %v4121, %v4131
    %v4134 = vmul.f32 %v4132, %v4132
    %v4135 = vmul.f32 %v4133, %v4133
    %v4136 = vsel %vm122, %v4134, 0.0
    %4137 = vadd.xlane.f32.xlu0 %v4136
    %v4138 = vpop.xlane.xlu0 %4137
    %v4139 = vsel %vm122, %v4135, 0.0
    %4140 = vadd.xlane.f32.xlu0 %v4139
    %v4141 = vpop.xlane.xlu0 %4140
    %v4142 = vmul.f32 %v4138, %v129
    %v4143 = vmul.f32 %v4141, %v129
    %v4144 = vadd.f32 %v4142, 1e-06
    %v4145 = vadd.f32 %v4143, 1e-06
    %v4146 = vrsqrt.pop %v4144
    %v4147 = vrsqrt.pop %v4145
    %v4148 = vmul.f32 %v4132, %v4146
    %v4149 = vmul.f32 %v4133, %v4147
    %v4151 = vlaneseq
    %v4152 = vshrl.u32 %v4151, 7
    %v4153 = vsub.s32 0, %v4152
    %v4154 = vrot.slane %v4122, %v4153
    %v4156 = vmul.f32 %v4148, %v4154
    %v4157 = vmul.f32 %v4149, %v4154
    %v4159 = vlaneseq
    %v4160 = vshrl.u32 %v4159, 7
    %v4161 = vsub.s32 0, %v4160
    %v4162 = vrot.slane %v4123, %v4161
    %v4164 = vadd.f32 %v4156, %v4162
    %v4165 = vadd.f32 %v4157, %v4162
    %4166 = vst.msk [vmem:[#allocation10] sm:$0xff] %vm122, %v4164
    %4167 = vst.msk [vmem:[#allocation10 + $0x8] sm:$0xff] %vm122, %v4165
    // Predicated region
    $region94: #{tpu_custom_call.1} parent=1 // pred_check
      _
    $region95: #{tpu_custom_call.1} parent=1 // pred_check_branch
      %4169 = sbr.rel (0) target = $region97
    $region96: #{tpu_custom_call.1} parent=1 // pred_region
      %s4171 = ssub.s32 256, 256
      %4172 = vsyncadd [#allocation4], %s4171
      %s4173 = sshll.u32 [#allocation10], 4
      %s4174 = int_to_ptr.vmem [resolvable:$true] %s4173
      %4179 = dma.vmem_to_hbm [thread:$0]  %s4174, 256, %s19, [#allocation4], 128, 128, 8
    $region97: #{tpu_custom_call.1} parent=1 // pred_fallthru
      _
    // Predicated region
    $region98: #{tpu_custom_call.1} parent=1 // pred_check
      _
    $region99: #{tpu_custom_call.1} parent=1 // pred_check_branch
      %4181 = sbr.rel (0) target = $region101
    $region100: #{tpu_custom_call.1} parent=1 // pred_region
      %4182 = dma.done [#allocation4], 256
    $region101: #{tpu_custom_call.1} parent=1 // pred_fallthru
      _
    %4183 = vsyncpa [#allocation3], 1
    %4184 = vsyncpa [#allocation6], 1
    %4185 = vsyncpa [#allocation9], 1
    %4186 = vsyncpa [#allocation4], 1

</llo_original>
